<compile_context>
chip_gen: v5e
topology: v5e:2x2
jax: 0.10.0
libtpu: 0.0.40
codegen_flags: <defaults>
</compile_context>

<pallas_src>
import jax
import jax.numpy as jnp
from jax import lax
from jax.experimental import pallas as pl
from jax.experimental.pallas import tpu as pltpu

# ----------------------------- small config ---------------------------------
B, T = 2, 8
C = 64                       # hidden_size == attention_hidden_size
S = 16                       # head_size
H = C // S                   # num_heads = 4
I = int(C * 3.5 // 32 * 32)  # intermediate_size = 224
TM = 32                      # TIME_MIX_EXTRA_DIM
TD = 64                      # TIME_DECAY_EXTRA_DIM
LN_EPS = 1e-5                # layer_norm_epsilon
HEAD_DIV = 8.0               # head_size_divisor
GN_EPS = 1e-5 * HEAD_DIV ** 2
BT = B * T
BC = B * C
NHT = B * H * T              # stacked (batch, head, time) rows = 64

F32 = jnp.float32


# ----------------------------- in-kernel helpers ----------------------------
def _ln(x, w, b, eps):
    mu = jnp.mean(x, axis=-1, keepdims=True)
    var = jnp.mean((x - mu) ** 2, axis=-1, keepdims=True)
    return (x - mu) * lax.rsqrt(var + eps) * w + b


def _dot(a, b):
    return jnp.dot(a, b, preferred_element_type=jnp.float32)


def _shift_tokens(x, shift_bc):
    # x: (B*T, C) batch-major rows.  shifted[b, t] = x[b, t-1], shifted[b, 0] = shift_bc[b]
    chunks = []
    for b in range(B):
        xb = x[b * T:(b + 1) * T, :]
        chunks.append(jnp.concatenate([shift_bc[b:b + 1, :], xb[:T - 1, :]], axis=0))
    return jnp.concatenate(chunks, axis=0)


# ----------------------------- the fused kernel ------------------------------
def rwkv6_block_kernel(
    h_ref, ashift_ref, fshift_ref, wkv0_ref,
    ln1w_ref, ln1b_ref, maax_ref, w1_ref, w2bd_ref, maa5_ref,
    wkvrg_ref, td0_ref, tdw1_ref, tdw2_ref, u_ref,
    tri_ref, selbat_ref, rowsel_ref, rowselT_ref, headcol_ref, amask_ref,
    expand_ref, headmask_ref, selb128_ref, colmask_ref, shift_ref,
    lnxw_ref, lnxb_ref, gm_ref, gb_ref, wout_ref,
    ln2w_ref, ln2b_ref, maaff_ref, wkf_ref, wvf_ref, wrf_ref,
    ho_ref, ashift_o, fshift_o, wkvf_ref,
):
    x = h_ref[...]                                                   # (BT, C)
    headmask = headmask_ref[...]                                     # (C, C) per-head ones

    # ---- ln1 + token shift + data-dependent (time_maa) mixing ----------------
    x1 = _ln(x, ln1w_ref[...], ln1b_ref[...], LN_EPS)
    xx = _shift_tokens(x1, ashift_ref[...]) - x1

    xxx = jnp.tanh(_dot(x1 + xx * maax_ref[...], w1_ref[...]))       # (BT, 5*TM)
    mix5 = _dot(xxx, w2bd_ref[...]) + maa5_ref[...]                  # (BT, 5*C) blocks [k,v,r,g,w]
    x1_5 = jnp.concatenate([x1] * 5, axis=-1)
    xx_5 = jnp.concatenate([xx] * 5, axis=-1)
    m_all = x1_5 + xx_5 * mix5                                       # (BT, 5*C) = [mk,mv,mr,mg,mw]

    # ---- fused R/K/V/G projections (block-diagonal (4C,4C) weight) ------------
    kvrg = _dot(m_all[:, 0:4 * C], wkvrg_ref[...])                   # (BT, 4*C) = [k, v, r, g]
    k = kvrg[:, 0 * C:1 * C]
    v = kvrg[:, 1 * C:2 * C]
    r = kvrg[:, 2 * C:3 * C]
    graw = kvrg[:, 3 * C:4 * C]
    gate = graw * jax.nn.sigmoid(graw)                               # SiLU gate

    # ---- time-decay MLP -------------------------------------------------------
    mw = m_all[:, 4 * C:5 * C]
    td = _dot(jnp.tanh(_dot(mw, tdw1_ref[...])), tdw2_ref[...]) + td0_ref[...]
    ld = -jnp.exp(td)                                                # per-token log-decay (<= 0)

    # ---- hoisted "u" (diagonal) term of the WKV output ------------------------
    cv = _dot(r * u_ref[...] * k, headmask) * v                      # (BT, C)

    # ---- chunked WKV: cumulative decays via triangular matmuls ----------------
    cum_excl = _dot(tri_ref[...], ld)                                # sum_{s<t} ld  (<= 0)
    cum_incl = cum_excl + ld                                         # sum_{s<=t} ld
    cum_tot = _dot(selbat_ref[...], ld)                              # full-chunk sum per batch
    rd = r * jnp.exp(cum_excl)                                       # r_t * decay(0..t-1)
    kd = k * jnp.exp(-cum_incl)                                      # k_s / decay(0..s)
    kd2 = k * jnp.exp(cum_tot - cum_incl)                            # k_s * decay(s+1..T-1), <= 1

    # ---- initial-state contribution + final-state kv term (per batch) ---------
    expand = expand_ref[...]
    s_full_list, out0_list, kv_list = [], [], []
    for b in range(B):
        sl = slice(b * T, (b + 1) * T)
        # block-diagonal (C, C) initial state of batch b, built on the MXU
        s_full_b = _dot(wkv0_ref[b * C:(b + 1) * C, :], expand) * headmask
        out0_list.append(_dot(rd[sl, :], s_full_b))                  # (T, C)
        kv_list.append(_dot(jnp.transpose(kd2[sl, :]), v[sl, :]) * headmask)  # (C, C)
        s_full_list.append(s_full_b)
    out0 = jnp.concatenate(out0_list, axis=0)                        # (BT, C)
    s_full = jnp.concatenate(s_full_list, axis=0)                    # (BC, C)
    kv_full = jnp.concatenate(kv_list, axis=0)                       # (BC, C)

    # ---- intra-chunk causal term, all (batch, head) pairs as masked matmuls ----
    rowsel = rowsel_ref[...]                                         # (NHT, BT) gather matrix
    headcol = headcol_ref[...]                                       # (NHT, C) head column mask
    rm = _dot(rowsel, rd) * headcol                                  # (NHT, C)
    km = _dot(rowsel, kd)                                            # (NHT, C)
    vm = _dot(rowsel, v)                                             # (NHT, C)
    a = lax.dot_general(rm, km, (((1,), (1,)), ((), ())),
                        preferred_element_type=jnp.float32)          # (NHT, NHT)
    a = a * amask_ref[...]                                           # same (b,h) & strictly causal
    intra = _dot(a, vm) * headcol                                    # (NHT, C)
    out_intra = _dot(rowselT_ref[...], intra)                        # (BT, C)

    attn = cv + out0 + out_intra                                     # raw attention output

    # ---- final WKV state (decay-scaled initial state + intra kv) ----------------
    ltot_pick = _dot(_dot(selb128_ref[...], cum_tot) * colmask_ref[...],
                     jnp.ones((C, C), jnp.float32))                  # (BC, C) per-row total decay
    wkvf_full = jnp.exp(ltot_pick) * s_full + kv_full                # (BC, C), block-sparse
    wkvf_ref[...] = _dot(wkvf_full, shift_ref[...])                  # compact to (B*H*S, S)

    # ---- group-norm (H groups) + gate + output projection + residual ----------
    gm = gm_ref[...]
    gb = gb_ref[...]
    mu = _dot(_dot(attn, gm), gb)
    d = attn - mu
    var = _dot(_dot(d * d, gm), gb)
    gn = d * lax.rsqrt(var + GN_EPS) * lnxw_ref[...] + lnxb_ref[...]
    h2 = x + _dot(gn * gate, wout_ref[...])

    # ---- ln2 + channel-mix feed-forward + residual ------------------------------
    x2 = _ln(h2, ln2w_ref[...], ln2b_ref[...], LN_EPS)
    dx = _shift_tokens(x2, fshift_ref[...]) - x2
    maaff = maaff_ref[...]                                           # (2, C): [k, r]
    k_in = x2 + dx * maaff[0:1]
    r_in = x2 + dx * maaff[1:2]
    kf = jnp.maximum(_dot(k_in, wkf_ref[...]), 0.0)
    kf = kf * kf                                                     # relu(.)^2
    vf = _dot(kf, wvf_ref[...])
    rf = jax.nn.sigmoid(_dot(r_in, wrf_ref[...]))
    ho_ref[...] = h2 + rf * vf

    # ---- shift states (last token of ln1(x) / ln2(h2) per batch) ----------------
    ashift_o[...] = jnp.concatenate(
        [x1[(b + 1) * T - 1:(b + 1) * T, :] for b in range(B)], axis=0)
    fshift_o[...] = jnp.concatenate(
        [x2[(b + 1) * T - 1:(b + 1) * T, :] for b in range(B)], axis=0)


# ----------------------------- wrapper ---------------------------------------
def rwkv6_block(hidden, params, state):
    """hidden: (B, T, C) f32.  state: (attn_shift (B,C), wkv (B,H,S,S), ffn_shift (B,C))."""
    attn_shift, wkv0, ffn_shift = state
    hid2d = hidden.reshape(BT, C)
    wkv0_2d = wkv0.reshape(B * H * S, S)

    out_shapes = [
        jax.ShapeDtypeStruct((BT, C), F32),          # block output hidden
        jax.ShapeDtypeStruct((B, C), F32),           # new attention shift state
        jax.ShapeDtypeStruct((B, C), F32),           # new FFN shift state
        jax.ShapeDtypeStruct((B * H * S, S), F32),   # new WKV state (flattened)
    ]
    ho, ash, fsh, wkvf = pl.pallas_call(
        rwkv6_block_kernel,
        out_shape=out_shapes,
        compiler_params=pltpu.CompilerParams(vmem_limit_bytes=32 * 1024 * 1024),
    )(hid2d, attn_shift, ffn_shift, wkv0_2d,
      params['ln1_w'], params['ln1_b'], params['maa_x'], params['w1'], params['w2_bd'],
      params['maa5'], params['wkvrg_bd'], params['td0'], params['tdw1'], params['tdw2'],
      params['u'],
      params['tri_excl'], params['sel_batch'], params['rowsel'], params['rowselT'],
      params['headcol64'], params['amask'], params['expand16'], params['headmask64'],
      params['selb128'], params['colmask128'], params['shift64'],
      params['lnx_w'], params['lnx_b'], params['gm'], params['gb'], params['WoT'],
      params['ln2_w'], params['ln2_b'], params['maa_ff'],
      params['WkfT'], params['WvfT'], params['WrfT'])

    new_state = (ash, wkvf.reshape(B, H, S, S), fsh)
    return ho.reshape(B, T, C), new_state


# ----------------------------- deterministic params --------------------------
def init_params(key):
    ks = jax.random.split(key, 16)

    def nrm(k, shape, scale=0.05):
        return jax.random.normal(k, shape, dtype=F32) * scale

    p = {}
    # block layernorms (torch defaults: weight=1, bias=0)
    p['ln1_w'] = jnp.ones((1, C), F32); p['ln1_b'] = jnp.zeros((1, C), F32)
    p['ln2_w'] = jnp.ones((1, C), F32); p['ln2_b'] = jnp.zeros((1, C), F32)
    p['lnx_w'] = jnp.ones((1, C), F32); p['lnx_b'] = jnp.zeros((1, C), F32)

    # attention mixing params (maa rows: [x, w, k, v, r, g])
    maa = nrm(ks[0], (6, C), 0.1)
    p['maa_x'] = maa[0:1]
    # reordered to the kernel's output block order [k, v, r, g, w]
    p['maa5'] = jnp.concatenate([maa[2:3], maa[3:4], maa[4:5], maa[5:6], maa[1:2]], axis=-1)

    p['w1'] = nrm(ks[1], (C, 5 * TM))                 # time_maa_w1
    w2 = nrm(ks[2], (5, TM, C))                       # time_maa_w2, source order [w,k,v,r,g]
    dst = [4, 0, 1, 2, 3]                             # destination block of each source
    w2bd = jnp.zeros((5 * TM, 5 * C), F32)
    for s_idx, d_idx in enumerate(dst):
        w2bd = w2bd.at[s_idx * TM:(s_idx + 1) * TM, d_idx * C:(d_idx + 1) * C].set(w2[s_idx])
    p['w2_bd'] = w2bd

    p['td0'] = nrm(ks[3], (1, C), 0.1)                # time_decay
    p['tdw1'] = nrm(ks[4], (C, TD))
    p['tdw2'] = nrm(ks[5], (TD, C))
    p['u'] = nrm(ks[6], (H, S), 0.1).reshape(1, C)    # time_faaaa flattened to (h, i) lanes

    # linear weights (torch stores (out,in); pre-transposed, key /2 and value /4 pre-applied)
    Wr = nrm(ks[7], (C, C)); Wk = nrm(ks[8], (C, C))
    Wv = nrm(ks[9], (C, C)); Wg = nrm(ks[10], (C, C)); Wo = nrm(ks[11], (C, C))
    blocks = [(Wk / 2.0).T, (Wv / 4.0).T, Wr.T, Wg.T]     # block order [k, v, r, g]
    wkvrg = jnp.zeros((4 * C, 4 * C), F32)
    for i, blk in enumerate(blocks):
        wkvrg = wkvrg.at[i * C:(i + 1) * C, i * C:(i + 1) * C].set(blk)
    p['wkvrg_bd'] = wkvrg
    p['WoT'] = Wo.T

    # feed-forward
    p['maa_ff'] = nrm(ks[12], (2, C), 0.1)            # rows: time_maa_k, time_maa_r
    Wkf = nrm(ks[13], (I, C)); Wrf = nrm(ks[14], (C, C)); Wvf = nrm(ks[15], (C, I))
    p['WkfT'] = Wkf.T; p['WrfT'] = Wrf.T; p['WvfT'] = Wvf.T

    # ---- constant gather / mask matrices for the chunked WKV (all tiny) -------
    r_idx = jnp.arange(BT)                 # token rows (b*T + t)
    b_of_r = r_idx // T
    t_of_r = r_idx % T
    n_idx = jnp.arange(NHT)                # stacked rows ((b*H + h)*T + t)
    b_of_n = n_idx // (H * T)
    h_of_n = (n_idx // T) % H
    t_of_n = n_idx % T
    c_idx = jnp.arange(C)
    h_of_c = c_idx // S
    i_idx = jnp.arange(BC)                 # state rows (b*C + c)
    b_of_i = i_idx // C
    c_of_i = i_idx % C
    s_idx = jnp.arange(S)

    p['tri_excl'] = ((b_of_r[:, None] == b_of_r[None, :]) &
                     (t_of_r[None, :] < t_of_r[:, None])).astype(F32)          # (BT, BT)
    p['sel_batch'] = (b_of_r[:, None] == b_of_r[None, :]).astype(F32)          # (BT, BT)
    rowsel = (r_idx[None, :] == (b_of_n * T + t_of_n)[:, None]).astype(F32)    # (NHT, BT)
    p['rowsel'] = rowsel
    p['rowselT'] = rowsel.T                                                    # (BT, NHT)
    p['headcol64'] = (h_of_c[None, :] == h_of_n[:, None]).astype(F32)          # (NHT, C)
    p['amask'] = (((n_idx[:, None] // T) == (n_idx[None, :] // T)) &
                  (t_of_n[None, :] < t_of_n[:, None])).astype(F32)             # (NHT, NHT)
    p['expand16'] = (s_idx[:, None] == (c_idx % S)[None, :]).astype(F32)       # (S, C)
    p['headmask64'] = (h_of_c[:, None] == h_of_c[None, :]).astype(F32)         # (C, C)
    p['selb128'] = (r_idx[None, :] == (b_of_i * T)[:, None]).astype(F32)       # (BC, BT)
    p['colmask128'] = (c_idx[None, :] == c_of_i[:, None]).astype(F32)          # (BC, C)
    p['shift64'] = ((c_idx % S)[:, None] == s_idx[None, :]).astype(F32)        # (C, S)

    # group-norm helpers (mean over each head, broadcast back)
    onehot = (h_of_c[:, None] == jnp.arange(H)[None, :]).astype(F32)           # (C, H)
    p['gm'] = onehot / float(S)
    p['gb'] = onehot.T
    return p


# ----------------------------- main ------------------------------------------
if __name__ == "__main__":
    key = jax.random.PRNGKey(0)
    pkey, hkey = jax.random.split(key)
    params = init_params(pkey)
    hidden = jax.random.normal(hkey, (B, T, C), dtype=F32)
    state = (jnp.zeros((B, C), F32),          # attention shift state
             jnp.zeros((B, H, S, S), F32),    # WKV state
             jnp.zeros((B, C), F32))          # FFN shift state

    fwd = jax.jit(rwkv6_block)
    out, new_state = fwd(hidden, params, state)
    jax.block_until_ready(out)
    jax.block_until_ready(new_state)
    assert out.shape == (B, T, C) and new_state[1].shape == (B, H, S, S)
    print("KERNEL_OK")
</pallas_src>

<mosaic_0001>
module attributes {stable_mosaic.version = 11 : i64} {
  func.func @rwkv6_block_kernel(%arg0: memref<16x64xf32, #tpu.memory_space<vmem>>, %arg1: memref<2x64xf32, #tpu.memory_space<vmem>>, %arg2: memref<2x64xf32, #tpu.memory_space<vmem>>, %arg3: memref<128x16xf32, #tpu.memory_space<vmem>>, %arg4: memref<1x64xf32, #tpu.memory_space<vmem>>, %arg5: memref<1x64xf32, #tpu.memory_space<vmem>>, %arg6: memref<1x64xf32, #tpu.memory_space<vmem>>, %arg7: memref<64x160xf32, #tpu.memory_space<vmem>>, %arg8: memref<160x320xf32, #tpu.memory_space<vmem>>, %arg9: memref<1x320xf32, #tpu.memory_space<vmem>>, %arg10: memref<256x256xf32, #tpu.memory_space<vmem>>, %arg11: memref<1x64xf32, #tpu.memory_space<vmem>>, %arg12: memref<64x64xf32, #tpu.memory_space<vmem>>, %arg13: memref<64x64xf32, #tpu.memory_space<vmem>>, %arg14: memref<1x64xf32, #tpu.memory_space<vmem>>, %arg15: memref<16x16xf32, #tpu.memory_space<vmem>>, %arg16: memref<16x16xf32, #tpu.memory_space<vmem>>, %arg17: memref<64x16xf32, #tpu.memory_space<vmem>>, %arg18: memref<16x64xf32, #tpu.memory_space<vmem>>, %arg19: memref<64x64xf32, #tpu.memory_space<vmem>>, %arg20: memref<64x64xf32, #tpu.memory_space<vmem>>, %arg21: memref<16x64xf32, #tpu.memory_space<vmem>>, %arg22: memref<64x64xf32, #tpu.memory_space<vmem>>, %arg23: memref<128x16xf32, #tpu.memory_space<vmem>>, %arg24: memref<128x64xf32, #tpu.memory_space<vmem>>, %arg25: memref<64x16xf32, #tpu.memory_space<vmem>>, %arg26: memref<1x64xf32, #tpu.memory_space<vmem>>, %arg27: memref<1x64xf32, #tpu.memory_space<vmem>>, %arg28: memref<64x4xf32, #tpu.memory_space<vmem>>, %arg29: memref<4x64xf32, #tpu.memory_space<vmem>>, %arg30: memref<64x64xf32, #tpu.memory_space<vmem>>, %arg31: memref<1x64xf32, #tpu.memory_space<vmem>>, %arg32: memref<1x64xf32, #tpu.memory_space<vmem>>, %arg33: memref<2x64xf32, #tpu.memory_space<vmem>>, %arg34: memref<64x224xf32, #tpu.memory_space<vmem>>, %arg35: memref<224x64xf32, #tpu.memory_space<vmem>>, %arg36: memref<64x64xf32, #tpu.memory_space<vmem>>, %arg37: memref<16x64xf32, #tpu.memory_space<vmem>>, %arg38: memref<2x64xf32, #tpu.memory_space<vmem>>, %arg39: memref<2x64xf32, #tpu.memory_space<vmem>>, %arg40: memref<128x16xf32, #tpu.memory_space<vmem>>) attributes {dimension_semantics = [], scalar_prefetch = 0 : i64, scratch_operands = 0 : i64, tpu.core_type = #tpu.core_type<tc>} {
    %c0 = arith.constant 0 : index
    %c0_0 = arith.constant 0 : index
    %0 = vector.load %arg0[%c0, %c0_0] : memref<16x64xf32, #tpu.memory_space<vmem>>, vector<16x64xf32>
    %c0_1 = arith.constant 0 : index
    %c0_2 = arith.constant 0 : index
    %1 = vector.load %arg22[%c0_1, %c0_2] : memref<64x64xf32, #tpu.memory_space<vmem>>, vector<64x64xf32>
    %c0_3 = arith.constant 0 : index
    %c0_4 = arith.constant 0 : index
    %2 = vector.load %arg4[%c0_3, %c0_4] : memref<1x64xf32, #tpu.memory_space<vmem>>, vector<1x64xf32>
    %c0_5 = arith.constant 0 : index
    %c0_6 = arith.constant 0 : index
    %3 = vector.load %arg5[%c0_5, %c0_6] : memref<1x64xf32, #tpu.memory_space<vmem>>, vector<1x64xf32>
    %cst = arith.constant dense<0.000000e+00> : vector<16xf32>
    %4 = vector.multi_reduction <add>, %0, %cst [1] : vector<16x64xf32> to vector<16xf32>
    %5 = vector.shape_cast %4 : vector<16xf32> to vector<16x1xf32>
    %cst_7 = arith.constant 6.400000e+01 : f32
    %6 = vector.broadcast %cst_7 : f32 to vector<16x1xf32>
    %7 = arith.divf %5, %6 : vector<16x1xf32>
    %8 = vector.broadcast %7 : vector<16x1xf32> to vector<16x64xf32>
    %9 = arith.subf %0, %8 : vector<16x64xf32>
    %10 = arith.mulf %9, %9 : vector<16x64xf32>
    %cst_8 = arith.constant dense<0.000000e+00> : vector<16xf32>
    %11 = vector.multi_reduction <add>, %10, %cst_8 [1] : vector<16x64xf32> to vector<16xf32>
    %12 = vector.shape_cast %11 : vector<16xf32> to vector<16x1xf32>
    %cst_9 = arith.constant 6.400000e+01 : f32
    %13 = vector.broadcast %cst_9 : f32 to vector<16x1xf32>
    %14 = arith.divf %12, %13 : vector<16x1xf32>
    %15 = vector.broadcast %7 : vector<16x1xf32> to vector<16x64xf32>
    %16 = arith.subf %0, %15 : vector<16x64xf32>
    %cst_10 = arith.constant 9.99999974E-6 : f32
    %17 = vector.broadcast %cst_10 : f32 to vector<16x1xf32>
    %18 = arith.addf %14, %17 : vector<16x1xf32>
    %19 = math.rsqrt %18 : vector<16x1xf32>
    %20 = vector.broadcast %19 : vector<16x1xf32> to vector<16x64xf32>
    %21 = arith.mulf %16, %20 : vector<16x64xf32>
    %22 = vector.broadcast %2 : vector<1x64xf32> to vector<16x64xf32>
    %23 = arith.mulf %21, %22 : vector<16x64xf32>
    %24 = vector.broadcast %3 : vector<1x64xf32> to vector<16x64xf32>
    %25 = arith.addf %23, %24 : vector<16x64xf32>
    %c0_11 = arith.constant 0 : index
    %c0_12 = arith.constant 0 : index
    %26 = vector.load %arg1[%c0_11, %c0_12] : memref<2x64xf32, #tpu.memory_space<vmem>>, vector<2x64xf32>
    %27 = vector.extract_strided_slice %25 {offsets = [0, 0], sizes = [8, 64], strides = [1, 1]} : vector<16x64xf32> to vector<8x64xf32>
    %28 = vector.extract_strided_slice %26 {offsets = [0, 0], sizes = [1, 64], strides = [1, 1]} : vector<2x64xf32> to vector<1x64xf32>
    %29 = vector.extract_strided_slice %27 {offsets = [0, 0], sizes = [7, 64], strides = [1, 1]} : vector<8x64xf32> to vector<7x64xf32>
    %30 = tpu.concatenate %28, %29 in 0 : vector<1x64xf32>, vector<7x64xf32> -> vector<8x64xf32>
    %31 = vector.extract_strided_slice %25 {offsets = [8, 0], sizes = [8, 64], strides = [1, 1]} : vector<16x64xf32> to vector<8x64xf32>
    %32 = vector.extract_strided_slice %26 {offsets = [1, 0], sizes = [1, 64], strides = [1, 1]} : vector<2x64xf32> to vector<1x64xf32>
    %33 = vector.extract_strided_slice %31 {offsets = [0, 0], sizes = [7, 64], strides = [1, 1]} : vector<8x64xf32> to vector<7x64xf32>
    %34 = tpu.concatenate %32, %33 in 0 : vector<1x64xf32>, vector<7x64xf32> -> vector<8x64xf32>
    %35 = tpu.concatenate %30, %34 in 0 : vector<8x64xf32>, vector<8x64xf32> -> vector<16x64xf32>
    %36 = arith.subf %35, %25 : vector<16x64xf32>
    %c0_13 = arith.constant 0 : index
    %c0_14 = arith.constant 0 : index
    %37 = vector.load %arg6[%c0_13, %c0_14] : memref<1x64xf32, #tpu.memory_space<vmem>>, vector<1x64xf32>
    %38 = vector.broadcast %37 : vector<1x64xf32> to vector<16x64xf32>
    %39 = arith.mulf %36, %38 : vector<16x64xf32>
    %40 = arith.addf %25, %39 : vector<16x64xf32>
    %c0_15 = arith.constant 0 : index
    %c0_16 = arith.constant 0 : index
    %41 = vector.load %arg7[%c0_15, %c0_16] : memref<64x160xf32, #tpu.memory_space<vmem>>, vector<64x160xf32>
    %cst_17 = arith.constant dense<0.000000e+00> : vector<16x160xf32>
    %42 = tpu.matmul %40, %41, %cst_17 {dimension_numbers = #tpu.dot_dimension_numbers<[1], [0], [0], [1], [0, 0, 1, 1], [], []>} : vector<16x64xf32>, vector<64x160xf32>, vector<16x160xf32> -> vector<16x160xf32>
    %43 = math.tanh %42 : vector<16x160xf32>
    %c0_18 = arith.constant 0 : index
    %c0_19 = arith.constant 0 : index
    %44 = vector.load %arg8[%c0_18, %c0_19] : memref<160x320xf32, #tpu.memory_space<vmem>>, vector<160x320xf32>
    %cst_20 = arith.constant dense<0.000000e+00> : vector<16x320xf32>
    %45 = tpu.matmul %43, %44, %cst_20 {dimension_numbers = #tpu.dot_dimension_numbers<[1], [0], [0], [1], [0, 0, 1, 1], [], []>} : vector<16x160xf32>, vector<160x320xf32>, vector<16x320xf32> -> vector<16x320xf32>
    %c0_21 = arith.constant 0 : index
    %c0_22 = arith.constant 0 : index
    %46 = vector.load %arg9[%c0_21, %c0_22] : memref<1x320xf32, #tpu.memory_space<vmem>>, vector<1x320xf32>
    %47 = vector.broadcast %46 : vector<1x320xf32> to vector<16x320xf32>
    %48 = arith.addf %45, %47 : vector<16x320xf32>
    %49 = tpu.concatenate %25, %25, %25, %25, %25 in 1 : vector<16x64xf32>, vector<16x64xf32>, vector<16x64xf32>, vector<16x64xf32>, vector<16x64xf32> -> vector<16x320xf32>
    %50 = tpu.concatenate %36, %36, %36, %36, %36 in 1 : vector<16x64xf32>, vector<16x64xf32>, vector<16x64xf32>, vector<16x64xf32>, vector<16x64xf32> -> vector<16x320xf32>
    %51 = arith.mulf %50, %48 : vector<16x320xf32>
    %52 = arith.addf %49, %51 : vector<16x320xf32>
    %53 = vector.extract_strided_slice %52 {offsets = [0, 0], sizes = [16, 256], strides = [1, 1]} : vector<16x320xf32> to vector<16x256xf32>
    %c0_23 = arith.constant 0 : index
    %c0_24 = arith.constant 0 : index
    %54 = vector.load %arg10[%c0_23, %c0_24] : memref<256x256xf32, #tpu.memory_space<vmem>>, vector<256x256xf32>
    %cst_25 = arith.constant dense<0.000000e+00> : vector<16x256xf32>
    %55 = tpu.matmul %53, %54, %cst_25 {dimension_numbers = #tpu.dot_dimension_numbers<[1], [0], [0], [1], [0, 0, 1, 1], [], []>} : vector<16x256xf32>, vector<256x256xf32>, vector<16x256xf32> -> vector<16x256xf32>
    %56 = vector.extract_strided_slice %55 {offsets = [0, 0], sizes = [16, 64], strides = [1, 1]} : vector<16x256xf32> to vector<16x64xf32>
    %57 = vector.extract_strided_slice %55 {offsets = [0, 64], sizes = [16, 64], strides = [1, 1]} : vector<16x256xf32> to vector<16x64xf32>
    %58 = vector.extract_strided_slice %55 {offsets = [0, 128], sizes = [16, 64], strides = [1, 1]} : vector<16x256xf32> to vector<16x64xf32>
    %59 = vector.extract_strided_slice %55 {offsets = [0, 192], sizes = [16, 64], strides = [1, 1]} : vector<16x256xf32> to vector<16x64xf32>
    %60 = arith.negf %59 : vector<16x64xf32>
    %61 = math.exp %60 : vector<16x64xf32>
    %cst_26 = arith.constant 1.000000e+00 : f32
    %62 = vector.broadcast %cst_26 : f32 to vector<16x64xf32>
    %63 = arith.addf %62, %61 : vector<16x64xf32>
    %64 = arith.divf %62, %63 : vector<16x64xf32>
    %65 = arith.mulf %59, %64 : vector<16x64xf32>
    %66 = vector.extract_strided_slice %52 {offsets = [0, 256], sizes = [16, 64], strides = [1, 1]} : vector<16x320xf32> to vector<16x64xf32>
    %c0_27 = arith.constant 0 : index
    %c0_28 = arith.constant 0 : index
    %67 = vector.load %arg12[%c0_27, %c0_28] : memref<64x64xf32, #tpu.memory_space<vmem>>, vector<64x64xf32>
    %cst_29 = arith.constant dense<0.000000e+00> : vector<16x64xf32>
    %68 = tpu.matmul %66, %67, %cst_29 {dimension_numbers = #tpu.dot_dimension_numbers<[1], [0], [0], [1], [0, 0, 1, 1], [], []>} : vector<16x64xf32>, vector<64x64xf32>, vector<16x64xf32> -> vector<16x64xf32>
    %69 = math.tanh %68 : vector<16x64xf32>
    %c0_30 = arith.constant 0 : index
    %c0_31 = arith.constant 0 : index
    %70 = vector.load %arg13[%c0_30, %c0_31] : memref<64x64xf32, #tpu.memory_space<vmem>>, vector<64x64xf32>
    %cst_32 = arith.constant dense<0.000000e+00> : vector<16x64xf32>
    %71 = tpu.matmul %69, %70, %cst_32 {dimension_numbers = #tpu.dot_dimension_numbers<[1], [0], [0], [1], [0, 0, 1, 1], [], []>} : vector<16x64xf32>, vector<64x64xf32>, vector<16x64xf32> -> vector<16x64xf32>
    %c0_33 = arith.constant 0 : index
    %c0_34 = arith.constant 0 : index
    %72 = vector.load %arg11[%c0_33, %c0_34] : memref<1x64xf32, #tpu.memory_space<vmem>>, vector<1x64xf32>
    %73 = vector.broadcast %72 : vector<1x64xf32> to vector<16x64xf32>
    %74 = arith.addf %71, %73 : vector<16x64xf32>
    %75 = math.exp %74 : vector<16x64xf32>
    %cst_35 = arith.constant 0.000000e+00 : f32
    %76 = vector.broadcast %cst_35 : f32 to vector<16x64xf32>
    %77 = arith.subf %76, %75 : vector<16x64xf32>
    %c0_36 = arith.constant 0 : index
    %c0_37 = arith.constant 0 : index
    %78 = vector.load %arg14[%c0_36, %c0_37] : memref<1x64xf32, #tpu.memory_space<vmem>>, vector<1x64xf32>
    %79 = vector.broadcast %78 : vector<1x64xf32> to vector<16x64xf32>
    %80 = arith.mulf %58, %79 : vector<16x64xf32>
    %81 = arith.mulf %80, %56 : vector<16x64xf32>
    %cst_38 = arith.constant dense<0.000000e+00> : vector<16x64xf32>
    %82 = tpu.matmul %81, %1, %cst_38 {dimension_numbers = #tpu.dot_dimension_numbers<[1], [0], [0], [1], [0, 0, 1, 1], [], []>} : vector<16x64xf32>, vector<64x64xf32>, vector<16x64xf32> -> vector<16x64xf32>
    %83 = arith.mulf %82, %57 : vector<16x64xf32>
    %c0_39 = arith.constant 0 : index
    %c0_40 = arith.constant 0 : index
    %84 = vector.load %arg15[%c0_39, %c0_40] : memref<16x16xf32, #tpu.memory_space<vmem>>, vector<16x16xf32>
    %cst_41 = arith.constant dense<0.000000e+00> : vector<16x64xf32>
    %85 = tpu.matmul %84, %77, %cst_41 {dimension_numbers = #tpu.dot_dimension_numbers<[1], [0], [0], [1], [0, 0, 1, 1], [], []>} : vector<16x16xf32>, vector<16x64xf32>, vector<16x64xf32> -> vector<16x64xf32>
    %86 = arith.addf %85, %77 : vector<16x64xf32>
    %c0_42 = arith.constant 0 : index
    %c0_43 = arith.constant 0 : index
    %87 = vector.load %arg16[%c0_42, %c0_43] : memref<16x16xf32, #tpu.memory_space<vmem>>, vector<16x16xf32>
    %cst_44 = arith.constant dense<0.000000e+00> : vector<16x64xf32>
    %88 = tpu.matmul %87, %77, %cst_44 {dimension_numbers = #tpu.dot_dimension_numbers<[1], [0], [0], [1], [0, 0, 1, 1], [], []>} : vector<16x16xf32>, vector<16x64xf32>, vector<16x64xf32> -> vector<16x64xf32>
    %89 = math.exp %85 : vector<16x64xf32>
    %90 = arith.mulf %58, %89 : vector<16x64xf32>
    %cst_45 = arith.constant 0.000000e+00 : f32
    %91 = vector.broadcast %cst_45 : f32 to vector<16x64xf32>
    %92 = arith.subf %91, %86 : vector<16x64xf32>
    %93 = math.exp %92 : vector<16x64xf32>
    %94 = arith.mulf %56, %93 : vector<16x64xf32>
    %95 = arith.subf %88, %86 : vector<16x64xf32>
    %96 = math.exp %95 : vector<16x64xf32>
    %97 = arith.mulf %56, %96 : vector<16x64xf32>
    %c0_46 = arith.constant 0 : index
    %c0_47 = arith.constant 0 : index
    %98 = vector.load %arg21[%c0_46, %c0_47] : memref<16x64xf32, #tpu.memory_space<vmem>>, vector<16x64xf32>
    %c0_48 = arith.constant 0 : index
    %c0_49 = arith.constant 0 : index
    %99 = vector.load %arg3[%c0_48, %c0_49] : memref<128x16xf32, #tpu.memory_space<vmem>>, vector<64x16xf32>
    %cst_50 = arith.constant dense<0.000000e+00> : vector<64x64xf32>
    %100 = tpu.matmul %99, %98, %cst_50 {dimension_numbers = #tpu.dot_dimension_numbers<[1], [0], [0], [1], [0, 0, 1, 1], [], []>} : vector<64x16xf32>, vector<16x64xf32>, vector<64x64xf32> -> vector<64x64xf32>
    %101 = arith.mulf %100, %1 : vector<64x64xf32>
    %102 = vector.extract_strided_slice %90 {offsets = [0, 0], sizes = [8, 64], strides = [1, 1]} : vector<16x64xf32> to vector<8x64xf32>
    %cst_51 = arith.constant dense<0.000000e+00> : vector<8x64xf32>
    %103 = tpu.matmul %102, %101, %cst_51 {dimension_numbers = #tpu.dot_dimension_numbers<[1], [0], [0], [1], [0, 0, 1, 1], [], []>} : vector<8x64xf32>, vector<64x64xf32>, vector<8x64xf32> -> vector<8x64xf32>
    %104 = vector.extract_strided_slice %97 {offsets = [0, 0], sizes = [8, 64], strides = [1, 1]} : vector<16x64xf32> to vector<8x64xf32>
    %105 = tpu.transpose %104, [1, 0] : vector<8x64xf32> -> vector<64x8xf32>
    %106 = vector.extract_strided_slice %57 {offsets = [0, 0], sizes = [8, 64], strides = [1, 1]} : vector<16x64xf32> to vector<8x64xf32>
    %cst_52 = arith.constant dense<0.000000e+00> : vector<64x64xf32>
    %107 = tpu.matmul %105, %106, %cst_52 {dimension_numbers = #tpu.dot_dimension_numbers<[1], [0], [0], [1], [0, 0, 1, 1], [], []>} : vector<64x8xf32>, vector<8x64xf32>, vector<64x64xf32> -> vector<64x64xf32>
    %108 = arith.mulf %107, %1 : vector<64x64xf32>
    %c64 = arith.constant 64 : index
    %c0_53 = arith.constant 0 : index
    %109 = vector.load %arg3[%c64, %c0_53] : memref<128x16xf32, #tpu.memory_space<vmem>>, vector<64x16xf32>
    %cst_54 = arith.constant dense<0.000000e+00> : vector<64x64xf32>
    %110 = tpu.matmul %109, %98, %cst_54 {dimension_numbers = #tpu.dot_dimension_numbers<[1], [0], [0], [1], [0, 0, 1, 1], [], []>} : vector<64x16xf32>, vector<16x64xf32>, vector<64x64xf32> -> vector<64x64xf32>
    %111 = arith.mulf %110, %1 : vector<64x64xf32>
    %112 = vector.extract_strided_slice %90 {offsets = [8, 0], sizes = [8, 64], strides = [1, 1]} : vector<16x64xf32> to vector<8x64xf32>
    %cst_55 = arith.constant dense<0.000000e+00> : vector<8x64xf32>
    %113 = tpu.matmul %112, %111, %cst_55 {dimension_numbers = #tpu.dot_dimension_numbers<[1], [0], [0], [1], [0, 0, 1, 1], [], []>} : vector<8x64xf32>, vector<64x64xf32>, vector<8x64xf32> -> vector<8x64xf32>
    %114 = vector.extract_strided_slice %97 {offsets = [8, 0], sizes = [8, 64], strides = [1, 1]} : vector<16x64xf32> to vector<8x64xf32>
    %115 = tpu.transpose %114, [1, 0] : vector<8x64xf32> -> vector<64x8xf32>
    %116 = vector.extract_strided_slice %57 {offsets = [8, 0], sizes = [8, 64], strides = [1, 1]} : vector<16x64xf32> to vector<8x64xf32>
    %cst_56 = arith.constant dense<0.000000e+00> : vector<64x64xf32>
    %117 = tpu.matmul %115, %116, %cst_56 {dimension_numbers = #tpu.dot_dimension_numbers<[1], [0], [0], [1], [0, 0, 1, 1], [], []>} : vector<64x8xf32>, vector<8x64xf32>, vector<64x64xf32> -> vector<64x64xf32>
    %118 = arith.mulf %117, %1 : vector<64x64xf32>
    %119 = tpu.concatenate %103, %113 in 0 : vector<8x64xf32>, vector<8x64xf32> -> vector<16x64xf32>
    %120 = tpu.concatenate %101, %111 in 0 : vector<64x64xf32>, vector<64x64xf32> -> vector<128x64xf32>
    %121 = tpu.concatenate %108, %118 in 0 : vector<64x64xf32>, vector<64x64xf32> -> vector<128x64xf32>
    %c0_57 = arith.constant 0 : index
    %c0_58 = arith.constant 0 : index
    %122 = vector.load %arg17[%c0_57, %c0_58] : memref<64x16xf32, #tpu.memory_space<vmem>>, vector<64x16xf32>
    %c0_59 = arith.constant 0 : index
    %c0_60 = arith.constant 0 : index
    %123 = vector.load %arg19[%c0_59, %c0_60] : memref<64x64xf32, #tpu.memory_space<vmem>>, vector<64x64xf32>
    %cst_61 = arith.constant dense<0.000000e+00> : vector<64x64xf32>
    %124 = tpu.matmul %122, %90, %cst_61 {dimension_numbers = #tpu.dot_dimension_numbers<[1], [0], [0], [1], [0, 0, 1, 1], [], []>} : vector<64x16xf32>, vector<16x64xf32>, vector<64x64xf32> -> vector<64x64xf32>
    %125 = arith.mulf %124, %123 : vector<64x64xf32>
    %cst_62 = arith.constant dense<0.000000e+00> : vector<64x64xf32>
    %126 = tpu.matmul %122, %94, %cst_62 {dimension_numbers = #tpu.dot_dimension_numbers<[1], [0], [0], [1], [0, 0, 1, 1], [], []>} : vector<64x16xf32>, vector<16x64xf32>, vector<64x64xf32> -> vector<64x64xf32>
    %cst_63 = arith.constant dense<0.000000e+00> : vector<64x64xf32>
    %127 = tpu.matmul %122, %57, %cst_63 {dimension_numbers = #tpu.dot_dimension_numbers<[1], [0], [0], [1], [0, 0, 1, 1], [], []>} : vector<64x16xf32>, vector<16x64xf32>, vector<64x64xf32> -> vector<64x64xf32>
    %cst_64 = arith.constant dense<0.000000e+00> : vector<64x64xf32>
    %128 = tpu.matmul %125, %126, %cst_64 {dimension_numbers = #tpu.dot_dimension_numbers<[1], [1], [0], [0], [0, 0, 1, 0], [], []>} : vector<64x64xf32>, vector<64x64xf32>, vector<64x64xf32> -> vector<64x64xf32>
    %c0_65 = arith.constant 0 : index
    %c0_66 = arith.constant 0 : index
    %129 = vector.load %arg20[%c0_65, %c0_66] : memref<64x64xf32, #tpu.memory_space<vmem>>, vector<64x64xf32>
    %130 = arith.mulf %128, %129 : vector<64x64xf32>
    %cst_67 = arith.constant dense<0.000000e+00> : vector<64x64xf32>
    %131 = tpu.matmul %130, %127, %cst_67 {dimension_numbers = #tpu.dot_dimension_numbers<[1], [0], [0], [1], [0, 0, 1, 1], [], []>} : vector<64x64xf32>, vector<64x64xf32>, vector<64x64xf32> -> vector<64x64xf32>
    %132 = arith.mulf %131, %123 : vector<64x64xf32>
    %c0_68 = arith.constant 0 : index
    %c0_69 = arith.constant 0 : index
    %133 = vector.load %arg18[%c0_68, %c0_69] : memref<16x64xf32, #tpu.memory_space<vmem>>, vector<16x64xf32>
    %cst_70 = arith.constant dense<0.000000e+00> : vector<16x64xf32>
    %134 = tpu.matmul %133, %132, %cst_70 {dimension_numbers = #tpu.dot_dimension_numbers<[1], [0], [0], [1], [0, 0, 1, 1], [], []>} : vector<16x64xf32>, vector<64x64xf32>, vector<16x64xf32> -> vector<16x64xf32>
    %135 = arith.addf %83, %119 : vector<16x64xf32>
    %136 = arith.addf %135, %134 : vector<16x64xf32>
    %c0_71 = arith.constant 0 : index
    %c0_72 = arith.constant 0 : index
    %137 = vector.load %arg23[%c0_71, %c0_72] : memref<128x16xf32, #tpu.memory_space<vmem>>, vector<128x16xf32>
    %cst_73 = arith.constant dense<0.000000e+00> : vector<128x64xf32>
    %138 = tpu.matmul %137, %88, %cst_73 {dimension_numbers = #tpu.dot_dimension_numbers<[1], [0], [0], [1], [0, 0, 1, 1], [], []>} : vector<128x16xf32>, vector<16x64xf32>, vector<128x64xf32> -> vector<128x64xf32>
    %c0_74 = arith.constant 0 : index
    %c0_75 = arith.constant 0 : index
    %139 = vector.load %arg24[%c0_74, %c0_75] : memref<128x64xf32, #tpu.memory_space<vmem>>, vector<128x64xf32>
    %140 = arith.mulf %138, %139 : vector<128x64xf32>
    %cst_76 = arith.constant 1.000000e+00 : f32
    %141 = vector.broadcast %cst_76 : f32 to vector<64x64xf32>
    %cst_77 = arith.constant dense<0.000000e+00> : vector<128x64xf32>
    %142 = tpu.matmul %140, %141, %cst_77 {dimension_numbers = #tpu.dot_dimension_numbers<[1], [0], [0], [1], [0, 0, 1, 1], [], []>} : vector<128x64xf32>, vector<64x64xf32>, vector<128x64xf32> -> vector<128x64xf32>
    %143 = math.exp %142 : vector<128x64xf32>
    %144 = arith.mulf %143, %120 : vector<128x64xf32>
    %145 = arith.addf %144, %121 : vector<128x64xf32>
    %c0_78 = arith.constant 0 : index
    %c0_79 = arith.constant 0 : index
    %146 = vector.load %arg25[%c0_78, %c0_79] : memref<64x16xf32, #tpu.memory_space<vmem>>, vector<64x16xf32>
    %cst_80 = arith.constant dense<0.000000e+00> : vector<128x16xf32>
    %147 = tpu.matmul %145, %146, %cst_80 {dimension_numbers = #tpu.dot_dimension_numbers<[1], [0], [0], [1], [0, 0, 1, 1], [], []>} : vector<128x64xf32>, vector<64x16xf32>, vector<128x16xf32> -> vector<128x16xf32>
    %c0_81 = arith.constant 0 : index
    %c0_82 = arith.constant 0 : index
    %148 = vector.load %arg40[%c0_81, %c0_82] : memref<128x16xf32, #tpu.memory_space<vmem>>, vector<128x16xf32>
    tpu.vector_store %arg40[%c0_81, %c0_82], %147 {strides = array<i32>} : memref<128x16xf32, #tpu.memory_space<vmem>>, vector<128x16xf32>,
    %c0_83 = arith.constant 0 : index
    %c0_84 = arith.constant 0 : index
    %149 = vector.load %arg28[%c0_83, %c0_84] : memref<64x4xf32, #tpu.memory_space<vmem>>, vector<64x4xf32>
    %c0_85 = arith.constant 0 : index
    %c0_86 = arith.constant 0 : index
    %150 = vector.load %arg29[%c0_85, %c0_86] : memref<4x64xf32, #tpu.memory_space<vmem>>, vector<4x64xf32>
    %cst_87 = arith.constant dense<0.000000e+00> : vector<16x4xf32>
    %151 = tpu.matmul %136, %149, %cst_87 {dimension_numbers = #tpu.dot_dimension_numbers<[1], [0], [0], [1], [0, 0, 1, 1], [], []>} : vector<16x64xf32>, vector<64x4xf32>, vector<16x4xf32> -> vector<16x4xf32>
    %cst_88 = arith.constant dense<0.000000e+00> : vector<16x64xf32>
    %152 = tpu.matmul %151, %150, %cst_88 {dimension_numbers = #tpu.dot_dimension_numbers<[1], [0], [0], [1], [0, 0, 1, 1], [], []>} : vector<16x4xf32>, vector<4x64xf32>, vector<16x64xf32> -> vector<16x64xf32>
    %153 = arith.subf %136, %152 : vector<16x64xf32>
    %154 = arith.mulf %153, %153 : vector<16x64xf32>
    %cst_89 = arith.constant dense<0.000000e+00> : vector<16x4xf32>
    %155 = tpu.matmul %154, %149, %cst_89 {dimension_numbers = #tpu.dot_dimension_numbers<[1], [0], [0], [1], [0, 0, 1, 1], [], []>} : vector<16x64xf32>, vector<64x4xf32>, vector<16x4xf32> -> vector<16x4xf32>
    %cst_90 = arith.constant dense<0.000000e+00> : vector<16x64xf32>
    %156 = tpu.matmul %155, %150, %cst_90 {dimension_numbers = #tpu.dot_dimension_numbers<[1], [0], [0], [1], [0, 0, 1, 1], [], []>} : vector<16x4xf32>, vector<4x64xf32>, vector<16x64xf32> -> vector<16x64xf32>
    %cst_91 = arith.constant 6.400000e-04 : f32
    %157 = vector.broadcast %cst_91 : f32 to vector<16x64xf32>
    %158 = arith.addf %156, %157 : vector<16x64xf32>
    %159 = math.rsqrt %158 : vector<16x64xf32>
    %160 = arith.mulf %153, %159 : vector<16x64xf32>
    %c0_92 = arith.constant 0 : index
    %c0_93 = arith.constant 0 : index
    %161 = vector.load %arg26[%c0_92, %c0_93] : memref<1x64xf32, #tpu.memory_space<vmem>>, vector<1x64xf32>
    %162 = vector.broadcast %161 : vector<1x64xf32> to vector<16x64xf32>
    %163 = arith.mulf %160, %162 : vector<16x64xf32>
    %c0_94 = arith.constant 0 : index
    %c0_95 = arith.constant 0 : index
    %164 = vector.load %arg27[%c0_94, %c0_95] : memref<1x64xf32, #tpu.memory_space<vmem>>, vector<1x64xf32>
    %165 = vector.broadcast %164 : vector<1x64xf32> to vector<16x64xf32>
    %166 = arith.addf %163, %165 : vector<16x64xf32>
    %167 = arith.mulf %166, %65 : vector<16x64xf32>
    %c0_96 = arith.constant 0 : index
    %c0_97 = arith.constant 0 : index
    %168 = vector.load %arg30[%c0_96, %c0_97] : memref<64x64xf32, #tpu.memory_space<vmem>>, vector<64x64xf32>
    %cst_98 = arith.constant dense<0.000000e+00> : vector<16x64xf32>
    %169 = tpu.matmul %167, %168, %cst_98 {dimension_numbers = #tpu.dot_dimension_numbers<[1], [0], [0], [1], [0, 0, 1, 1], [], []>} : vector<16x64xf32>, vector<64x64xf32>, vector<16x64xf32> -> vector<16x64xf32>
    %170 = arith.addf %0, %169 : vector<16x64xf32>
    %c0_99 = arith.constant 0 : index
    %c0_100 = arith.constant 0 : index
    %171 = vector.load %arg31[%c0_99, %c0_100] : memref<1x64xf32, #tpu.memory_space<vmem>>, vector<1x64xf32>
    %c0_101 = arith.constant 0 : index
    %c0_102 = arith.constant 0 : index
    %172 = vector.load %arg32[%c0_101, %c0_102] : memref<1x64xf32, #tpu.memory_space<vmem>>, vector<1x64xf32>
    %cst_103 = arith.constant dense<0.000000e+00> : vector<16xf32>
    %173 = vector.multi_reduction <add>, %170, %cst_103 [1] : vector<16x64xf32> to vector<16xf32>
    %174 = vector.shape_cast %173 : vector<16xf32> to vector<16x1xf32>
    %cst_104 = arith.constant 6.400000e+01 : f32
    %175 = vector.broadcast %cst_104 : f32 to vector<16x1xf32>
    %176 = arith.divf %174, %175 : vector<16x1xf32>
    %177 = vector.broadcast %176 : vector<16x1xf32> to vector<16x64xf32>
    %178 = arith.subf %170, %177 : vector<16x64xf32>
    %179 = arith.mulf %178, %178 : vector<16x64xf32>
    %cst_105 = arith.constant dense<0.000000e+00> : vector<16xf32>
    %180 = vector.multi_reduction <add>, %179, %cst_105 [1] : vector<16x64xf32> to vector<16xf32>
    %181 = vector.shape_cast %180 : vector<16xf32> to vector<16x1xf32>
    %cst_106 = arith.constant 6.400000e+01 : f32
    %182 = vector.broadcast %cst_106 : f32 to vector<16x1xf32>
    %183 = arith.divf %181, %182 : vector<16x1xf32>
    %184 = vector.broadcast %176 : vector<16x1xf32> to vector<16x64xf32>
    %185 = arith.subf %170, %184 : vector<16x64xf32>
    %cst_107 = arith.constant 9.99999974E-6 : f32
    %186 = vector.broadcast %cst_107 : f32 to vector<16x1xf32>
    %187 = arith.addf %183, %186 : vector<16x1xf32>
    %188 = math.rsqrt %187 : vector<16x1xf32>
    %189 = vector.broadcast %188 : vector<16x1xf32> to vector<16x64xf32>
    %190 = arith.mulf %185, %189 : vector<16x64xf32>
    %191 = vector.broadcast %171 : vector<1x64xf32> to vector<16x64xf32>
    %192 = arith.mulf %190, %191 : vector<16x64xf32>
    %193 = vector.broadcast %172 : vector<1x64xf32> to vector<16x64xf32>
    %194 = arith.addf %192, %193 : vector<16x64xf32>
    %c0_108 = arith.constant 0 : index
    %c0_109 = arith.constant 0 : index
    %195 = vector.load %arg2[%c0_108, %c0_109] : memref<2x64xf32, #tpu.memory_space<vmem>>, vector<2x64xf32>
    %196 = vector.extract_strided_slice %194 {offsets = [0, 0], sizes = [8, 64], strides = [1, 1]} : vector<16x64xf32> to vector<8x64xf32>
    %197 = vector.extract_strided_slice %195 {offsets = [0, 0], sizes = [1, 64], strides = [1, 1]} : vector<2x64xf32> to vector<1x64xf32>
    %198 = vector.extract_strided_slice %196 {offsets = [0, 0], sizes = [7, 64], strides = [1, 1]} : vector<8x64xf32> to vector<7x64xf32>
    %199 = tpu.concatenate %197, %198 in 0 : vector<1x64xf32>, vector<7x64xf32> -> vector<8x64xf32>
    %200 = vector.extract_strided_slice %194 {offsets = [8, 0], sizes = [8, 64], strides = [1, 1]} : vector<16x64xf32> to vector<8x64xf32>
    %201 = vector.extract_strided_slice %195 {offsets = [1, 0], sizes = [1, 64], strides = [1, 1]} : vector<2x64xf32> to vector<1x64xf32>
    %202 = vector.extract_strided_slice %200 {offsets = [0, 0], sizes = [7, 64], strides = [1, 1]} : vector<8x64xf32> to vector<7x64xf32>
    %203 = tpu.concatenate %201, %202 in 0 : vector<1x64xf32>, vector<7x64xf32> -> vector<8x64xf32>
    %204 = tpu.concatenate %199, %203 in 0 : vector<8x64xf32>, vector<8x64xf32> -> vector<16x64xf32>
    %205 = arith.subf %204, %194 : vector<16x64xf32>
    %c0_110 = arith.constant 0 : index
    %c0_111 = arith.constant 0 : index
    %206 = vector.load %arg33[%c0_110, %c0_111] : memref<2x64xf32, #tpu.memory_space<vmem>>, vector<2x64xf32>
    %207 = vector.extract_strided_slice %206 {offsets = [0, 0], sizes = [1, 64], strides = [1, 1]} : vector<2x64xf32> to vector<1x64xf32>
    %208 = vector.broadcast %207 : vector<1x64xf32> to vector<16x64xf32>
    %209 = arith.mulf %205, %208 : vector<16x64xf32>
    %210 = arith.addf %194, %209 : vector<16x64xf32>
    %211 = vector.extract_strided_slice %206 {offsets = [1, 0], sizes = [1, 64], strides = [1, 1]} : vector<2x64xf32> to vector<1x64xf32>
    %212 = vector.broadcast %211 : vector<1x64xf32> to vector<16x64xf32>
    %213 = arith.mulf %205, %212 : vector<16x64xf32>
    %214 = arith.addf %194, %213 : vector<16x64xf32>
    %c0_112 = arith.constant 0 : index
    %c0_113 = arith.constant 0 : index
    %215 = vector.load %arg34[%c0_112, %c0_113] : memref<64x224xf32, #tpu.memory_space<vmem>>, vector<64x224xf32>
    %cst_114 = arith.constant dense<0.000000e+00> : vector<16x224xf32>
    %216 = tpu.matmul %210, %215, %cst_114 {dimension_numbers = #tpu.dot_dimension_numbers<[1], [0], [0], [1], [0, 0, 1, 1], [], []>} : vector<16x64xf32>, vector<64x224xf32>, vector<16x224xf32> -> vector<16x224xf32>
    %cst_115 = arith.constant 0.000000e+00 : f32
    %217 = vector.broadcast %cst_115 : f32 to vector<16x224xf32>
    %218 = arith.maximumf %216, %217 : vector<16x224xf32>
    %219 = arith.mulf %218, %218 : vector<16x224xf32>
    %c0_116 = arith.constant 0 : index
    %c0_117 = arith.constant 0 : index
    %220 = vector.load %arg35[%c0_116, %c0_117] : memref<224x64xf32, #tpu.memory_space<vmem>>, vector<224x64xf32>
    %cst_118 = arith.constant dense<0.000000e+00> : vector<16x64xf32>
    %221 = tpu.matmul %219, %220, %cst_118 {dimension_numbers = #tpu.dot_dimension_numbers<[1], [0], [0], [1], [0, 0, 1, 1], [], []>} : vector<16x224xf32>, vector<224x64xf32>, vector<16x64xf32> -> vector<16x64xf32>
    %c0_119 = arith.constant 0 : index
    %c0_120 = arith.constant 0 : index
    %222 = vector.load %arg36[%c0_119, %c0_120] : memref<64x64xf32, #tpu.memory_space<vmem>>, vector<64x64xf32>
    %cst_121 = arith.constant dense<0.000000e+00> : vector<16x64xf32>
    %223 = tpu.matmul %214, %222, %cst_121 {dimension_numbers = #tpu.dot_dimension_numbers<[1], [0], [0], [1], [0, 0, 1, 1], [], []>} : vector<16x64xf32>, vector<64x64xf32>, vector<16x64xf32> -> vector<16x64xf32>
    %224 = arith.negf %223 : vector<16x64xf32>
    %225 = math.exp %224 : vector<16x64xf32>
    %cst_122 = arith.constant 1.000000e+00 : f32
    %226 = vector.broadcast %cst_122 : f32 to vector<16x64xf32>
    %227 = arith.addf %226, %225 : vector<16x64xf32>
    %228 = arith.divf %226, %227 : vector<16x64xf32>
    %229 = arith.mulf %228, %221 : vector<16x64xf32>
    %230 = arith.addf %170, %229 : vector<16x64xf32>
    %c0_123 = arith.constant 0 : index
    %c0_124 = arith.constant 0 : index
    %231 = vector.load %arg37[%c0_123, %c0_124] : memref<16x64xf32, #tpu.memory_space<vmem>>, vector<16x64xf32>
    tpu.vector_store %arg37[%c0_123, %c0_124], %230 {strides = array<i32>} : memref<16x64xf32, #tpu.memory_space<vmem>>, vector<16x64xf32>,
    %232 = vector.extract_strided_slice %25 {offsets = [7, 0], sizes = [1, 64], strides = [1, 1]} : vector<16x64xf32> to vector<1x64xf32>
    %233 = vector.extract_strided_slice %25 {offsets = [15, 0], sizes = [1, 64], strides = [1, 1]} : vector<16x64xf32> to vector<1x64xf32>
    %234 = tpu.concatenate %232, %233 in 0 : vector<1x64xf32>, vector<1x64xf32> -> vector<2x64xf32>
    %c0_125 = arith.constant 0 : index
    %c0_126 = arith.constant 0 : index
    %235 = vector.load %arg38[%c0_125, %c0_126] : memref<2x64xf32, #tpu.memory_space<vmem>>, vector<2x64xf32>
    tpu.vector_store %arg38[%c0_125, %c0_126], %234 {strides = array<i32>} : memref<2x64xf32, #tpu.memory_space<vmem>>, vector<2x64xf32>,
    %236 = vector.extract_strided_slice %194 {offsets = [7, 0], sizes = [1, 64], strides = [1, 1]} : vector<16x64xf32> to vector<1x64xf32>
    %237 = vector.extract_strided_slice %194 {offsets = [15, 0], sizes = [1, 64], strides = [1, 1]} : vector<16x64xf32> to vector<1x64xf32>
    %238 = tpu.concatenate %236, %237 in 0 : vector<1x64xf32>, vector<1x64xf32> -> vector<2x64xf32>
    %c0_127 = arith.constant 0 : index
    %c0_128 = arith.constant 0 : index
    %239 = vector.load %arg39[%c0_127, %c0_128] : memref<2x64xf32, #tpu.memory_space<vmem>>, vector<2x64xf32>
    tpu.vector_store %arg39[%c0_127, %c0_128], %238 {strides = array<i32>} : memref<2x64xf32, #tpu.memory_space<vmem>>, vector<2x64xf32>,
    return
  }
}

</mosaic_0001>

<llo_original>
// kernel: rwkv6_block.1
$region0: #{rwkv6_block.1}
  #allocation0 [shape = 'u32[]', space=smem, size = 0x4, offset = 0x4, fixed_abs, tag = 'smem constant byte address 0x4 - core index']
  #allocation1 [shape = 'u32[72,128]{1,0:T(1,128)}', space=vmem, size = 0x9000, scoped, tag = 'internal scratch']
  %s0 = inlined_call_operand.smem [shape: u32[41], index: -1, kind: input, shape index: {}]
  %s1 = sld [smem:[%s0]]
  %s2 = scalar_lea.smem %s0, 1
  %s3 = sld [smem:[%s2]]
  %s4 = scalar_lea.smem %s0, 2
  %s5 = sld [smem:[%s4]]
  %s6 = scalar_lea.smem %s0, 3
  %s7 = sld [smem:[%s6]]
  %s8 = scalar_lea.smem %s0, 4
  %s9 = sld [smem:[%s8]]
  %s10 = scalar_lea.smem %s0, 5
  %s11 = sld [smem:[%s10]]
  %s12 = scalar_lea.smem %s0, 6
  %s13 = sld [smem:[%s12]]
  %s14 = scalar_lea.smem %s0, 7
  %s15 = sld [smem:[%s14]]
  %s16 = scalar_lea.smem %s0, 8
  %s17 = sld [smem:[%s16]]
  %s18 = scalar_lea.smem %s0, 9
  %s19 = sld [smem:[%s18]]
  %s20 = scalar_lea.smem %s0, 10
  %s21 = sld [smem:[%s20]]
  %s22 = scalar_lea.smem %s0, 11
  %s23 = sld [smem:[%s22]]
  %s24 = scalar_lea.smem %s0, 12
  %s25 = sld [smem:[%s24]]
  %s26 = scalar_lea.smem %s0, 13
  %s27 = sld [smem:[%s26]]
  %s28 = scalar_lea.smem %s0, 14
  %s29 = sld [smem:[%s28]]
  %s30 = scalar_lea.smem %s0, 15
  %s31 = sld [smem:[%s30]]
  %s32 = scalar_lea.smem %s0, 16
  %s33 = sld [smem:[%s32]]
  %s34 = scalar_lea.smem %s0, 17
  %s35 = sld [smem:[%s34]]
  %s36 = scalar_lea.smem %s0, 18
  %s37 = sld [smem:[%s36]]
  %s38 = scalar_lea.smem %s0, 19
  %s39 = sld [smem:[%s38]]
  %s40 = scalar_lea.smem %s0, 20
  %s41 = sld [smem:[%s40]]
  %s42 = scalar_lea.smem %s0, 21
  %s43 = sld [smem:[%s42]]
  %s44 = scalar_lea.smem %s0, 22
  %s45 = sld [smem:[%s44]]
  %s46 = scalar_lea.smem %s0, 23
  %s47 = sld [smem:[%s46]]
  %s48 = scalar_lea.smem %s0, 24
  %s49 = sld [smem:[%s48]]
  %s50 = scalar_lea.smem %s0, 25
  %s51 = sld [smem:[%s50]]
  %s52 = scalar_lea.smem %s0, 26
  %s53 = sld [smem:[%s52]]
  %s54 = scalar_lea.smem %s0, 27
  %s55 = sld [smem:[%s54]]
  %s56 = scalar_lea.smem %s0, 28
  %s57 = sld [smem:[%s56]]
  %s58 = scalar_lea.smem %s0, 29
  %s59 = sld [smem:[%s58]]
  %s60 = scalar_lea.smem %s0, 30
  %s61 = sld [smem:[%s60]]
  %s62 = scalar_lea.smem %s0, 31
  %s63 = sld [smem:[%s62]]
  %s64 = scalar_lea.smem %s0, 32
  %s65 = sld [smem:[%s64]]
  %s66 = scalar_lea.smem %s0, 33
  %s67 = sld [smem:[%s66]]
  %s68 = scalar_lea.smem %s0, 34
  %s69 = sld [smem:[%s68]]
  %s70 = scalar_lea.smem %s0, 35
  %s71 = sld [smem:[%s70]]
  %s72 = scalar_lea.smem %s0, 36
  %s73 = sld [smem:[%s72]]
  %s74 = scalar_lea.smem %s0, 37
  %s75 = sld [smem:[%s74]]
  %s76 = scalar_lea.smem %s0, 38
  %s77 = sld [smem:[%s76]]
  %s78 = scalar_lea.smem %s0, 39
  %s79 = sld [smem:[%s78]]
  %s80 = scalar_lea.smem %s0, 40
  %s81 = sld [smem:[%s80]]
  %82 = xla_tuple %s75, %s77, %s79, %s81
  %s83 = sld [smem:[#allocation0]]
  $region222: #{rwkv6_block.1} parent=0
    _
  %s85 = ssub.s32 1, %s83
  %s86 = scalar_select 0, %s85, %s83
  $region1: #{rwkv6_block.1} parent=0
    #allocation2 [shape = 'u8[65536]{0}', space=vmem, size = 0x10000, scoped, tag = 'input window, operand 3, single buffered']
    #allocation3 [shape = 's32[1]{0}', space=sflag, size = 0x4, scoped, tag = 'scoped memory for rwkv6_block.1']
    #allocation4 [shape = 's32[1]{0}', space=sflag, size = 0x4, scoped, tag = 'scoped memory for rwkv6_block.1']
    #allocation5 [shape = 'u8[65536]{0}', space=vmem, size = 0x10000, scoped, tag = 'input window, operand 7, single buffered']
    #allocation6 [shape = 's32[1]{0}', space=sflag, size = 0x4, scoped, tag = 'scoped memory for rwkv6_block.1']
    #allocation7 [shape = 'u8[245760]{0}', space=vmem, size = 0x3c000, scoped, tag = 'input window, operand 8, single buffered']
    #allocation8 [shape = 'u8[32768]{0}', space=vmem, size = 0x8000, scoped, tag = 'input window, operand 13, single buffered']
    #allocation9 [shape = 's32[1]{0}', space=sflag, size = 0x4, scoped, tag = 'scoped memory for rwkv6_block.1']
    #allocation10 [shape = 'u8[32768]{0}', space=vmem, size = 0x8000, scoped, tag = 'input window, operand 19, single buffered']
    #allocation11 [shape = 'u8[32768]{0}', space=vmem, size = 0x8000, scoped, tag = 'input window, operand 20, single buffered']
    #allocation12 [shape = 's32[1]{0}', space=sflag, size = 0x4, scoped, tag = 'scoped memory for rwkv6_block.1']
    #allocation13 [shape = 'u8[32768]{0}', space=vmem, size = 0x8000, scoped, tag = 'input window, operand 22, single buffered']
    #allocation14 [shape = 'u8[32768]{0}', space=vmem, size = 0x8000, scoped, tag = 'input window, operand 30, single buffered']
    #allocation15 [shape = 's32[1]{0}', space=sflag, size = 0x4, scoped, tag = 'scoped memory for rwkv6_block.1']
    #allocation16 [shape = 'u8[65536]{0}', space=vmem, size = 0x10000, scoped, tag = 'input window, operand 34, single buffered']
    #allocation17 [shape = 'u8[32768]{0}', space=vmem, size = 0x8000, scoped, tag = 'input window, operand 36, single buffered']
    #allocation18 [shape = 's32[1]{0}', space=sflag, size = 0x4, scoped, tag = 'scoped memory for rwkv6_block.1']
    #allocation19 [shape = 'u8[8192]{0}', space=vmem, size = 0x2000, scoped, tag = 'output window, operand 0, single buffered']
    #allocation20 [shape = 'u8[1024]{0}', space=vmem, size = 0x400, scoped, tag = 'output window, operand 1, single buffered']
    #allocation21 [shape = 's32[1]{0}', space=sflag, size = 0x4, scoped, tag = 'scoped memory for rwkv6_block.1']
    #allocation22 [shape = 'u8[1024]{0}', space=vmem, size = 0x400, scoped, tag = 'output window, operand 2, single buffered']
    #allocation23 [shape = 'u8[65536]{0}', space=vmem, size = 0x10000, scoped, tag = 'output window, operand 3, single buffered']
    #allocation24 [shape = 's32[1]{0}', space=sflag, size = 0x4, scoped, tag = 'scoped memory for rwkv6_block.1']
    %87 = vsyncpa [#allocation3], 0
    %88 = vsyncpa [#allocation6], 0
    %89 = vsyncpa [#allocation9], 0
    %90 = vsyncpa [#allocation12], 0
    %91 = vsyncpa [#allocation15], 0
    %92 = vsyncpa [#allocation18], 0
    %93 = vsyncpa [#allocation4], 0
    %94 = vsyncpa [#allocation21], 0
    %95 = vsyncpa [#allocation24], 0
    // Predicated region
    $region2: #{rwkv6_block.1} parent=1 // pred_check
      _
    $region3: #{rwkv6_block.1} parent=1 // pred_check_branch
      %97 = sbr.rel (0) target = $region5
    $region4: #{rwkv6_block.1} parent=1 // pred_region
      _
    $region5: #{rwkv6_block.1} parent=1 // pred_fallthru
      _
    // Predicated region
    $region6: #{rwkv6_block.1} parent=1 // pred_check
      _
    $region7: #{rwkv6_block.1} parent=1 // pred_check_branch
      %99 = sbr.rel (0) target = $region9
    $region8: #{rwkv6_block.1} parent=1 // pred_region
      _
    $region9: #{rwkv6_block.1} parent=1 // pred_fallthru
      _
    // Predicated region
    $region10: #{rwkv6_block.1} parent=1 // pred_check
      _
    $region11: #{rwkv6_block.1} parent=1 // pred_check_branch
      %101 = sbr.rel (0) target = $region13
    $region12: #{rwkv6_block.1} parent=1 // pred_region
      _
    $region13: #{rwkv6_block.1} parent=1 // pred_fallthru
      _
    // Predicated region
    $region14: #{rwkv6_block.1} parent=1 // pred_check
      _
    $region15: #{rwkv6_block.1} parent=1 // pred_check_branch
      %103 = sbr.rel (0) target = $region17
    $region16: #{rwkv6_block.1} parent=1 // pred_region
      %105 = vsyncadd [#allocation3], 0
      %s106 = sshll.u32 %s7, 4
      %s107 = int_to_ptr.hbm [resolvable:$true] %s106
      %s108 = sshll.u32 [#allocation2], 4
      %s109 = int_to_ptr.vmem [resolvable:$true] %s108
      %114 = dma.hbm_to_vmem [thread:$0]  %s107, 2048, %s109, [#allocation3], 128, 128, 8
    $region17: #{rwkv6_block.1} parent=1 // pred_fallthru
      _
    // Predicated region
    $region18: #{rwkv6_block.1} parent=1 // pred_check
      _
    $region19: #{rwkv6_block.1} parent=1 // pred_check_branch
      %116 = sbr.rel (0) target = $region21
    $region20: #{rwkv6_block.1} parent=1 // pred_region
      _
    $region21: #{rwkv6_block.1} parent=1 // pred_fallthru
      _
    // Predicated region
    $region22: #{rwkv6_block.1} parent=1 // pred_check
      _
    $region23: #{rwkv6_block.1} parent=1 // pred_check_branch
      %118 = sbr.rel (0) target = $region25
    $region24: #{rwkv6_block.1} parent=1 // pred_region
      _
    $region25: #{rwkv6_block.1} parent=1 // pred_fallthru
      _
    // Predicated region
    $region26: #{rwkv6_block.1} parent=1 // pred_check
      _
    $region27: #{rwkv6_block.1} parent=1 // pred_check_branch
      %120 = sbr.rel (0) target = $region29
    $region28: #{rwkv6_block.1} parent=1 // pred_region
      _
    $region29: #{rwkv6_block.1} parent=1 // pred_fallthru
      _
    // Predicated region
    $region30: #{rwkv6_block.1} parent=1 // pred_check
      _
    $region31: #{rwkv6_block.1} parent=1 // pred_check_branch
      %122 = sbr.rel (0) target = $region33
    $region32: #{rwkv6_block.1} parent=1 // pred_region
      %124 = vsyncadd [#allocation6], 0
      %s125 = sshll.u32 %s15, 4
      %s126 = int_to_ptr.hbm [resolvable:$true] %s125
      %s127 = sshll.u32 [#allocation5], 4
      %s128 = int_to_ptr.vmem [resolvable:$true] %s127
      %133 = dma.hbm_to_vmem [thread:$0]  %s126, 2048, %s128, [#allocation6], 256, 256, 16
    $region33: #{rwkv6_block.1} parent=1 // pred_fallthru
      _
    // Predicated region
    $region34: #{rwkv6_block.1} parent=1 // pred_check
      _
    $region35: #{rwkv6_block.1} parent=1 // pred_check_branch
      %135 = sbr.rel (0) target = $region37
    $region36: #{rwkv6_block.1} parent=1 // pred_region
      %137 = vsyncadd [#allocation6], 0
      %s138 = sshll.u32 %s17, 4
      %s139 = int_to_ptr.hbm [resolvable:$true] %s138
      %s140 = sshll.u32 [#allocation7], 4
      %s141 = int_to_ptr.vmem [resolvable:$true] %s140
      %146 = dma.hbm_to_vmem [thread:$0]  %s139, 7680, %s141, [#allocation6], 384, 384, 24
    $region37: #{rwkv6_block.1} parent=1 // pred_fallthru
      _
    // Predicated region
    $region38: #{rwkv6_block.1} parent=1 // pred_check
      _
    $region39: #{rwkv6_block.1} parent=1 // pred_check_branch
      %148 = sbr.rel (0) target = $region41
    $region40: #{rwkv6_block.1} parent=1 // pred_region
      _
    $region41: #{rwkv6_block.1} parent=1 // pred_fallthru
      _
    // Predicated region
    $region42: #{rwkv6_block.1} parent=1 // pred_check
      _
    $region43: #{rwkv6_block.1} parent=1 // pred_check_branch
      %150 = sbr.rel (0) target = $region45
    $region44: #{rwkv6_block.1} parent=1 // pred_region
      _
    $region45: #{rwkv6_block.1} parent=1 // pred_fallthru
      _
    // Predicated region
    $region46: #{rwkv6_block.1} parent=1 // pred_check
      _
    $region47: #{rwkv6_block.1} parent=1 // pred_check_branch
      %152 = sbr.rel (0) target = $region49
    $region48: #{rwkv6_block.1} parent=1 // pred_region
      _
    $region49: #{rwkv6_block.1} parent=1 // pred_fallthru
      _
    // Predicated region
    $region50: #{rwkv6_block.1} parent=1 // pred_check
      _
    $region51: #{rwkv6_block.1} parent=1 // pred_check_branch
      %154 = sbr.rel (0) target = $region53
    $region52: #{rwkv6_block.1} parent=1 // pred_region
      _
    $region53: #{rwkv6_block.1} parent=1 // pred_fallthru
      _
    // Predicated region
    $region54: #{rwkv6_block.1} parent=1 // pred_check
      _
    $region55: #{rwkv6_block.1} parent=1 // pred_check_branch
      %156 = sbr.rel (0) target = $region57
    $region56: #{rwkv6_block.1} parent=1 // pred_region
      %158 = vsyncadd [#allocation9], 0
      %s159 = sshll.u32 %s27, 4
      %s160 = int_to_ptr.hbm [resolvable:$true] %s159
      %s161 = sshll.u32 [#allocation8], 4
      %s162 = int_to_ptr.vmem [resolvable:$true] %s161
      %167 = dma.hbm_to_vmem [thread:$0]  %s160, 1024, %s162, [#allocation9], 128, 128, 8
    $region57: #{rwkv6_block.1} parent=1 // pred_fallthru
      _
    // Predicated region
    $region58: #{rwkv6_block.1} parent=1 // pred_check
      _
    $region59: #{rwkv6_block.1} parent=1 // pred_check_branch
      %169 = sbr.rel (0) target = $region61
    $region60: #{rwkv6_block.1} parent=1 // pred_region
      _
    $region61: #{rwkv6_block.1} parent=1 // pred_fallthru
      _
    // Predicated region
    $region62: #{rwkv6_block.1} parent=1 // pred_check
      _
    $region63: #{rwkv6_block.1} parent=1 // pred_check_branch
      %171 = sbr.rel (0) target = $region65
    $region64: #{rwkv6_block.1} parent=1 // pred_region
      _
    $region65: #{rwkv6_block.1} parent=1 // pred_fallthru
      _
    // Predicated region
    $region66: #{rwkv6_block.1} parent=1 // pred_check
      _
    $region67: #{rwkv6_block.1} parent=1 // pred_check_branch
      %173 = sbr.rel (0) target = $region69
    $region68: #{rwkv6_block.1} parent=1 // pred_region
      _
    $region69: #{rwkv6_block.1} parent=1 // pred_fallthru
      _
    // Predicated region
    $region70: #{rwkv6_block.1} parent=1 // pred_check
      _
    $region71: #{rwkv6_block.1} parent=1 // pred_check_branch
      %175 = sbr.rel (0) target = $region73
    $region72: #{rwkv6_block.1} parent=1 // pred_region
      _
    $region73: #{rwkv6_block.1} parent=1 // pred_fallthru
      _
    // Predicated region
    $region74: #{rwkv6_block.1} parent=1 // pred_check
      _
    $region75: #{rwkv6_block.1} parent=1 // pred_check_branch
      %177 = sbr.rel (0) target = $region77
    $region76: #{rwkv6_block.1} parent=1 // pred_region
      _
    $region77: #{rwkv6_block.1} parent=1 // pred_fallthru
      _
    // Predicated region
    $region78: #{rwkv6_block.1} parent=1 // pred_check
      _
    $region79: #{rwkv6_block.1} parent=1 // pred_check_branch
      %179 = sbr.rel (0) target = $region81
    $region80: #{rwkv6_block.1} parent=1 // pred_region
      %181 = vsyncadd [#allocation9], 0
      %s182 = sshll.u32 %s39, 4
      %s183 = int_to_ptr.hbm [resolvable:$true] %s182
      %s184 = sshll.u32 [#allocation10], 4
      %s185 = int_to_ptr.vmem [resolvable:$true] %s184
      %190 = dma.hbm_to_vmem [thread:$0]  %s183, 1024, %s185, [#allocation9], 128, 128, 8
    $region81: #{rwkv6_block.1} parent=1 // pred_fallthru
      _
    // Predicated region
    $region82: #{rwkv6_block.1} parent=1 // pred_check
      _
    $region83: #{rwkv6_block.1} parent=1 // pred_check_branch
      %192 = sbr.rel (0) target = $region85
    $region84: #{rwkv6_block.1} parent=1 // pred_region
      %194 = vsyncadd [#allocation12], 0
      %s195 = sshll.u32 %s41, 4
      %s196 = int_to_ptr.hbm [resolvable:$true] %s195
      %s197 = sshll.u32 [#allocation11], 4
      %s198 = int_to_ptr.vmem [resolvable:$true] %s197
      %203 = dma.hbm_to_vmem [thread:$0]  %s196, 1024, %s198, [#allocation12], 128, 128, 8
    $region85: #{rwkv6_block.1} parent=1 // pred_fallthru
      _
    // Predicated region
    $region86: #{rwkv6_block.1} parent=1 // pred_check
      _
    $region87: #{rwkv6_block.1} parent=1 // pred_check_branch
      %205 = sbr.rel (0) target = $region89
    $region88: #{rwkv6_block.1} parent=1 // pred_region
      _
    $region89: #{rwkv6_block.1} parent=1 // pred_fallthru
      _
    // Predicated region
    $region90: #{rwkv6_block.1} parent=1 // pred_check
      _
    $region91: #{rwkv6_block.1} parent=1 // pred_check_branch
      %207 = sbr.rel (0) target = $region93
    $region92: #{rwkv6_block.1} parent=1 // pred_region
      %209 = vsyncadd [#allocation12], 0
      %s210 = sshll.u32 %s45, 4
      %s211 = int_to_ptr.hbm [resolvable:$true] %s210
      %s212 = sshll.u32 [#allocation13], 4
      %s213 = int_to_ptr.vmem [resolvable:$true] %s212
      %218 = dma.hbm_to_vmem [thread:$0]  %s211, 1024, %s213, [#allocation12], 128, 128, 8
    $region93: #{rwkv6_block.1} parent=1 // pred_fallthru
      _
    // Predicated region
    $region94: #{rwkv6_block.1} parent=1 // pred_check
      _
    $region95: #{rwkv6_block.1} parent=1 // pred_check_branch
      %220 = sbr.rel (0) target = $region97
    $region96: #{rwkv6_block.1} parent=1 // pred_region
      _
    $region97: #{rwkv6_block.1} parent=1 // pred_fallthru
      _
    // Predicated region
    $region98: #{rwkv6_block.1} parent=1 // pred_check
      _
    $region99: #{rwkv6_block.1} parent=1 // pred_check_branch
      %222 = sbr.rel (0) target = $region101
    $region100: #{rwkv6_block.1} parent=1 // pred_region
      _
    $region101: #{rwkv6_block.1} parent=1 // pred_fallthru
      _
    // Predicated region
    $region102: #{rwkv6_block.1} parent=1 // pred_check
      _
    $region103: #{rwkv6_block.1} parent=1 // pred_check_branch
      %224 = sbr.rel (0) target = $region105
    $region104: #{rwkv6_block.1} parent=1 // pred_region
      _
    $region105: #{rwkv6_block.1} parent=1 // pred_fallthru
      _
    // Predicated region
    $region106: #{rwkv6_block.1} parent=1 // pred_check
      _
    $region107: #{rwkv6_block.1} parent=1 // pred_check_branch
      %226 = sbr.rel (0) target = $region109
    $region108: #{rwkv6_block.1} parent=1 // pred_region
      _
    $region109: #{rwkv6_block.1} parent=1 // pred_fallthru
      _
    // Predicated region
    $region110: #{rwkv6_block.1} parent=1 // pred_check
      _
    $region111: #{rwkv6_block.1} parent=1 // pred_check_branch
      %228 = sbr.rel (0) target = $region113
    $region112: #{rwkv6_block.1} parent=1 // pred_region
      _
    $region113: #{rwkv6_block.1} parent=1 // pred_fallthru
      _
    // Predicated region
    $region114: #{rwkv6_block.1} parent=1 // pred_check
      _
    $region115: #{rwkv6_block.1} parent=1 // pred_check_branch
      %230 = sbr.rel (0) target = $region117
    $region116: #{rwkv6_block.1} parent=1 // pred_region
      _
    $region117: #{rwkv6_block.1} parent=1 // pred_fallthru
      _
    // Predicated region
    $region118: #{rwkv6_block.1} parent=1 // pred_check
      _
    $region119: #{rwkv6_block.1} parent=1 // pred_check_branch
      %232 = sbr.rel (0) target = $region121
    $region120: #{rwkv6_block.1} parent=1 // pred_region
      _
    $region121: #{rwkv6_block.1} parent=1 // pred_fallthru
      _
    // Predicated region
    $region122: #{rwkv6_block.1} parent=1 // pred_check
      _
    $region123: #{rwkv6_block.1} parent=1 // pred_check_branch
      %234 = sbr.rel (0) target = $region125
    $region124: #{rwkv6_block.1} parent=1 // pred_region
      %236 = vsyncadd [#allocation15], 0
      %s237 = sshll.u32 %s61, 4
      %s238 = int_to_ptr.hbm [resolvable:$true] %s237
      %s239 = sshll.u32 [#allocation14], 4
      %s240 = int_to_ptr.vmem [resolvable:$true] %s239
      %245 = dma.hbm_to_vmem [thread:$0]  %s238, 1024, %s240, [#allocation15], 128, 128, 8
    $region125: #{rwkv6_block.1} parent=1 // pred_fallthru
      _
    // Predicated region
    $region126: #{rwkv6_block.1} parent=1 // pred_check
      _
    $region127: #{rwkv6_block.1} parent=1 // pred_check_branch
      %247 = sbr.rel (0) target = $region129
    $region128: #{rwkv6_block.1} parent=1 // pred_region
      _
    $region129: #{rwkv6_block.1} parent=1 // pred_fallthru
      _
    // Predicated region
    $region130: #{rwkv6_block.1} parent=1 // pred_check
      _
    $region131: #{rwkv6_block.1} parent=1 // pred_check_branch
      %249 = sbr.rel (0) target = $region133
    $region132: #{rwkv6_block.1} parent=1 // pred_region
      _
    $region133: #{rwkv6_block.1} parent=1 // pred_fallthru
      _
    // Predicated region
    $region134: #{rwkv6_block.1} parent=1 // pred_check
      _
    $region135: #{rwkv6_block.1} parent=1 // pred_check_branch
      %251 = sbr.rel (0) target = $region137
    $region136: #{rwkv6_block.1} parent=1 // pred_region
      _
    $region137: #{rwkv6_block.1} parent=1 // pred_fallthru
      _
    // Predicated region
    $region138: #{rwkv6_block.1} parent=1 // pred_check
      _
    $region139: #{rwkv6_block.1} parent=1 // pred_check_branch
      %253 = sbr.rel (0) target = $region141
    $region140: #{rwkv6_block.1} parent=1 // pred_region
      %255 = vsyncadd [#allocation15], 0
      %s256 = sshll.u32 %s69, 4
      %s257 = int_to_ptr.hbm [resolvable:$true] %s256
      %s258 = sshll.u32 [#allocation16], 4
      %s259 = int_to_ptr.vmem [resolvable:$true] %s258
      %264 = dma.hbm_to_vmem [thread:$0]  %s257, 2048, %s259, [#allocation15], 256, 256, 16
    $region141: #{rwkv6_block.1} parent=1 // pred_fallthru
      _
    // Predicated region
    $region142: #{rwkv6_block.1} parent=1 // pred_check
      _
    $region143: #{rwkv6_block.1} parent=1 // pred_check_branch
      %266 = sbr.rel (0) target = $region145
    $region144: #{rwkv6_block.1} parent=1 // pred_region
      _
    $region145: #{rwkv6_block.1} parent=1 // pred_fallthru
      _
    // Predicated region
    $region146: #{rwkv6_block.1} parent=1 // pred_check
      _
    $region147: #{rwkv6_block.1} parent=1 // pred_check_branch
      %268 = sbr.rel (0) target = $region149
    $region148: #{rwkv6_block.1} parent=1 // pred_region
      %270 = vsyncadd [#allocation18], 0
      %s271 = sshll.u32 %s73, 4
      %s272 = int_to_ptr.hbm [resolvable:$true] %s271
      %s273 = sshll.u32 [#allocation17], 4
      %s274 = int_to_ptr.vmem [resolvable:$true] %s273
      %279 = dma.hbm_to_vmem [thread:$0]  %s272, 1024, %s274, [#allocation18], 128, 128, 8
    $region149: #{rwkv6_block.1} parent=1 // pred_fallthru
      _
    // Predicated region
    $region150: #{rwkv6_block.1} parent=1 // pred_check
      _
    $region151: #{rwkv6_block.1} parent=1 // pred_check_branch
      %281 = sbr.rel (0) target = $region153
    $region152: #{rwkv6_block.1} parent=1 // pred_region
      %283 = dma.done [#allocation3], 2048
    $region153: #{rwkv6_block.1} parent=1 // pred_fallthru
      _
    // Predicated region
    $region154: #{rwkv6_block.1} parent=1 // pred_check
      _
    $region155: #{rwkv6_block.1} parent=1 // pred_check_branch
      %285 = sbr.rel (0) target = $region157
    $region156: #{rwkv6_block.1} parent=1 // pred_region
      %287 = dma.done [#allocation6], 2048
    $region157: #{rwkv6_block.1} parent=1 // pred_fallthru
      _
    // Predicated region
    $region158: #{rwkv6_block.1} parent=1 // pred_check
      _
    $region159: #{rwkv6_block.1} parent=1 // pred_check_branch
      %289 = sbr.rel (0) target = $region161
    $region160: #{rwkv6_block.1} parent=1 // pred_region
      %291 = dma.done [#allocation6], 7680
    $region161: #{rwkv6_block.1} parent=1 // pred_fallthru
      _
    // Predicated region
    $region162: #{rwkv6_block.1} parent=1 // pred_check
      _
    $region163: #{rwkv6_block.1} parent=1 // pred_check_branch
      %293 = sbr.rel (0) target = $region165
    $region164: #{rwkv6_block.1} parent=1 // pred_region
      %295 = dma.done [#allocation9], 1024
    $region165: #{rwkv6_block.1} parent=1 // pred_fallthru
      _
    // Predicated region
    $region166: #{rwkv6_block.1} parent=1 // pred_check
      _
    $region167: #{rwkv6_block.1} parent=1 // pred_check_branch
      %297 = sbr.rel (0) target = $region169
    $region168: #{rwkv6_block.1} parent=1 // pred_region
      %299 = dma.done [#allocation9], 1024
    $region169: #{rwkv6_block.1} parent=1 // pred_fallthru
      _
    // Predicated region
    $region170: #{rwkv6_block.1} parent=1 // pred_check
      _
    $region171: #{rwkv6_block.1} parent=1 // pred_check_branch
      %301 = sbr.rel (0) target = $region173
    $region172: #{rwkv6_block.1} parent=1 // pred_region
      %303 = dma.done [#allocation12], 1024
    $region173: #{rwkv6_block.1} parent=1 // pred_fallthru
      _
    // Predicated region
    $region174: #{rwkv6_block.1} parent=1 // pred_check
      _
    $region175: #{rwkv6_block.1} parent=1 // pred_check_branch
      %305 = sbr.rel (0) target = $region177
    $region176: #{rwkv6_block.1} parent=1 // pred_region
      %307 = dma.done [#allocation12], 1024
    $region177: #{rwkv6_block.1} parent=1 // pred_fallthru
      _
    // Predicated region
    $region178: #{rwkv6_block.1} parent=1 // pred_check
      _
    $region179: #{rwkv6_block.1} parent=1 // pred_check_branch
      %309 = sbr.rel (0) target = $region181
    $region180: #{rwkv6_block.1} parent=1 // pred_region
      %311 = dma.done [#allocation15], 1024
    $region181: #{rwkv6_block.1} parent=1 // pred_fallthru
      _
    // Predicated region
    $region182: #{rwkv6_block.1} parent=1 // pred_check
      _
    $region183: #{rwkv6_block.1} parent=1 // pred_check_branch
      %313 = sbr.rel (0) target = $region185
    $region184: #{rwkv6_block.1} parent=1 // pred_region
      %315 = dma.done [#allocation15], 2048
    $region185: #{rwkv6_block.1} parent=1 // pred_fallthru
      _
    // Predicated region
    $region186: #{rwkv6_block.1} parent=1 // pred_check
      _
    $region187: #{rwkv6_block.1} parent=1 // pred_check_branch
      %317 = sbr.rel (0) target = $region189
    $region188: #{rwkv6_block.1} parent=1 // pred_region
      %319 = dma.done [#allocation18], 1024
    $region189: #{rwkv6_block.1} parent=1 // pred_fallthru
      _
    %v320 = vld [vmem:[%s1] sm:$0xff]
    %v321 = vld [vmem:[%s1 + $0x8] sm:$0xff]
    %v322 = vld [vmem:[#allocation13] sm:$0xff]
    %v323 = vld [vmem:[#allocation13 + $0x8] sm:$0xff]
    %v324 = vld [vmem:[#allocation13 + $0x10] sm:$0xff]
    %v325 = vld [vmem:[#allocation13 + $0x18] sm:$0xff]
    %v326 = vld [vmem:[#allocation13 + $0x20] sm:$0xff]
    %v327 = vld [vmem:[#allocation13 + $0x28] sm:$0xff]
    %v328 = vld [vmem:[#allocation13 + $0x30] sm:$0xff]
    %v329 = vld [vmem:[#allocation13 + $0x38] sm:$0xff]
    %v330 = vld [vmem:[%s9] sm:$0x1]
    %v331 = vld [vmem:[%s11] sm:$0x1]
    %vm332 = vcmask 523264
    %v333 = vsel %vm332, %v320, 0.0
    %334 = vadd.xlane.f32.xlu0 %v333
    %v335 = vpop.xlane.xlu0 %334
    %v336 = vsel %vm332, %v321, 0.0
    %337 = vadd.xlane.f32.xlu0 %v336
    %v338 = vpop.xlane.xlu0 %337
    %v339 = vrcp.pop 64.0
    %v340 = vmul.f32 64.0, %v339
    %v341 = vsub.f32 1.0, %v340
    %v342 = vmul.f32 %v339, %v341
    %v343 = vadd.f32 %v339, %v342
    %vm344 = vweird.f32 %v339
    %v345 = vsel %vm344, %v339, %v343
    %v346 = vmul.f32 %v335, %v345
    %v347 = vmul.f32 %v338, %v345
    %v348 = vsub.f32 %v320, %v346
    %v349 = vsub.f32 %v321, %v347
    %v350 = vmul.f32 %v348, %v348
    %v351 = vmul.f32 %v349, %v349
    %v352 = vsel %vm332, %v350, 0.0
    %353 = vadd.xlane.f32.xlu0 %v352
    %v354 = vpop.xlane.xlu0 %353
    %v355 = vsel %vm332, %v351, 0.0
    %356 = vadd.xlane.f32.xlu0 %v355
    %v357 = vpop.xlane.xlu0 %356
    %v358 = vmul.f32 %v354, %v345
    %v359 = vmul.f32 %v357, %v345
    %v360 = vadd.f32 %v358, 1e-05
    %v361 = vadd.f32 %v359, 1e-05
    %v362 = vrsqrt.pop %v360
    %v363 = vmul.f32 %v362, %v360
    %v364 = vmul.f32 %v363, %v362
    %v365 = vmul.f32 0.5, %v364
    %v366 = vsub.f32 1.5, %v365
    %v367 = vmul.f32 %v362, %v366
    %vm368 = vweird.f32 %v360
    %vm369 = vweird.f32 %v362
    %vm370 = vmor %vm368, %vm369
    %v371 = vsel %vm370, %v362, %v367
    %v372 = vrsqrt.pop %v361
    %v373 = vmul.f32 %v372, %v361
    %v374 = vmul.f32 %v373, %v372
    %v375 = vmul.f32 0.5, %v374
    %v376 = vsub.f32 1.5, %v375
    %v377 = vmul.f32 %v372, %v376
    %vm378 = vweird.f32 %v361
    %vm379 = vweird.f32 %v372
    %vm380 = vmor %vm378, %vm379
    %v381 = vsel %vm380, %v372, %v377
    %v382 = vmul.f32 %v348, %v371
    %v383 = vmul.f32 %v349, %v381
    %v385 = vperm.slane %v330, 0
    %v387 = vmul.f32 %v382, %v385
    %v388 = vmul.f32 %v383, %v385
    %v390 = vperm.slane %v331, 0
    %v392 = vadd.f32 %v387, %v390
    %v393 = vadd.f32 %v388, %v390
    %v394 = vld [vmem:[%s3] sm:$0x3]
    %v396 = vrot.slane %v392, 7
    %vm398 = vcmask 1040384
    %v399 = vsel %vm398, %v394, %v396
    %v401 = vrot.slane %v394, 1
    %v404 = vrot.slane %v393, 7
    %v406 = vsel %vm398, %v401, %v404
    %v407 = vsub.f32 %v399, %v392
    %v408 = vsub.f32 %v406, %v393
    %v409 = vld [vmem:[%s13] sm:$0x1]
    %v411 = vperm.slane %v409, 0
    %v413 = vmul.f32 %v407, %v411
    %v414 = vmul.f32 %v408, %v411
    %v415 = vadd.f32 %v392, %v413
    %v416 = vadd.f32 %v393, %v414
    %v417 = vld [vmem:[#allocation5] sm:$0xff]
    %v418 = vld [vmem:[#allocation5 + $0x8] sm:$0xff]
    %v419 = vld [vmem:[#allocation5 + $0x10] sm:$0xff]
    %v420 = vld [vmem:[#allocation5 + $0x18] sm:$0xff]
    %v421 = vld [vmem:[#allocation5 + $0x20] sm:$0xff]
    %v422 = vld [vmem:[#allocation5 + $0x28] sm:$0xff]
    %v423 = vld [vmem:[#allocation5 + $0x30] sm:$0xff]
    %v424 = vld [vmem:[#allocation5 + $0x38] sm:$0xff]
    %v425 = vld [vmem:[#allocation5 + $0x40] sm:$0xff]
    %v426 = vld [vmem:[#allocation5 + $0x48] sm:$0xff]
    %v427 = vld [vmem:[#allocation5 + $0x50] sm:$0xff]
    %v428 = vld [vmem:[#allocation5 + $0x58] sm:$0xff]
    %v429 = vld [vmem:[#allocation5 + $0x60] sm:$0xff]
    %v430 = vld [vmem:[#allocation5 + $0x68] sm:$0xff]
    %v431 = vld [vmem:[#allocation5 + $0x70] sm:$0xff]
    %v432 = vld [vmem:[#allocation5 + $0x78] sm:$0xff]
    %v434 = vsel %vm332, %v415, 0
    %v437 = vsel %vm332, %v416, 0
    %439 = vmatpush.msra.mxu0 0.0
    %440 = vmatpush.msra.mxu0 0.0
    %441 = vmatpush.msra.mxu0 0.0
    %442 = vmatpush.msra.mxu0 0.0
    %443 = vmatpush.msra.mxu0 0.0
    %444 = vmatpush.msra.mxu0 0.0
    %445 = vmatpush.msra.mxu0 0.0
    %446 = vmatpush.msra.mxu0 0.0
    %447 = vmatpush.msra.mxu0 %v431
    %448 = vmatpush.msra.mxu0 %v429
    %449 = vmatpush.msra.mxu0 %v427
    %450 = vmatpush.msra.mxu0 %v425
    %451 = vmatpush.msra.mxu0 %v423
    %452 = vmatpush.msra.mxu0 %v421
    %453 = vmatpush.msra.mxu0 %v419
    %454 = vmatpush.msra.mxu0 %v417
    %455 = vmatmul.f32.gmra.mxu0 %v434
    %v456 = vpop.f32.mrf.mxu0
    %v457 = vadd.f32 0.0, %v456
    %458 = vmatmul.f32.gmra.mxu0 %v437
    %v459 = vpop.f32.mrf.mxu0
    %v460 = vadd.f32 0.0, %v459
    %461 = vdwg.mxu0
    %462 = vmatpush.msra.mxu0 0.0
    %463 = vmatpush.msra.mxu0 0.0
    %464 = vmatpush.msra.mxu0 0.0
    %465 = vmatpush.msra.mxu0 0.0
    %466 = vmatpush.msra.mxu0 0.0
    %467 = vmatpush.msra.mxu0 0.0
    %468 = vmatpush.msra.mxu0 0.0
    %469 = vmatpush.msra.mxu0 0.0
    %470 = vmatpush.msra.mxu0 %v432
    %471 = vmatpush.msra.mxu0 %v430
    %472 = vmatpush.msra.mxu0 %v428
    %473 = vmatpush.msra.mxu0 %v426
    %474 = vmatpush.msra.mxu0 %v424
    %475 = vmatpush.msra.mxu0 %v422
    %476 = vmatpush.msra.mxu0 %v420
    %477 = vmatpush.msra.mxu0 %v418
    %478 = vmatmul.f32.gmra.mxu0 %v434
    %v479 = vpop.f32.mrf.mxu0
    %v480 = vadd.f32 0.0, %v479
    %481 = vmatmul.f32.gmra.mxu0 %v437
    %v482 = vpop.f32.mrf.mxu0
    %v483 = vadd.f32 0.0, %v482
    %484 = vdwg.mxu0
    %v485 = vtanh.pop %v457
    %v486 = vtanh.pop %v480
    %v487 = vtanh.pop %v460
    %v488 = vtanh.pop %v483
    %v489 = vld [vmem:[#allocation7] sm:$0xff]
    %v490 = vld [vmem:[#allocation7 + $0x8] sm:$0xff]
    %v491 = vld [vmem:[#allocation7 + $0x10] sm:$0xff]
    %v492 = vld [vmem:[#allocation7 + $0x18] sm:$0xff]
    %v493 = vld [vmem:[#allocation7 + $0x20] sm:$0xff]
    %v494 = vld [vmem:[#allocation7 + $0x28] sm:$0xff]
    %v495 = vld [vmem:[#allocation7 + $0x30] sm:$0xff]
    %v496 = vld [vmem:[#allocation7 + $0x38] sm:$0xff]
    %v497 = vld [vmem:[#allocation7 + $0x40] sm:$0xff]
    %v498 = vld [vmem:[#allocation7 + $0x48] sm:$0xff]
    %v499 = vld [vmem:[#allocation7 + $0x50] sm:$0xff]
    %v500 = vld [vmem:[#allocation7 + $0x58] sm:$0xff]
    %v501 = vld [vmem:[#allocation7 + $0x60] sm:$0xff]
    %v502 = vld [vmem:[#allocation7 + $0x68] sm:$0xff]
    %v503 = vld [vmem:[#allocation7 + $0x70] sm:$0xff]
    %v504 = vld [vmem:[#allocation7 + $0x78] sm:$0xff]
    %v505 = vld [vmem:[#allocation7 + $0x80] sm:$0xff]
    %v506 = vld [vmem:[#allocation7 + $0x88] sm:$0xff]
    %v507 = vld [vmem:[#allocation7 + $0x90] sm:$0xff]
    %v508 = vld [vmem:[#allocation7 + $0x98] sm:$0xff]
    %v509 = vld [vmem:[#allocation7 + $0xa0] sm:$0xff]
    %v510 = vld [vmem:[#allocation7 + $0xa8] sm:$0xff]
    %v511 = vld [vmem:[#allocation7 + $0xb0] sm:$0xff]
    %v512 = vld [vmem:[#allocation7 + $0xb8] sm:$0xff]
    %v513 = vld [vmem:[#allocation7 + $0xc0] sm:$0xff]
    %v514 = vld [vmem:[#allocation7 + $0xc8] sm:$0xff]
    %v515 = vld [vmem:[#allocation7 + $0xd0] sm:$0xff]
    %v516 = vld [vmem:[#allocation7 + $0xd8] sm:$0xff]
    %v517 = vld [vmem:[#allocation7 + $0xe0] sm:$0xff]
    %v518 = vld [vmem:[#allocation7 + $0xe8] sm:$0xff]
    %v519 = vld [vmem:[#allocation7 + $0xf0] sm:$0xff]
    %v520 = vld [vmem:[#allocation7 + $0xf8] sm:$0xff]
    %v521 = vld [vmem:[#allocation7 + $0x100] sm:$0xff]
    %v522 = vld [vmem:[#allocation7 + $0x108] sm:$0xff]
    %v523 = vld [vmem:[#allocation7 + $0x110] sm:$0xff]
    %v524 = vld [vmem:[#allocation7 + $0x118] sm:$0xff]
    %v525 = vld [vmem:[#allocation7 + $0x120] sm:$0xff]
    %v526 = vld [vmem:[#allocation7 + $0x128] sm:$0xff]
    %v527 = vld [vmem:[#allocation7 + $0x130] sm:$0xff]
    %v528 = vld [vmem:[#allocation7 + $0x138] sm:$0xff]
    %v529 = vld [vmem:[#allocation7 + $0x140] sm:$0xff]
    %v530 = vld [vmem:[#allocation7 + $0x148] sm:$0xff]
    %v531 = vld [vmem:[#allocation7 + $0x150] sm:$0xff]
    %v532 = vld [vmem:[#allocation7 + $0x158] sm:$0xff]
    %v533 = vld [vmem:[#allocation7 + $0x160] sm:$0xff]
    %v534 = vld [vmem:[#allocation7 + $0x168] sm:$0xff]
    %v535 = vld [vmem:[#allocation7 + $0x170] sm:$0xff]
    %v536 = vld [vmem:[#allocation7 + $0x178] sm:$0xff]
    %v537 = vld [vmem:[#allocation7 + $0x180] sm:$0xff]
    %v538 = vld [vmem:[#allocation7 + $0x188] sm:$0xff]
    %v539 = vld [vmem:[#allocation7 + $0x190] sm:$0xff]
    %v540 = vld [vmem:[#allocation7 + $0x198] sm:$0xff]
    %v541 = vld [vmem:[#allocation7 + $0x1a0] sm:$0xff]
    %v542 = vld [vmem:[#allocation7 + $0x1a8] sm:$0xff]
    %v543 = vld [vmem:[#allocation7 + $0x1b0] sm:$0xff]
    %v544 = vld [vmem:[#allocation7 + $0x1b8] sm:$0xff]
    %v545 = vld [vmem:[#allocation7 + $0x1c0] sm:$0xff]
    %v546 = vld [vmem:[#allocation7 + $0x1c8] sm:$0xff]
    %v547 = vld [vmem:[#allocation7 + $0x1d0] sm:$0xff]
    %v548 = vld [vmem:[#allocation7 + $0x1d8] sm:$0xff]
    %v549 = vld [vmem:[%s19] sm:$0x7]
    %v551 = vperm.slane %v549, 0
    %v552 = vperm.slane %v549, 1
    %v553 = vperm.slane %v549, 2
    %vm557 = vcmask 261120
    %v559 = vsel %vm557, %v486, 0
    %v562 = vsel %vm557, %v488, 0
    %564 = vmatpush.msra.mxu0 %v534
    %565 = vmatpush.msra.mxu0 %v531
    %566 = vmatpush.msra.mxu0 %v528
    %567 = vmatpush.msra.mxu0 %v525
    %568 = vmatpush.msra.mxu0 %v522
    %569 = vmatpush.msra.mxu0 %v519
    %570 = vmatpush.msra.mxu0 %v516
    %571 = vmatpush.msra.mxu0 %v513
    %572 = vmatpush.msra.mxu0 %v510
    %573 = vmatpush.msra.mxu0 %v507
    %574 = vmatpush.msra.mxu0 %v504
    %575 = vmatpush.msra.mxu0 %v501
    %576 = vmatpush.msra.mxu0 %v498
    %577 = vmatpush.msra.mxu0 %v495
    %578 = vmatpush.msra.mxu0 %v492
    %579 = vmatpush.msra.mxu0 %v489
    %580 = vmatmul.f32.gmra.mxu0 %v485
    %v581 = vpop.f32.mrf.mxu0
    %v582 = vadd.f32 %v551, %v581
    %583 = vmatmul.f32.gmra.mxu0 %v487
    %v584 = vpop.f32.mrf.mxu0
    %v585 = vadd.f32 %v551, %v584
    %586 = vdwg.mxu0
    %587 = vmatpush.msra.mxu0 0.0
    %588 = vmatpush.msra.mxu0 0.0
    %589 = vmatpush.msra.mxu0 0.0
    %590 = vmatpush.msra.mxu0 0.0
    %591 = vmatpush.msra.mxu0 0.0
    %592 = vmatpush.msra.mxu0 0.0
    %593 = vmatpush.msra.mxu0 0.0
    %594 = vmatpush.msra.mxu0 0.0
    %595 = vmatpush.msra.mxu0 0.0
    %596 = vmatpush.msra.mxu0 0.0
    %597 = vmatpush.msra.mxu0 0.0
    %598 = vmatpush.msra.mxu0 0.0
    %599 = vmatpush.msra.mxu0 %v546
    %600 = vmatpush.msra.mxu0 %v543
    %601 = vmatpush.msra.mxu0 %v540
    %602 = vmatpush.msra.mxu0 %v537
    %603 = vmatmul.f32.gmra.mxu0 %v559
    %v604 = vpop.f32.mrf.mxu0
    %v605 = vadd.f32 %v582, %v604
    %606 = vmatmul.f32.gmra.mxu0 %v562
    %v607 = vpop.f32.mrf.mxu0
    %v608 = vadd.f32 %v585, %v607
    %609 = vdwg.mxu0
    %610 = vmatpush.msra.mxu0 %v535
    %611 = vmatpush.msra.mxu0 %v532
    %612 = vmatpush.msra.mxu0 %v529
    %613 = vmatpush.msra.mxu0 %v526
    %614 = vmatpush.msra.mxu0 %v523
    %615 = vmatpush.msra.mxu0 %v520
    %616 = vmatpush.msra.mxu0 %v517
    %617 = vmatpush.msra.mxu0 %v514
    %618 = vmatpush.msra.mxu0 %v511
    %619 = vmatpush.msra.mxu0 %v508
    %620 = vmatpush.msra.mxu0 %v505
    %621 = vmatpush.msra.mxu0 %v502
    %622 = vmatpush.msra.mxu0 %v499
    %623 = vmatpush.msra.mxu0 %v496
    %624 = vmatpush.msra.mxu0 %v493
    %625 = vmatpush.msra.mxu0 %v490
    %626 = vmatmul.f32.gmra.mxu0 %v485
    %v627 = vpop.f32.mrf.mxu0
    %v628 = vadd.f32 %v552, %v627
    %629 = vmatmul.f32.gmra.mxu0 %v487
    %v630 = vpop.f32.mrf.mxu0
    %v631 = vadd.f32 %v552, %v630
    %632 = vdwg.mxu0
    %633 = vmatpush.msra.mxu0 0.0
    %634 = vmatpush.msra.mxu0 0.0
    %635 = vmatpush.msra.mxu0 0.0
    %636 = vmatpush.msra.mxu0 0.0
    %637 = vmatpush.msra.mxu0 0.0
    %638 = vmatpush.msra.mxu0 0.0
    %639 = vmatpush.msra.mxu0 0.0
    %640 = vmatpush.msra.mxu0 0.0
    %641 = vmatpush.msra.mxu0 0.0
    %642 = vmatpush.msra.mxu0 0.0
    %643 = vmatpush.msra.mxu0 0.0
    %644 = vmatpush.msra.mxu0 0.0
    %645 = vmatpush.msra.mxu0 %v547
    %646 = vmatpush.msra.mxu0 %v544
    %647 = vmatpush.msra.mxu0 %v541
    %648 = vmatpush.msra.mxu0 %v538
    %649 = vmatmul.f32.gmra.mxu0 %v559
    %v650 = vpop.f32.mrf.mxu0
    %v651 = vadd.f32 %v628, %v650
    %652 = vmatmul.f32.gmra.mxu0 %v562
    %v653 = vpop.f32.mrf.mxu0
    %v654 = vadd.f32 %v631, %v653
    %655 = vdwg.mxu0
    %656 = vmatpush.msra.mxu0 %v536
    %657 = vmatpush.msra.mxu0 %v533
    %658 = vmatpush.msra.mxu0 %v530
    %659 = vmatpush.msra.mxu0 %v527
    %660 = vmatpush.msra.mxu0 %v524
    %661 = vmatpush.msra.mxu0 %v521
    %662 = vmatpush.msra.mxu0 %v518
    %663 = vmatpush.msra.mxu0 %v515
    %664 = vmatpush.msra.mxu0 %v512
    %665 = vmatpush.msra.mxu0 %v509
    %666 = vmatpush.msra.mxu0 %v506
    %667 = vmatpush.msra.mxu0 %v503
    %668 = vmatpush.msra.mxu0 %v500
    %669 = vmatpush.msra.mxu0 %v497
    %670 = vmatpush.msra.mxu0 %v494
    %671 = vmatpush.msra.mxu0 %v491
    %672 = vmatmul.f32.gmra.mxu0 %v485
    %v673 = vpop.f32.mrf.mxu0
    %v674 = vadd.f32 %v553, %v673
    %675 = vmatmul.f32.gmra.mxu0 %v487
    %v676 = vpop.f32.mrf.mxu0
    %v677 = vadd.f32 %v553, %v676
    %678 = vdwg.mxu0
    %679 = vmatpush.msra.mxu0 0.0
    %680 = vmatpush.msra.mxu0 0.0
    %681 = vmatpush.msra.mxu0 0.0
    %682 = vmatpush.msra.mxu0 0.0
    %683 = vmatpush.msra.mxu0 0.0
    %684 = vmatpush.msra.mxu0 0.0
    %685 = vmatpush.msra.mxu0 0.0
    %686 = vmatpush.msra.mxu0 0.0
    %687 = vmatpush.msra.mxu0 0.0
    %688 = vmatpush.msra.mxu0 0.0
    %689 = vmatpush.msra.mxu0 0.0
    %690 = vmatpush.msra.mxu0 0.0
    %691 = vmatpush.msra.mxu0 %v548
    %692 = vmatpush.msra.mxu0 %v545
    %693 = vmatpush.msra.mxu0 %v542
    %694 = vmatpush.msra.mxu0 %v539
    %695 = vmatmul.f32.gmra.mxu0 %v559
    %v696 = vpop.f32.mrf.mxu0
    %v697 = vadd.f32 %v674, %v696
    %698 = vmatmul.f32.gmra.mxu0 %v562
    %v699 = vpop.f32.mrf.mxu0
    %v700 = vadd.f32 %v677, %v699
    %701 = vdwg.mxu0
    %702 = vrot.lane.b32.xlu0 %v392, 64
    %v703 = vpop.permute.xlu0 %702
    %704 = vrot.lane.b32.xlu0 %v393, 64
    %v705 = vpop.permute.xlu0 %704
    %v708 = vsel %vm332, %v392, %v703
    %v709 = vsel %vm332, %v393, %v705
    %712 = vrot.lane.b32.xlu0 %v407, 64
    %v713 = vpop.permute.xlu0 %712
    %714 = vrot.lane.b32.xlu0 %v408, 64
    %v715 = vpop.permute.xlu0 %714
    %v718 = vsel %vm332, %v407, %v713
    %v719 = vsel %vm332, %v408, %v715
    %v720 = vmul.f32 %v718, %v605
    %v721 = vmul.f32 %v718, %v651
    %v722 = vmul.f32 %v407, %v697
    %v723 = vmul.f32 %v719, %v608
    %v724 = vmul.f32 %v719, %v654
    %v725 = vmul.f32 %v408, %v700
    %v726 = vadd.f32 %v708, %v720
    %v727 = vadd.f32 %v708, %v721
    %v728 = vadd.f32 %v392, %v722
    %v729 = vadd.f32 %v709, %v723
    %v730 = vadd.f32 %v709, %v724
    %v731 = vadd.f32 %v393, %v725
    %v732 = vld [vmem:[%s21] sm:$0xff]
    %v733 = vld [vmem:[%s21 + $0x8] sm:$0xff]
    %v734 = vld [vmem:[%s21 + $0x10] sm:$0xff]
    %v735 = vld [vmem:[%s21 + $0x18] sm:$0xff]
    %v736 = vld [vmem:[%s21 + $0x20] sm:$0xff]
    %v737 = vld [vmem:[%s21 + $0x28] sm:$0xff]
    %v738 = vld [vmem:[%s21 + $0x30] sm:$0xff]
    %v739 = vld [vmem:[%s21 + $0x38] sm:$0xff]
    %v740 = vld [vmem:[%s21 + $0x40] sm:$0xff]
    %v741 = vld [vmem:[%s21 + $0x48] sm:$0xff]
    %v742 = vld [vmem:[%s21 + $0x50] sm:$0xff]
    %v743 = vld [vmem:[%s21 + $0x58] sm:$0xff]
    %v744 = vld [vmem:[%s21 + $0x60] sm:$0xff]
    %v745 = vld [vmem:[%s21 + $0x68] sm:$0xff]
    %v746 = vld [vmem:[%s21 + $0x70] sm:$0xff]
    %v747 = vld [vmem:[%s21 + $0x78] sm:$0xff]
    %v748 = vld [vmem:[%s21 + $0x80] sm:$0xff]
    %v749 = vld [vmem:[%s21 + $0x88] sm:$0xff]
    %v750 = vld [vmem:[%s21 + $0x90] sm:$0xff]
    %v751 = vld [vmem:[%s21 + $0x98] sm:$0xff]
    %v752 = vld [vmem:[%s21 + $0xa0] sm:$0xff]
    %v753 = vld [vmem:[%s21 + $0xa8] sm:$0xff]
    %v754 = vld [vmem:[%s21 + $0xb0] sm:$0xff]
    %v755 = vld [vmem:[%s21 + $0xb8] sm:$0xff]
    %v756 = vld [vmem:[%s21 + $0xc0] sm:$0xff]
    %v757 = vld [vmem:[%s21 + $0xc8] sm:$0xff]
    %v758 = vld [vmem:[%s21 + $0xd0] sm:$0xff]
    %v759 = vld [vmem:[%s21 + $0xd8] sm:$0xff]
    %v760 = vld [vmem:[%s21 + $0xe0] sm:$0xff]
    %v761 = vld [vmem:[%s21 + $0xe8] sm:$0xff]
    %v762 = vld [vmem:[%s21 + $0xf0] sm:$0xff]
    %v763 = vld [vmem:[%s21 + $0xf8] sm:$0xff]
    %v764 = vld [vmem:[%s21 + $0x100] sm:$0xff]
    %v765 = vld [vmem:[%s21 + $0x108] sm:$0xff]
    %v766 = vld [vmem:[%s21 + $0x110] sm:$0xff]
    %v767 = vld [vmem:[%s21 + $0x118] sm:$0xff]
    %v768 = vld [vmem:[%s21 + $0x120] sm:$0xff]
    %v769 = vld [vmem:[%s21 + $0x128] sm:$0xff]
    %v770 = vld [vmem:[%s21 + $0x130] sm:$0xff]
    %v771 = vld [vmem:[%s21 + $0x138] sm:$0xff]
    %v772 = vld [vmem:[%s21 + $0x140] sm:$0xff]
    %v773 = vld [vmem:[%s21 + $0x148] sm:$0xff]
    %v774 = vld [vmem:[%s21 + $0x150] sm:$0xff]
    %v775 = vld [vmem:[%s21 + $0x158] sm:$0xff]
    %v776 = vld [vmem:[%s21 + $0x160] sm:$0xff]
    %v777 = vld [vmem:[%s21 + $0x168] sm:$0xff]
    %v778 = vld [vmem:[%s21 + $0x170] sm:$0xff]
    %v779 = vld [vmem:[%s21 + $0x178] sm:$0xff]
    %v780 = vld [vmem:[%s21 + $0x180] sm:$0xff]
    %v781 = vld [vmem:[%s21 + $0x188] sm:$0xff]
    %v782 = vld [vmem:[%s21 + $0x190] sm:$0xff]
    %v783 = vld [vmem:[%s21 + $0x198] sm:$0xff]
    %v784 = vld [vmem:[%s21 + $0x1a0] sm:$0xff]
    %v785 = vld [vmem:[%s21 + $0x1a8] sm:$0xff]
    %v786 = vld [vmem:[%s21 + $0x1b0] sm:$0xff]
    %v787 = vld [vmem:[%s21 + $0x1b8] sm:$0xff]
    %v788 = vld [vmem:[%s21 + $0x1c0] sm:$0xff]
    %v789 = vld [vmem:[%s21 + $0x1c8] sm:$0xff]
    %v790 = vld [vmem:[%s21 + $0x1d0] sm:$0xff]
    %v791 = vld [vmem:[%s21 + $0x1d8] sm:$0xff]
    %v792 = vld [vmem:[%s21 + $0x1e0] sm:$0xff]
    %v793 = vld [vmem:[%s21 + $0x1e8] sm:$0xff]
    %v794 = vld [vmem:[%s21 + $0x1f0] sm:$0xff]
    %v795 = vld [vmem:[%s21 + $0x1f8] sm:$0xff]
    %796 = vmatpush.msra.mxu0 %v762
    %797 = vmatpush.msra.mxu0 %v760
    %798 = vmatpush.msra.mxu0 %v758
    %799 = vmatpush.msra.mxu0 %v756
    %800 = vmatpush.msra.mxu0 %v754
    %801 = vmatpush.msra.mxu0 %v752
    %802 = vmatpush.msra.mxu0 %v750
    %803 = vmatpush.msra.mxu0 %v748
    %804 = vmatpush.msra.mxu0 %v746
    %805 = vmatpush.msra.mxu0 %v744
    %806 = vmatpush.msra.mxu0 %v742
    %807 = vmatpush.msra.mxu0 %v740
    %808 = vmatpush.msra.mxu0 %v738
    %809 = vmatpush.msra.mxu0 %v736
    %810 = vmatpush.msra.mxu0 %v734
    %811 = vmatpush.msra.mxu0 %v732
    %812 = vmatmul.f32.gmra.mxu0 %v726
    %v813 = vpop.f32.mrf.mxu0
    %v814 = vadd.f32 0.0, %v813
    %815 = vmatmul.f32.gmra.mxu0 %v729
    %v816 = vpop.f32.mrf.mxu0
    %v817 = vadd.f32 0.0, %v816
    %818 = vdwg.mxu0
    %819 = vmatpush.msra.mxu0 %v794
    %820 = vmatpush.msra.mxu0 %v792
    %821 = vmatpush.msra.mxu0 %v790
    %822 = vmatpush.msra.mxu0 %v788
    %823 = vmatpush.msra.mxu0 %v786
    %824 = vmatpush.msra.mxu0 %v784
    %825 = vmatpush.msra.mxu0 %v782
    %826 = vmatpush.msra.mxu0 %v780
    %827 = vmatpush.msra.mxu0 %v778
    %828 = vmatpush.msra.mxu0 %v776
    %829 = vmatpush.msra.mxu0 %v774
    %830 = vmatpush.msra.mxu0 %v772
    %831 = vmatpush.msra.mxu0 %v770
    %832 = vmatpush.msra.mxu0 %v768
    %833 = vmatpush.msra.mxu0 %v766
    %834 = vmatpush.msra.mxu0 %v764
    %835 = vmatmul.f32.gmra.mxu0 %v727
    %v836 = vpop.f32.mrf.mxu0
    %v837 = vadd.f32 %v814, %v836
    %838 = vmatmul.f32.gmra.mxu0 %v730
    %v839 = vpop.f32.mrf.mxu0
    %v840 = vadd.f32 %v817, %v839
    %841 = vdwg.mxu0
    %842 = vmatpush.msra.mxu0 %v763
    %843 = vmatpush.msra.mxu0 %v761
    %844 = vmatpush.msra.mxu0 %v759
    %845 = vmatpush.msra.mxu0 %v757
    %846 = vmatpush.msra.mxu0 %v755
    %847 = vmatpush.msra.mxu0 %v753
    %848 = vmatpush.msra.mxu0 %v751
    %849 = vmatpush.msra.mxu0 %v749
    %850 = vmatpush.msra.mxu0 %v747
    %851 = vmatpush.msra.mxu0 %v745
    %852 = vmatpush.msra.mxu0 %v743
    %853 = vmatpush.msra.mxu0 %v741
    %854 = vmatpush.msra.mxu0 %v739
    %855 = vmatpush.msra.mxu0 %v737
    %856 = vmatpush.msra.mxu0 %v735
    %857 = vmatpush.msra.mxu0 %v733
    %858 = vmatmul.f32.gmra.mxu0 %v726
    %v859 = vpop.f32.mrf.mxu0
    %v860 = vadd.f32 0.0, %v859
    %861 = vmatmul.f32.gmra.mxu0 %v729
    %v862 = vpop.f32.mrf.mxu0
    %v863 = vadd.f32 0.0, %v862
    %864 = vdwg.mxu0
    %865 = vmatpush.msra.mxu0 %v795
    %866 = vmatpush.msra.mxu0 %v793
    %867 = vmatpush.msra.mxu0 %v791
    %868 = vmatpush.msra.mxu0 %v789
    %869 = vmatpush.msra.mxu0 %v787
    %870 = vmatpush.msra.mxu0 %v785
    %871 = vmatpush.msra.mxu0 %v783
    %872 = vmatpush.msra.mxu0 %v781
    %873 = vmatpush.msra.mxu0 %v779
    %874 = vmatpush.msra.mxu0 %v777
    %875 = vmatpush.msra.mxu0 %v775
    %876 = vmatpush.msra.mxu0 %v773
    %877 = vmatpush.msra.mxu0 %v771
    %878 = vmatpush.msra.mxu0 %v769
    %879 = vmatpush.msra.mxu0 %v767
    %880 = vmatpush.msra.mxu0 %v765
    %881 = vmatmul.f32.gmra.mxu0 %v727
    %v882 = vpop.f32.mrf.mxu0
    %v883 = vadd.f32 %v860, %v882
    %884 = vmatmul.f32.gmra.mxu0 %v730
    %v885 = vpop.f32.mrf.mxu0
    %v886 = vadd.f32 %v863, %v885
    %887 = vdwg.mxu0
    %v888 = vxor.u32 %v883, 2147483648
    %v889 = vxor.u32 %v886, 2147483648
    %v890 = vmul.f32 %v888, 1.442695
    %v891 = vpow.pop %v890
    %v892 = vmul.f32 %v889, 1.442695
    %v893 = vpow.pop %v892
    %v894 = vadd.f32 %v891, 1.0
    %v895 = vadd.f32 %v893, 1.0
    %v896 = vrcp.pop %v894
    %v897 = vmul.f32 %v894, %v896
    %v898 = vsub.f32 1.0, %v897
    %v899 = vmul.f32 %v896, %v898
    %v900 = vadd.f32 %v896, %v899
    %vm901 = vweird.f32 %v894
    %vm902 = vweird.f32 %v896
    %vm903 = vmor %vm901, %vm902
    %v904 = vsel %vm903, %v896, %v900
    %v905 = vand.u32 2147483647, %v894
    %vm906 = vcmp.eq.f32.partialorder %v905, 8.507059e+37
    %v907 = vand.u32 %v894, 2147483648
    %v908 = vor.u32 1.1754944e-38, %v907
    %v909 = vsel %vm906, %v908, %v904
    %v910 = vmul.f32 1.0, %v909
    %v911 = vrcp.pop %v895
    %v912 = vmul.f32 %v895, %v911
    %v913 = vsub.f32 1.0, %v912
    %v914 = vmul.f32 %v911, %v913
    %v915 = vadd.f32 %v911, %v914
    %vm916 = vweird.f32 %v895
    %vm917 = vweird.f32 %v911
    %vm918 = vmor %vm916, %vm917
    %v919 = vsel %vm918, %v911, %v915
    %v920 = vand.u32 2147483647, %v895
    %vm921 = vcmp.eq.f32.partialorder %v920, 8.507059e+37
    %v922 = vand.u32 %v895, 2147483648
    %v923 = vor.u32 1.1754944e-38, %v922
    %v924 = vsel %vm921, %v923, %v919
    %v925 = vmul.f32 1.0, %v924
    %v926 = vmul.f32 %v883, %v910
    %v927 = vmul.f32 %v886, %v925
    %v928 = vld [vmem:[%s25] sm:$0xff]
    %v929 = vld [vmem:[%s25 + $0x8] sm:$0xff]
    %v930 = vld [vmem:[%s25 + $0x10] sm:$0xff]
    %v931 = vld [vmem:[%s25 + $0x18] sm:$0xff]
    %v932 = vld [vmem:[%s25 + $0x20] sm:$0xff]
    %v933 = vld [vmem:[%s25 + $0x28] sm:$0xff]
    %v934 = vld [vmem:[%s25 + $0x30] sm:$0xff]
    %v935 = vld [vmem:[%s25 + $0x38] sm:$0xff]
    %v937 = vsel %vm332, %v728, 0
    %v940 = vsel %vm332, %v731, 0
    %942 = vmatpush.msra.mxu0 0.0
    %943 = vmatpush.msra.mxu0 0.0
    %944 = vmatpush.msra.mxu0 0.0
    %945 = vmatpush.msra.mxu0 0.0
    %946 = vmatpush.msra.mxu0 0.0
    %947 = vmatpush.msra.mxu0 0.0
    %948 = vmatpush.msra.mxu0 0.0
    %949 = vmatpush.msra.mxu0 0.0
    %950 = vmatpush.msra.mxu0 %v935
    %951 = vmatpush.msra.mxu0 %v934
    %952 = vmatpush.msra.mxu0 %v933
    %953 = vmatpush.msra.mxu0 %v932
    %954 = vmatpush.msra.mxu0 %v931
    %955 = vmatpush.msra.mxu0 %v930
    %956 = vmatpush.msra.mxu0 %v929
    %957 = vmatpush.msra.mxu0 %v928
    %958 = vmatmul.f32.gmra.mxu0 %v937
    %v959 = vpop.f32.mrf.mxu0
    %v960 = vadd.f32 0.0, %v959
    %961 = vmatmul.f32.gmra.mxu0 %v940
    %v962 = vpop.f32.mrf.mxu0
    %v963 = vadd.f32 0.0, %v962
    %964 = vdwg.mxu0
    %v965 = vtanh.pop %v960
    %v966 = vtanh.pop %v963
    %v967 = vld [vmem:[#allocation8] sm:$0xff]
    %v968 = vld [vmem:[#allocation8 + $0x8] sm:$0xff]
    %v969 = vld [vmem:[#allocation8 + $0x10] sm:$0xff]
    %v970 = vld [vmem:[#allocation8 + $0x18] sm:$0xff]
    %v971 = vld [vmem:[#allocation8 + $0x20] sm:$0xff]
    %v972 = vld [vmem:[#allocation8 + $0x28] sm:$0xff]
    %v973 = vld [vmem:[#allocation8 + $0x30] sm:$0xff]
    %v974 = vld [vmem:[#allocation8 + $0x38] sm:$0xff]
    %v975 = vld [vmem:[%s23] sm:$0x1]
    %v977 = vperm.slane %v975, 0
    %v980 = vsel %vm332, %v965, 0
    %v983 = vsel %vm332, %v966, 0
    %985 = vmatpush.msra.mxu0 0.0
    %986 = vmatpush.msra.mxu0 0.0
    %987 = vmatpush.msra.mxu0 0.0
    %988 = vmatpush.msra.mxu0 0.0
    %989 = vmatpush.msra.mxu0 0.0
    %990 = vmatpush.msra.mxu0 0.0
    %991 = vmatpush.msra.mxu0 0.0
    %992 = vmatpush.msra.mxu0 0.0
    %993 = vmatpush.msra.mxu0 %v974
    %994 = vmatpush.msra.mxu0 %v973
    %995 = vmatpush.msra.mxu0 %v972
    %996 = vmatpush.msra.mxu0 %v971
    %997 = vmatpush.msra.mxu0 %v970
    %998 = vmatpush.msra.mxu0 %v969
    %999 = vmatpush.msra.mxu0 %v968
    %1000 = vmatpush.msra.mxu0 %v967
    %1001 = vmatmul.f32.gmra.mxu0 %v980
    %v1002 = vpop.f32.mrf.mxu0
    %v1003 = vadd.f32 %v977, %v1002
    %1004 = vmatmul.f32.gmra.mxu0 %v983
    %v1005 = vpop.f32.mrf.mxu0
    %v1006 = vadd.f32 %v977, %v1005
    %1007 = vdwg.mxu0
    %v1008 = vmul.f32 %v1003, 1.442695
    %v1009 = vpow.pop %v1008
    %v1010 = vmul.f32 %v1006, 1.442695
    %v1011 = vpow.pop %v1010
    %v1012 = vsub.f32 0.0, %v1009
    %v1013 = vsub.f32 0.0, %v1011
    %v1014 = vld [vmem:[%s29] sm:$0x1]
    %v1016 = vperm.slane %v1014, 0
    %v1018 = vmul.f32 %v883, %v1016
    %v1019 = vmul.f32 %v886, %v1016
    %v1020 = vmul.f32 %v1018, %v837
    %v1021 = vmul.f32 %v1019, %v840
    %v1023 = vsel %vm332, %v1020, 0
    %v1026 = vsel %vm332, %v1021, 0
    %1028 = vmatpush.msra.mxu0 0.0
    %1029 = vmatpush.msra.mxu0 0.0
    %1030 = vmatpush.msra.mxu0 0.0
    %1031 = vmatpush.msra.mxu0 0.0
    %1032 = vmatpush.msra.mxu0 0.0
    %1033 = vmatpush.msra.mxu0 0.0
    %1034 = vmatpush.msra.mxu0 0.0
    %1035 = vmatpush.msra.mxu0 0.0
    %1036 = vmatpush.msra.mxu0 %v329
    %1037 = vmatpush.msra.mxu0 %v328
    %1038 = vmatpush.msra.mxu0 %v327
    %1039 = vmatpush.msra.mxu0 %v326
    %1040 = vmatpush.msra.mxu0 %v325
    %1041 = vmatpush.msra.mxu0 %v324
    %1042 = vmatpush.msra.mxu0 %v323
    %1043 = vmatpush.msra.mxu0 %v322
    %1044 = vmatmul.f32.gmra.mxu0 %v1023
    %v1045 = vpop.f32.mrf.mxu0
    %v1046 = vadd.f32 0.0, %v1045
    %1047 = vmatmul.f32.gmra.mxu0 %v1026
    %v1048 = vpop.f32.mrf.mxu0
    %v1049 = vadd.f32 0.0, %v1048
    %1050 = vdwg.mxu0
    %1053 = vrot.lane.b32.xlu0 %v837, 64
    %v1054 = vpop.permute.xlu0 %1053
    %1055 = vrot.lane.b32.xlu0 %v840, 64
    %v1056 = vpop.permute.xlu0 %1055
    %v1059 = vmul.f32 %v1046, %v1054
    %v1060 = vmul.f32 %v1049, %v1056
    %v1061 = vld [vmem:[%s31] sm:$0xff]
    %v1062 = vld [vmem:[%s31 + $0x8] sm:$0xff]
    %vm1063 = vcmask 130048
    %v1065 = vsel %vm1063, %v1061, 0
    %v1068 = vsel %vm1063, %v1062, 0
    %1070 = vmatpush.msra.mxu0 0.0
    %1071 = vmatpush.msra.mxu0 0.0
    %1072 = vmatpush.msra.mxu0 0.0
    %1073 = vmatpush.msra.mxu0 0.0
    %1074 = vmatpush.msra.mxu0 0.0
    %1075 = vmatpush.msra.mxu0 0.0
    %1076 = vmatpush.msra.mxu0 0.0
    %1077 = vmatpush.msra.mxu0 0.0
    %1078 = vmatpush.msra.mxu0 0.0
    %1079 = vmatpush.msra.mxu0 0.0
    %1080 = vmatpush.msra.mxu0 0.0
    %1081 = vmatpush.msra.mxu0 0.0
    %1082 = vmatpush.msra.mxu0 0.0
    %1083 = vmatpush.msra.mxu0 0.0
    %1084 = vmatpush.msra.mxu0 %v1013
    %1085 = vmatpush.msra.mxu0 %v1012
    %1086 = vmatmul.f32.gmra.mxu0 %v1065
    %v1087 = vpop.f32.mrf.mxu0
    %v1088 = vadd.f32 0.0, %v1087
    %1089 = vmatmul.f32.gmra.mxu0 %v1068
    %v1090 = vpop.f32.mrf.mxu0
    %v1091 = vadd.f32 0.0, %v1090
    %1092 = vdwg.mxu0
    %v1093 = vadd.f32 %v1088, %v1012
    %v1094 = vadd.f32 %v1091, %v1013
    %v1095 = vld [vmem:[%s33] sm:$0xff]
    %v1096 = vld [vmem:[%s33 + $0x8] sm:$0xff]
    %v1098 = vsel %vm1063, %v1095, 0
    %v1101 = vsel %vm1063, %v1096, 0
    %1103 = vmatpush.msra.mxu0 0.0
    %1104 = vmatpush.msra.mxu0 0.0
    %1105 = vmatpush.msra.mxu0 0.0
    %1106 = vmatpush.msra.mxu0 0.0
    %1107 = vmatpush.msra.mxu0 0.0
    %1108 = vmatpush.msra.mxu0 0.0
    %1109 = vmatpush.msra.mxu0 0.0
    %1110 = vmatpush.msra.mxu0 0.0
    %1111 = vmatpush.msra.mxu0 0.0
    %1112 = vmatpush.msra.mxu0 0.0
    %1113 = vmatpush.msra.mxu0 0.0
    %1114 = vmatpush.msra.mxu0 0.0
    %1115 = vmatpush.msra.mxu0 0.0
    %1116 = vmatpush.msra.mxu0 0.0
    %1117 = vmatpush.msra.mxu0 %v1013
    %1118 = vmatpush.msra.mxu0 %v1012
    %1119 = vmatmul.f32.gmra.mxu0 %v1098
    %v1120 = vpop.f32.mrf.mxu0
    %v1121 = vadd.f32 0.0, %v1120
    %1122 = vmatmul.f32.gmra.mxu0 %v1101
    %v1123 = vpop.f32.mrf.mxu0
    %v1124 = vadd.f32 0.0, %v1123
    %1125 = vdwg.mxu0
    %v1126 = vmul.f32 %v1088, 1.442695
    %v1127 = vpow.pop %v1126
    %v1128 = vmul.f32 %v1091, 1.442695
    %v1129 = vpow.pop %v1128
    %v1130 = vmul.f32 %v883, %v1127
    %v1131 = vmul.f32 %v886, %v1129
    %v1132 = vsub.f32 0.0, %v1093
    %v1133 = vsub.f32 0.0, %v1094
    %v1134 = vmul.f32 %v1132, 1.442695
    %v1135 = vpow.pop %v1134
    %v1136 = vmul.f32 %v1133, 1.442695
    %v1137 = vpow.pop %v1136
    %v1138 = vmul.f32 %v837, %v1135
    %v1139 = vmul.f32 %v840, %v1137
    %v1140 = vsub.f32 %v1121, %v1093
    %v1141 = vsub.f32 %v1124, %v1094
    %v1142 = vmul.f32 %v1140, 1.442695
    %v1143 = vpow.pop %v1142
    %v1144 = vmul.f32 %v1141, 1.442695
    %v1145 = vpow.pop %v1144
    %v1146 = vmul.f32 %v837, %v1143
    %v1147 = vmul.f32 %v840, %v1145
    %v1148 = vld [vmem:[%s43] sm:$0xff]
    %v1149 = vld [vmem:[%s43 + $0x8] sm:$0xff]
    %v1150 = vld [vmem:[#allocation2] sm:$0xff]
    %v1151 = vld [vmem:[#allocation2 + $0x8] sm:$0xff]
    %v1152 = vld [vmem:[#allocation2 + $0x10] sm:$0xff]
    %v1153 = vld [vmem:[#allocation2 + $0x18] sm:$0xff]
    %v1154 = vld [vmem:[#allocation2 + $0x20] sm:$0xff]
    %v1155 = vld [vmem:[#allocation2 + $0x28] sm:$0xff]
    %v1156 = vld [vmem:[#allocation2 + $0x30] sm:$0xff]
    %v1157 = vld [vmem:[#allocation2 + $0x38] sm:$0xff]
    %v1159 = vsel %vm1063, %v1150, 0
    %v1162 = vsel %vm1063, %v1151, 0
    %v1165 = vsel %vm1063, %v1152, 0
    %v1168 = vsel %vm1063, %v1153, 0
    %v1171 = vsel %vm1063, %v1154, 0
    %v1174 = vsel %vm1063, %v1155, 0
    %v1177 = vsel %vm1063, %v1156, 0
    %v1180 = vsel %vm1063, %v1157, 0
    %1182 = vmatpush.msra.mxu0 0.0
    %1183 = vmatpush.msra.mxu0 0.0
    %1184 = vmatpush.msra.mxu0 0.0
    %1185 = vmatpush.msra.mxu0 0.0
    %1186 = vmatpush.msra.mxu0 0.0
    %1187 = vmatpush.msra.mxu0 0.0
    %1188 = vmatpush.msra.mxu0 0.0
    %1189 = vmatpush.msra.mxu0 0.0
    %1190 = vmatpush.msra.mxu0 0.0
    %1191 = vmatpush.msra.mxu0 0.0
    %1192 = vmatpush.msra.mxu0 0.0
    %1193 = vmatpush.msra.mxu0 0.0
    %1194 = vmatpush.msra.mxu0 0.0
    %1195 = vmatpush.msra.mxu0 0.0
    %1196 = vmatpush.msra.mxu0 %v1149
    %1197 = vmatpush.msra.mxu0 %v1148
    %1198 = vmatmul.f32.gmra.mxu0 %v1159
    %v1199 = vpop.f32.mrf.mxu0
    %v1200 = vadd.f32 0.0, %v1199
    %1201 = vmatmul.f32.gmra.mxu0 %v1162
    %v1202 = vpop.f32.mrf.mxu0
    %v1203 = vadd.f32 0.0, %v1202
    %1204 = vmatmul.f32.gmra.mxu0 %v1165
    %v1205 = vpop.f32.mrf.mxu0
    %v1206 = vadd.f32 0.0, %v1205
    %1207 = vmatmul.f32.gmra.mxu0 %v1168
    %v1208 = vpop.f32.mrf.mxu0
    %v1209 = vadd.f32 0.0, %v1208
    %1210 = vmatmul.f32.gmra.mxu0 %v1171
    %v1211 = vpop.f32.mrf.mxu0
    %v1212 = vadd.f32 0.0, %v1211
    %1213 = vmatmul.f32.gmra.mxu0 %v1174
    %v1214 = vpop.f32.mrf.mxu0
    %v1215 = vadd.f32 0.0, %v1214
    %1216 = vmatmul.f32.gmra.mxu0 %v1177
    %v1217 = vpop.f32.mrf.mxu0
    %v1218 = vadd.f32 0.0, %v1217
    %1219 = vmatmul.f32.gmra.mxu0 %v1180
    %v1220 = vpop.f32.mrf.mxu0
    %v1221 = vadd.f32 0.0, %v1220
    %1222 = vdwg.mxu0
    %v1223 = vmul.f32 %v1200, %v322
    %v1224 = vmul.f32 %v1203, %v323
    %v1225 = vmul.f32 %v1206, %v324
    %v1226 = vmul.f32 %v1209, %v325
    %v1227 = vmul.f32 %v1212, %v326
    %v1228 = vmul.f32 %v1215, %v327
    %v1229 = vmul.f32 %v1218, %v328
    %v1230 = vmul.f32 %v1221, %v329
    %v1232 = vsel %vm332, %v1130, 0
    %1234 = vmatpush.msra.mxu0 0.0
    %1235 = vmatpush.msra.mxu0 0.0
    %1236 = vmatpush.msra.mxu0 0.0
    %1237 = vmatpush.msra.mxu0 0.0
    %1238 = vmatpush.msra.mxu0 0.0
    %1239 = vmatpush.msra.mxu0 0.0
    %1240 = vmatpush.msra.mxu0 0.0
    %1241 = vmatpush.msra.mxu0 0.0
    %1242 = vmatpush.msra.mxu0 %v1230
    %1243 = vmatpush.msra.mxu0 %v1229
    %1244 = vmatpush.msra.mxu0 %v1228
    %1245 = vmatpush.msra.mxu0 %v1227
    %1246 = vmatpush.msra.mxu0 %v1226
    %1247 = vmatpush.msra.mxu0 %v1225
    %1248 = vmatpush.msra.mxu0 %v1224
    %1249 = vmatpush.msra.mxu0 %v1223
    %1250 = vmatmul.f32.gmra.mxu0 %v1232
    %v1251 = vpop.f32.mrf.mxu0
    %v1252 = vadd.f32 0.0, %v1251
    %1253 = vdwg.mxu0
    %1254 = vxpose.xlu0.b32.start [1/16] %v1146, 128
    %1255 = vxpose.xlu0.b32.cont [2/16] 0.0, 128
    %1256 = vxpose.xlu0.b32.cont [3/16] 0.0, 128
    %1257 = vxpose.xlu0.b32.cont [4/16] 0.0, 128
    %1258 = vxpose.xlu0.b32.cont [5/16] 0.0, 128
    %1259 = vxpose.xlu0.b32.cont [6/16] 0.0, 128
    %1260 = vxpose.xlu0.b32.cont [7/16] 0.0, 128
    %1261 = vxpose.xlu0.b32.cont [8/16] 0.0, 128
    %1262 = vxpose.xlu0.b32.cont [9/16] 0.0, 128
    %1263 = vxpose.xlu0.b32.cont [10/16] 0.0, 128
    %1264 = vxpose.xlu0.b32.cont [11/16] 0.0, 128
    %1265 = vxpose.xlu0.b32.cont [12/16] 0.0, 128
    %1266 = vxpose.xlu0.b32.cont [13/16] 0.0, 128
    %1267 = vxpose.xlu0.b32.cont [14/16] 0.0, 128
    %1268 = vxpose.xlu0.b32.cont [15/16] 0.0, 128
    %1269 = vxpose.xlu0.b32.end [16/16] 0.0, 128
    %v1270 = vpop.trf.xlu0
    %v1271 = vpop.trf.xlu0
    %v1272 = vpop.trf.xlu0
    %v1273 = vpop.trf.xlu0
    %v1274 = vpop.trf.xlu0
    %v1275 = vpop.trf.xlu0
    %v1276 = vpop.trf.xlu0
    %v1277 = vpop.trf.xlu0
    %v1278 = vpop.trf.xlu0
    %v1279 = vpop.trf.xlu0
    %v1280 = vpop.trf.xlu0
    %v1281 = vpop.trf.xlu0
    %v1282 = vpop.trf.xlu0
    %v1283 = vpop.trf.xlu0
    %v1284 = vpop.trf.xlu0
    %v1285 = vpop.trf.xlu0
    %vm1286 = vcmask 64512
    %v1288 = vsel %vm1286, %v1270, 0
    %v1291 = vsel %vm1286, %v1271, 0
    %v1294 = vsel %vm1286, %v1272, 0
    %v1297 = vsel %vm1286, %v1273, 0
    %v1300 = vsel %vm1286, %v1274, 0
    %v1303 = vsel %vm1286, %v1275, 0
    %v1306 = vsel %vm1286, %v1276, 0
    %v1309 = vsel %vm1286, %v1277, 0
    %1311 = vmatpush.msra.mxu0 0.0
    %1312 = vmatpush.msra.mxu0 0.0
    %1313 = vmatpush.msra.mxu0 0.0
    %1314 = vmatpush.msra.mxu0 0.0
    %1315 = vmatpush.msra.mxu0 0.0
    %1316 = vmatpush.msra.mxu0 0.0
    %1317 = vmatpush.msra.mxu0 0.0
    %1318 = vmatpush.msra.mxu0 0.0
    %1319 = vmatpush.msra.mxu0 0.0
    %1320 = vmatpush.msra.mxu0 0.0
    %1321 = vmatpush.msra.mxu0 0.0
    %1322 = vmatpush.msra.mxu0 0.0
    %1323 = vmatpush.msra.mxu0 0.0
    %1324 = vmatpush.msra.mxu0 0.0
    %1325 = vmatpush.msra.mxu0 0.0
    %1326 = vmatpush.msra.mxu0 %v1054
    %1327 = vmatmul.f32.gmra.mxu0 %v1288
    %v1328 = vpop.f32.mrf.mxu0
    %v1329 = vadd.f32 0.0, %v1328
    %1330 = vmatmul.f32.gmra.mxu0 %v1291
    %v1331 = vpop.f32.mrf.mxu0
    %v1332 = vadd.f32 0.0, %v1331
    %1333 = vmatmul.f32.gmra.mxu0 %v1294
    %v1334 = vpop.f32.mrf.mxu0
    %v1335 = vadd.f32 0.0, %v1334
    %1336 = vmatmul.f32.gmra.mxu0 %v1297
    %v1337 = vpop.f32.mrf.mxu0
    %v1338 = vadd.f32 0.0, %v1337
    %1339 = vmatmul.f32.gmra.mxu0 %v1300
    %v1340 = vpop.f32.mrf.mxu0
    %v1341 = vadd.f32 0.0, %v1340
    %1342 = vmatmul.f32.gmra.mxu0 %v1303
    %v1343 = vpop.f32.mrf.mxu0
    %v1344 = vadd.f32 0.0, %v1343
    %1345 = vmatmul.f32.gmra.mxu0 %v1306
    %v1346 = vpop.f32.mrf.mxu0
    %v1347 = vadd.f32 0.0, %v1346
    %1348 = vmatmul.f32.gmra.mxu0 %v1309
    %v1349 = vpop.f32.mrf.mxu0
    %v1350 = vadd.f32 0.0, %v1349
    %1351 = vdwg.mxu0
    %v1352 = vmul.f32 %v1329, %v322
    %v1353 = vmul.f32 %v1332, %v323
    %v1354 = vmul.f32 %v1335, %v324
    %v1355 = vmul.f32 %v1338, %v325
    %v1356 = vmul.f32 %v1341, %v326
    %v1357 = vmul.f32 %v1344, %v327
    %v1358 = vmul.f32 %v1347, %v328
    %v1359 = vmul.f32 %v1350, %v329
    %v1360 = vld [vmem:[#allocation2 + $0x40] sm:$0xff]
    %v1361 = vld [vmem:[#allocation2 + $0x48] sm:$0xff]
    %v1362 = vld [vmem:[#allocation2 + $0x50] sm:$0xff]
    %v1363 = vld [vmem:[#allocation2 + $0x58] sm:$0xff]
    %v1364 = vld [vmem:[#allocation2 + $0x60] sm:$0xff]
    %v1365 = vld [vmem:[#allocation2 + $0x68] sm:$0xff]
    %v1366 = vld [vmem:[#allocation2 + $0x70] sm:$0xff]
    %v1367 = vld [vmem:[#allocation2 + $0x78] sm:$0xff]
    %v1369 = vsel %vm1063, %v1360, 0
    %v1372 = vsel %vm1063, %v1361, 0
    %v1375 = vsel %vm1063, %v1362, 0
    %v1378 = vsel %vm1063, %v1363, 0
    %v1381 = vsel %vm1063, %v1364, 0
    %v1384 = vsel %vm1063, %v1365, 0
    %v1387 = vsel %vm1063, %v1366, 0
    %v1390 = vsel %vm1063, %v1367, 0
    %1392 = vmatpush.msra.mxu0 0.0
    %1393 = vmatpush.msra.mxu0 0.0
    %1394 = vmatpush.msra.mxu0 0.0
    %1395 = vmatpush.msra.mxu0 0.0
    %1396 = vmatpush.msra.mxu0 0.0
    %1397 = vmatpush.msra.mxu0 0.0
    %1398 = vmatpush.msra.mxu0 0.0
    %1399 = vmatpush.msra.mxu0 0.0
    %1400 = vmatpush.msra.mxu0 0.0
    %1401 = vmatpush.msra.mxu0 0.0
    %1402 = vmatpush.msra.mxu0 0.0
    %1403 = vmatpush.msra.mxu0 0.0
    %1404 = vmatpush.msra.mxu0 0.0
    %1405 = vmatpush.msra.mxu0 0.0
    %1406 = vmatpush.msra.mxu0 %v1149
    %1407 = vmatpush.msra.mxu0 %v1148
    %1408 = vmatmul.f32.gmra.mxu0 %v1369
    %v1409 = vpop.f32.mrf.mxu0
    %v1410 = vadd.f32 0.0, %v1409
    %1411 = vmatmul.f32.gmra.mxu0 %v1372
    %v1412 = vpop.f32.mrf.mxu0
    %v1413 = vadd.f32 0.0, %v1412
    %1414 = vmatmul.f32.gmra.mxu0 %v1375
    %v1415 = vpop.f32.mrf.mxu0
    %v1416 = vadd.f32 0.0, %v1415
    %1417 = vmatmul.f32.gmra.mxu0 %v1378
    %v1418 = vpop.f32.mrf.mxu0
    %v1419 = vadd.f32 0.0, %v1418
    %1420 = vmatmul.f32.gmra.mxu0 %v1381
    %v1421 = vpop.f32.mrf.mxu0
    %v1422 = vadd.f32 0.0, %v1421
    %1423 = vmatmul.f32.gmra.mxu0 %v1384
    %v1424 = vpop.f32.mrf.mxu0
    %v1425 = vadd.f32 0.0, %v1424
    %1426 = vmatmul.f32.gmra.mxu0 %v1387
    %v1427 = vpop.f32.mrf.mxu0
    %v1428 = vadd.f32 0.0, %v1427
    %1429 = vmatmul.f32.gmra.mxu0 %v1390
    %v1430 = vpop.f32.mrf.mxu0
    %v1431 = vadd.f32 0.0, %v1430
    %1432 = vdwg.mxu0
    %v1433 = vmul.f32 %v1410, %v322
    %v1434 = vmul.f32 %v1413, %v323
    %v1435 = vmul.f32 %v1416, %v324
    %v1436 = vmul.f32 %v1419, %v325
    %v1437 = vmul.f32 %v1422, %v326
    %v1438 = vmul.f32 %v1425, %v327
    %v1439 = vmul.f32 %v1428, %v328
    %v1440 = vmul.f32 %v1431, %v329
    %v1442 = vsel %vm332, %v1131, 0
    %1444 = vmatpush.msra.mxu0 0.0
    %1445 = vmatpush.msra.mxu0 0.0
    %1446 = vmatpush.msra.mxu0 0.0
    %1447 = vmatpush.msra.mxu0 0.0
    %1448 = vmatpush.msra.mxu0 0.0
    %1449 = vmatpush.msra.mxu0 0.0
    %1450 = vmatpush.msra.mxu0 0.0
    %1451 = vmatpush.msra.mxu0 0.0
    %1452 = vmatpush.msra.mxu0 %v1440
    %1453 = vmatpush.msra.mxu0 %v1439
    %1454 = vmatpush.msra.mxu0 %v1438
    %1455 = vmatpush.msra.mxu0 %v1437
    %1456 = vmatpush.msra.mxu0 %v1436
    %1457 = vmatpush.msra.mxu0 %v1435
    %1458 = vmatpush.msra.mxu0 %v1434
    %1459 = vmatpush.msra.mxu0 %v1433
    %1460 = vmatmul.f32.gmra.mxu0 %v1442
    %v1461 = vpop.f32.mrf.mxu0
    %v1462 = vadd.f32 0.0, %v1461
    %1463 = vdwg.mxu0
    %1464 = vxpose.xlu0.b32.start [1/16] %v1147, 128
    %1465 = vxpose.xlu0.b32.cont [2/16] 0.0, 128
    %1466 = vxpose.xlu0.b32.cont [3/16] 0.0, 128
    %1467 = vxpose.xlu0.b32.cont [4/16] 0.0, 128
    %1468 = vxpose.xlu0.b32.cont [5/16] 0.0, 128
    %1469 = vxpose.xlu0.b32.cont [6/16] 0.0, 128
    %1470 = vxpose.xlu0.b32.cont [7/16] 0.0, 128
    %1471 = vxpose.xlu0.b32.cont [8/16] 0.0, 128
    %1472 = vxpose.xlu0.b32.cont [9/16] 0.0, 128
    %1473 = vxpose.xlu0.b32.cont [10/16] 0.0, 128
    %1474 = vxpose.xlu0.b32.cont [11/16] 0.0, 128
    %1475 = vxpose.xlu0.b32.cont [12/16] 0.0, 128
    %1476 = vxpose.xlu0.b32.cont [13/16] 0.0, 128
    %1477 = vxpose.xlu0.b32.cont [14/16] 0.0, 128
    %1478 = vxpose.xlu0.b32.cont [15/16] 0.0, 128
    %1479 = vxpose.xlu0.b32.end [16/16] 0.0, 128
    %v1480 = vpop.trf.xlu0
    %v1481 = vpop.trf.xlu0
    %v1482 = vpop.trf.xlu0
    %v1483 = vpop.trf.xlu0
    %v1484 = vpop.trf.xlu0
    %v1485 = vpop.trf.xlu0
    %v1486 = vpop.trf.xlu0
    %v1487 = vpop.trf.xlu0
    %v1488 = vpop.trf.xlu0
    %v1489 = vpop.trf.xlu0
    %v1490 = vpop.trf.xlu0
    %v1491 = vpop.trf.xlu0
    %v1492 = vpop.trf.xlu0
    %v1493 = vpop.trf.xlu0
    %v1494 = vpop.trf.xlu0
    %v1495 = vpop.trf.xlu0
    %v1497 = vsel %vm1286, %v1480, 0
    %v1500 = vsel %vm1286, %v1481, 0
    %v1503 = vsel %vm1286, %v1482, 0
    %v1506 = vsel %vm1286, %v1483, 0
    %v1509 = vsel %vm1286, %v1484, 0
    %v1512 = vsel %vm1286, %v1485, 0
    %v1515 = vsel %vm1286, %v1486, 0
    %v1518 = vsel %vm1286, %v1487, 0
    %1520 = vmatpush.msra.mxu0 0.0
    %1521 = vmatpush.msra.mxu0 0.0
    %1522 = vmatpush.msra.mxu0 0.0
    %1523 = vmatpush.msra.mxu0 0.0
    %1524 = vmatpush.msra.mxu0 0.0
    %1525 = vmatpush.msra.mxu0 0.0
    %1526 = vmatpush.msra.mxu0 0.0
    %1527 = vmatpush.msra.mxu0 0.0
    %1528 = vmatpush.msra.mxu0 0.0
    %1529 = vmatpush.msra.mxu0 0.0
    %1530 = vmatpush.msra.mxu0 0.0
    %1531 = vmatpush.msra.mxu0 0.0
    %1532 = vmatpush.msra.mxu0 0.0
    %1533 = vmatpush.msra.mxu0 0.0
    %1534 = vmatpush.msra.mxu0 0.0
    %1535 = vmatpush.msra.mxu0 %v1056
    %1536 = vmatmul.f32.gmra.mxu0 %v1497
    %v1537 = vpop.f32.mrf.mxu0
    %v1538 = vadd.f32 0.0, %v1537
    %1539 = vmatmul.f32.gmra.mxu0 %v1500
    %v1540 = vpop.f32.mrf.mxu0
    %v1541 = vadd.f32 0.0, %v1540
    %1542 = vmatmul.f32.gmra.mxu0 %v1503
    %v1543 = vpop.f32.mrf.mxu0
    %v1544 = vadd.f32 0.0, %v1543
    %1545 = vmatmul.f32.gmra.mxu0 %v1506
    %v1546 = vpop.f32.mrf.mxu0
    %v1547 = vadd.f32 0.0, %v1546
    %1548 = vmatmul.f32.gmra.mxu0 %v1509
    %v1549 = vpop.f32.mrf.mxu0
    %v1550 = vadd.f32 0.0, %v1549
    %1551 = vmatmul.f32.gmra.mxu0 %v1512
    %v1552 = vpop.f32.mrf.mxu0
    %v1553 = vadd.f32 0.0, %v1552
    %1554 = vmatmul.f32.gmra.mxu0 %v1515
    %v1555 = vpop.f32.mrf.mxu0
    %v1556 = vadd.f32 0.0, %v1555
    %1557 = vmatmul.f32.gmra.mxu0 %v1518
    %v1558 = vpop.f32.mrf.mxu0
    %v1559 = vadd.f32 0.0, %v1558
    %1560 = vdwg.mxu0
    %v1561 = vmul.f32 %v1538, %v322
    %v1562 = vmul.f32 %v1541, %v323
    %v1563 = vmul.f32 %v1544, %v324
    %v1564 = vmul.f32 %v1547, %v325
    %v1565 = vmul.f32 %v1550, %v326
    %v1566 = vmul.f32 %v1553, %v327
    %v1567 = vmul.f32 %v1556, %v328
    %v1568 = vmul.f32 %v1559, %v329
    %v1569 = vld [vmem:[%s35] sm:$0xff]
    %v1570 = vld [vmem:[%s35 + $0x8] sm:$0xff]
    %v1571 = vld [vmem:[%s35 + $0x10] sm:$0xff]
    %v1572 = vld [vmem:[%s35 + $0x18] sm:$0xff]
    %v1573 = vld [vmem:[%s35 + $0x20] sm:$0xff]
    %v1574 = vld [vmem:[%s35 + $0x28] sm:$0xff]
    %v1575 = vld [vmem:[%s35 + $0x30] sm:$0xff]
    %v1576 = vld [vmem:[%s35 + $0x38] sm:$0xff]
    %v1577 = vld [vmem:[#allocation10] sm:$0xff]
    %v1578 = vld [vmem:[#allocation10 + $0x8] sm:$0xff]
    %v1579 = vld [vmem:[#allocation10 + $0x10] sm:$0xff]
    %v1580 = vld [vmem:[#allocation10 + $0x18] sm:$0xff]
    %v1581 = vld [vmem:[#allocation10 + $0x20] sm:$0xff]
    %v1582 = vld [vmem:[#allocation10 + $0x28] sm:$0xff]
    %v1583 = vld [vmem:[#allocation10 + $0x30] sm:$0xff]
    %v1584 = vld [vmem:[#allocation10 + $0x38] sm:$0xff]
    %v1586 = vsel %vm1063, %v1569, 0
    %v1589 = vsel %vm1063, %v1570, 0
    %v1592 = vsel %vm1063, %v1571, 0
    %v1595 = vsel %vm1063, %v1572, 0
    %v1598 = vsel %vm1063, %v1573, 0
    %v1601 = vsel %vm1063, %v1574, 0
    %v1604 = vsel %vm1063, %v1575, 0
    %v1607 = vsel %vm1063, %v1576, 0
    %1609 = vmatpush.msra.mxu0 0.0
    %1610 = vmatpush.msra.mxu0 0.0
    %1611 = vmatpush.msra.mxu0 0.0
    %1612 = vmatpush.msra.mxu0 0.0
    %1613 = vmatpush.msra.mxu0 0.0
    %1614 = vmatpush.msra.mxu0 0.0
    %1615 = vmatpush.msra.mxu0 0.0
    %1616 = vmatpush.msra.mxu0 0.0
    %1617 = vmatpush.msra.mxu0 0.0
    %1618 = vmatpush.msra.mxu0 0.0
    %1619 = vmatpush.msra.mxu0 0.0
    %1620 = vmatpush.msra.mxu0 0.0
    %1621 = vmatpush.msra.mxu0 0.0
    %1622 = vmatpush.msra.mxu0 0.0
    %1623 = vmatpush.msra.mxu0 %v1131
    %1624 = vmatpush.msra.mxu0 %v1130
    %1625 = vmatmul.f32.gmra.mxu0 %v1586
    %v1626 = vpop.f32.mrf.mxu0
    %v1627 = vadd.f32 0.0, %v1626
    %1628 = vmatmul.f32.gmra.mxu0 %v1589
    %v1629 = vpop.f32.mrf.mxu0
    %v1630 = vadd.f32 0.0, %v1629
    %1631 = vmatmul.f32.gmra.mxu0 %v1592
    %v1632 = vpop.f32.mrf.mxu0
    %v1633 = vadd.f32 0.0, %v1632
    %1634 = vmatmul.f32.gmra.mxu0 %v1595
    %v1635 = vpop.f32.mrf.mxu0
    %v1636 = vadd.f32 0.0, %v1635
    %1637 = vmatmul.f32.gmra.mxu0 %v1598
    %v1638 = vpop.f32.mrf.mxu0
    %v1639 = vadd.f32 0.0, %v1638
    %1640 = vmatmul.f32.gmra.mxu0 %v1601
    %v1641 = vpop.f32.mrf.mxu0
    %v1642 = vadd.f32 0.0, %v1641
    %1643 = vmatmul.f32.gmra.mxu0 %v1604
    %v1644 = vpop.f32.mrf.mxu0
    %v1645 = vadd.f32 0.0, %v1644
    %1646 = vmatmul.f32.gmra.mxu0 %v1607
    %v1647 = vpop.f32.mrf.mxu0
    %v1648 = vadd.f32 0.0, %v1647
    %1649 = vdwg.mxu0
    %v1650 = vmul.f32 %v1627, %v1577
    %v1651 = vmul.f32 %v1630, %v1578
    %v1652 = vmul.f32 %v1633, %v1579
    %v1653 = vmul.f32 %v1636, %v1580
    %v1654 = vmul.f32 %v1639, %v1581
    %v1655 = vmul.f32 %v1642, %v1582
    %v1656 = vmul.f32 %v1645, %v1583
    %v1657 = vmul.f32 %v1648, %v1584
    %1658 = vmatpush.msra.mxu0 0.0
    %1659 = vmatpush.msra.mxu0 0.0
    %1660 = vmatpush.msra.mxu0 0.0
    %1661 = vmatpush.msra.mxu0 0.0
    %1662 = vmatpush.msra.mxu0 0.0
    %1663 = vmatpush.msra.mxu0 0.0
    %1664 = vmatpush.msra.mxu0 0.0
    %1665 = vmatpush.msra.mxu0 0.0
    %1666 = vmatpush.msra.mxu0 0.0
    %1667 = vmatpush.msra.mxu0 0.0
    %1668 = vmatpush.msra.mxu0 0.0
    %1669 = vmatpush.msra.mxu0 0.0
    %1670 = vmatpush.msra.mxu0 0.0
    %1671 = vmatpush.msra.mxu0 0.0
    %1672 = vmatpush.msra.mxu0 %v1139
    %1673 = vmatpush.msra.mxu0 %v1138
    %1674 = vmatmul.f32.gmra.mxu0 %v1586
    %v1675 = vpop.f32.mrf.mxu0
    %v1676 = vadd.f32 0.0, %v1675
    %1677 = vmatmul.f32.gmra.mxu0 %v1589
    %v1678 = vpop.f32.mrf.mxu0
    %v1679 = vadd.f32 0.0, %v1678
    %1680 = vmatmul.f32.gmra.mxu0 %v1592
    %v1681 = vpop.f32.mrf.mxu0
    %v1682 = vadd.f32 0.0, %v1681
    %1683 = vmatmul.f32.gmra.mxu0 %v1595
    %v1684 = vpop.f32.mrf.mxu0
    %v1685 = vadd.f32 0.0, %v1684
    %1686 = vmatmul.f32.gmra.mxu0 %v1598
    %v1687 = vpop.f32.mrf.mxu0
    %v1688 = vadd.f32 0.0, %v1687
    %1689 = vmatmul.f32.gmra.mxu0 %v1601
    %v1690 = vpop.f32.mrf.mxu0
    %v1691 = vadd.f32 0.0, %v1690
    %1692 = vmatmul.f32.gmra.mxu0 %v1604
    %v1693 = vpop.f32.mrf.mxu0
    %v1694 = vadd.f32 0.0, %v1693
    %1695 = vmatmul.f32.gmra.mxu0 %v1607
    %v1696 = vpop.f32.mrf.mxu0
    %v1697 = vadd.f32 0.0, %v1696
    %1698 = vdwg.mxu0
    %1699 = vmatpush.msra.mxu0 0.0
    %1700 = vmatpush.msra.mxu0 0.0
    %1701 = vmatpush.msra.mxu0 0.0
    %1702 = vmatpush.msra.mxu0 0.0
    %1703 = vmatpush.msra.mxu0 0.0
    %1704 = vmatpush.msra.mxu0 0.0
    %1705 = vmatpush.msra.mxu0 0.0
    %1706 = vmatpush.msra.mxu0 0.0
    %1707 = vmatpush.msra.mxu0 0.0
    %1708 = vmatpush.msra.mxu0 0.0
    %1709 = vmatpush.msra.mxu0 0.0
    %1710 = vmatpush.msra.mxu0 0.0
    %1711 = vmatpush.msra.mxu0 0.0
    %1712 = vmatpush.msra.mxu0 0.0
    %1713 = vmatpush.msra.mxu0 %v1056
    %1714 = vmatpush.msra.mxu0 %v1054
    %1715 = vmatmul.f32.gmra.mxu0 %v1586
    %v1716 = vpop.f32.mrf.mxu0
    %v1717 = vadd.f32 0.0, %v1716
    %1718 = vmatmul.f32.gmra.mxu0 %v1589
    %v1719 = vpop.f32.mrf.mxu0
    %v1720 = vadd.f32 0.0, %v1719
    %1721 = vmatmul.f32.gmra.mxu0 %v1592
    %v1722 = vpop.f32.mrf.mxu0
    %v1723 = vadd.f32 0.0, %v1722
    %1724 = vmatmul.f32.gmra.mxu0 %v1595
    %v1725 = vpop.f32.mrf.mxu0
    %v1726 = vadd.f32 0.0, %v1725
    %1727 = vmatmul.f32.gmra.mxu0 %v1598
    %v1728 = vpop.f32.mrf.mxu0
    %v1729 = vadd.f32 0.0, %v1728
    %1730 = vmatmul.f32.gmra.mxu0 %v1601
    %v1731 = vpop.f32.mrf.mxu0
    %v1732 = vadd.f32 0.0, %v1731
    %1733 = vmatmul.f32.gmra.mxu0 %v1604
    %v1734 = vpop.f32.mrf.mxu0
    %v1735 = vadd.f32 0.0, %v1734
    %1736 = vmatmul.f32.gmra.mxu0 %v1607
    %v1737 = vpop.f32.mrf.mxu0
    %v1738 = vadd.f32 0.0, %v1737
    %1739 = vdwg.mxu0
    %v1741 = vsel %vm332, %v1650, 0
    %v1744 = vsel %vm332, %v1651, 0
    %v1747 = vsel %vm332, %v1652, 0
    %v1750 = vsel %vm332, %v1653, 0
    %v1753 = vsel %vm332, %v1654, 0
    %v1756 = vsel %vm332, %v1655, 0
    %v1759 = vsel %vm332, %v1656, 0
    %v1762 = vsel %vm332, %v1657, 0
    %v1765 = vsel %vm332, %v1676, 0
    %v1768 = vsel %vm332, %v1679, 0
    %v1771 = vsel %vm332, %v1682, 0
    %v1774 = vsel %vm332, %v1685, 0
    %v1777 = vsel %vm332, %v1688, 0
    %v1780 = vsel %vm332, %v1691, 0
    %v1783 = vsel %vm332, %v1694, 0
    %v1786 = vsel %vm332, %v1697, 0
    %1788 = vmatpush.xpose.msra.mxu0 0.0
    %1789 = vmatpush.xpose.msra.mxu0 0.0
    %1790 = vmatpush.xpose.msra.mxu0 0.0
    %1791 = vmatpush.xpose.msra.mxu0 0.0
    %1792 = vmatpush.xpose.msra.mxu0 0.0
    %1793 = vmatpush.xpose.msra.mxu0 0.0
    %1794 = vmatpush.xpose.msra.mxu0 0.0
    %1795 = vmatpush.xpose.msra.mxu0 0.0
    %1796 = vmatpush.xpose.msra.mxu0 %v1786
    %1797 = vmatpush.xpose.msra.mxu0 %v1783
    %1798 = vmatpush.xpose.msra.mxu0 %v1780
    %1799 = vmatpush.xpose.msra.mxu0 %v1777
    %1800 = vmatpush.xpose.msra.mxu0 %v1774
    %1801 = vmatpush.xpose.msra.mxu0 %v1771
    %1802 = vmatpush.xpose.msra.mxu0 %v1768
    %1803 = vmatpush.xpose.msra.mxu0 %v1765
    %1804 = vmatmul.f32.gmra.mxu0 %v1741
    %v1805 = vpop.f32.mrf.mxu0
    %v1806 = vadd.f32 0.0, %v1805
    %1807 = vmatmul.f32.gmra.mxu0 %v1744
    %v1808 = vpop.f32.mrf.mxu0
    %v1809 = vadd.f32 0.0, %v1808
    %1810 = vmatmul.f32.gmra.mxu0 %v1747
    %v1811 = vpop.f32.mrf.mxu0
    %v1812 = vadd.f32 0.0, %v1811
    %1813 = vmatmul.f32.gmra.mxu0 %v1750
    %v1814 = vpop.f32.mrf.mxu0
    %v1815 = vadd.f32 0.0, %v1814
    %1816 = vmatmul.f32.gmra.mxu0 %v1753
    %v1817 = vpop.f32.mrf.mxu0
    %v1818 = vadd.f32 0.0, %v1817
    %1819 = vmatmul.f32.gmra.mxu0 %v1756
    %v1820 = vpop.f32.mrf.mxu0
    %v1821 = vadd.f32 0.0, %v1820
    %1822 = vmatmul.f32.gmra.mxu0 %v1759
    %v1823 = vpop.f32.mrf.mxu0
    %v1824 = vadd.f32 0.0, %v1823
    %1825 = vmatmul.f32.gmra.mxu0 %v1762
    %v1826 = vpop.f32.mrf.mxu0
    %v1827 = vadd.f32 0.0, %v1826
    %1828 = vdwg.mxu0
    %v1829 = vld [vmem:[#allocation11] sm:$0xff]
    %v1830 = vld [vmem:[#allocation11 + $0x8] sm:$0xff]
    %v1831 = vld [vmem:[#allocation11 + $0x10] sm:$0xff]
    %v1832 = vld [vmem:[#allocation11 + $0x18] sm:$0xff]
    %v1833 = vld [vmem:[#allocation11 + $0x20] sm:$0xff]
    %v1834 = vld [vmem:[#allocation11 + $0x28] sm:$0xff]
    %v1835 = vld [vmem:[#allocation11 + $0x30] sm:$0xff]
    %v1836 = vld [vmem:[#allocation11 + $0x38] sm:$0xff]
    %v1837 = vmul.f32 %v1806, %v1829
    %v1838 = vmul.f32 %v1809, %v1830
    %v1839 = vmul.f32 %v1812, %v1831
    %v1840 = vmul.f32 %v1815, %v1832
    %v1841 = vmul.f32 %v1818, %v1833
    %v1842 = vmul.f32 %v1821, %v1834
    %v1843 = vmul.f32 %v1824, %v1835
    %v1844 = vmul.f32 %v1827, %v1836
    %v1846 = vsel %vm332, %v1837, 0
    %v1849 = vsel %vm332, %v1838, 0
    %v1852 = vsel %vm332, %v1839, 0
    %v1855 = vsel %vm332, %v1840, 0
    %v1858 = vsel %vm332, %v1841, 0
    %v1861 = vsel %vm332, %v1842, 0
    %v1864 = vsel %vm332, %v1843, 0
    %v1867 = vsel %vm332, %v1844, 0
    %1869 = vmatpush.msra.mxu0 0.0
    %1870 = vmatpush.msra.mxu0 0.0
    %1871 = vmatpush.msra.mxu0 0.0
    %1872 = vmatpush.msra.mxu0 0.0
    %1873 = vmatpush.msra.mxu0 0.0
    %1874 = vmatpush.msra.mxu0 0.0
    %1875 = vmatpush.msra.mxu0 0.0
    %1876 = vmatpush.msra.mxu0 0.0
    %1877 = vmatpush.msra.mxu0 %v1738
    %1878 = vmatpush.msra.mxu0 %v1735
    %1879 = vmatpush.msra.mxu0 %v1732
    %1880 = vmatpush.msra.mxu0 %v1729
    %1881 = vmatpush.msra.mxu0 %v1726
    %1882 = vmatpush.msra.mxu0 %v1723
    %1883 = vmatpush.msra.mxu0 %v1720
    %1884 = vmatpush.msra.mxu0 %v1717
    %1885 = vmatmul.f32.gmra.mxu0 %v1846
    %v1886 = vpop.f32.mrf.mxu0
    %v1887 = vadd.f32 0.0, %v1886
    %1888 = vmatmul.f32.gmra.mxu0 %v1849
    %v1889 = vpop.f32.mrf.mxu0
    %v1890 = vadd.f32 0.0, %v1889
    %1891 = vmatmul.f32.gmra.mxu0 %v1852
    %v1892 = vpop.f32.mrf.mxu0
    %v1893 = vadd.f32 0.0, %v1892
    %1894 = vmatmul.f32.gmra.mxu0 %v1855
    %v1895 = vpop.f32.mrf.mxu0
    %v1896 = vadd.f32 0.0, %v1895
    %1897 = vmatmul.f32.gmra.mxu0 %v1858
    %v1898 = vpop.f32.mrf.mxu0
    %v1899 = vadd.f32 0.0, %v1898
    %1900 = vmatmul.f32.gmra.mxu0 %v1861
    %v1901 = vpop.f32.mrf.mxu0
    %v1902 = vadd.f32 0.0, %v1901
    %1903 = vmatmul.f32.gmra.mxu0 %v1864
    %v1904 = vpop.f32.mrf.mxu0
    %v1905 = vadd.f32 0.0, %v1904
    %1906 = vmatmul.f32.gmra.mxu0 %v1867
    %v1907 = vpop.f32.mrf.mxu0
    %v1908 = vadd.f32 0.0, %v1907
    %1909 = vdwg.mxu0
    %v1910 = vmul.f32 %v1887, %v1577
    %v1911 = vmul.f32 %v1890, %v1578
    %v1912 = vmul.f32 %v1893, %v1579
    %v1913 = vmul.f32 %v1896, %v1580
    %v1914 = vmul.f32 %v1899, %v1581
    %v1915 = vmul.f32 %v1902, %v1582
    %v1916 = vmul.f32 %v1905, %v1583
    %v1917 = vmul.f32 %v1908, %v1584
    %v1918 = vld [vmem:[%s37] sm:$0xff]
    %v1919 = vld [vmem:[%s37 + $0x8] sm:$0xff]
    %v1921 = vsel %vm332, %v1918, 0
    %v1924 = vsel %vm332, %v1919, 0
    %1926 = vmatpush.msra.mxu0 0.0
    %1927 = vmatpush.msra.mxu0 0.0
    %1928 = vmatpush.msra.mxu0 0.0
    %1929 = vmatpush.msra.mxu0 0.0
    %1930 = vmatpush.msra.mxu0 0.0
    %1931 = vmatpush.msra.mxu0 0.0
    %1932 = vmatpush.msra.mxu0 0.0
    %1933 = vmatpush.msra.mxu0 0.0
    %1934 = vmatpush.msra.mxu0 %v1917
    %1935 = vmatpush.msra.mxu0 %v1916
    %1936 = vmatpush.msra.mxu0 %v1915
    %1937 = vmatpush.msra.mxu0 %v1914
    %1938 = vmatpush.msra.mxu0 %v1913
    %1939 = vmatpush.msra.mxu0 %v1912
    %1940 = vmatpush.msra.mxu0 %v1911
    %1941 = vmatpush.msra.mxu0 %v1910
    %1942 = vmatmul.f32.gmra.mxu0 %v1921
    %v1943 = vpop.f32.mrf.mxu0
    %v1944 = vadd.f32 0.0, %v1943
    %1945 = vmatmul.f32.gmra.mxu0 %v1924
    %v1946 = vpop.f32.mrf.mxu0
    %v1947 = vadd.f32 0.0, %v1946
    %1948 = vdwg.mxu0
    %v1949 = vadd.f32 %v1059, %v1252
    %v1950 = vadd.f32 %v1060, %v1462
    %v1951 = vadd.f32 %v1949, %v1944
    %v1952 = vadd.f32 %v1950, %v1947
    %v1953 = vld [vmem:[%s47] sm:$0xff]
    %v1954 = vld [vmem:[%s47 + $0x8] sm:$0xff]
    %v1955 = vld [vmem:[%s47 + $0x10] sm:$0xff]
    %v1956 = vld [vmem:[%s47 + $0x18] sm:$0xff]
    %v1957 = vld [vmem:[%s47 + $0x20] sm:$0xff]
    %v1958 = vld [vmem:[%s47 + $0x28] sm:$0xff]
    %v1959 = vld [vmem:[%s47 + $0x30] sm:$0xff]
    %v1960 = vld [vmem:[%s47 + $0x38] sm:$0xff]
    %v1961 = vld [vmem:[%s47 + $0x40] sm:$0xff]
    %v1962 = vld [vmem:[%s47 + $0x48] sm:$0xff]
    %v1963 = vld [vmem:[%s47 + $0x50] sm:$0xff]
    %v1964 = vld [vmem:[%s47 + $0x58] sm:$0xff]
    %v1965 = vld [vmem:[%s47 + $0x60] sm:$0xff]
    %v1966 = vld [vmem:[%s47 + $0x68] sm:$0xff]
    %v1967 = vld [vmem:[%s47 + $0x70] sm:$0xff]
    %v1968 = vld [vmem:[%s47 + $0x78] sm:$0xff]
    %v1970 = vsel %vm1063, %v1953, 0
    %v1973 = vsel %vm1063, %v1954, 0
    %v1976 = vsel %vm1063, %v1955, 0
    %v1979 = vsel %vm1063, %v1956, 0
    %v1982 = vsel %vm1063, %v1957, 0
    %v1985 = vsel %vm1063, %v1958, 0
    %v1988 = vsel %vm1063, %v1959, 0
    %v1991 = vsel %vm1063, %v1960, 0
    %v1994 = vsel %vm1063, %v1961, 0
    %v1997 = vsel %vm1063, %v1962, 0
    %v2000 = vsel %vm1063, %v1963, 0
    %v2003 = vsel %vm1063, %v1964, 0
    %v2006 = vsel %vm1063, %v1965, 0
    %v2009 = vsel %vm1063, %v1966, 0
    %v2012 = vsel %vm1063, %v1967, 0
    %v2015 = vsel %vm1063, %v1968, 0
    %2017 = vmatpush.msra.mxu0 0.0
    %2018 = vmatpush.msra.mxu0 0.0
    %2019 = vmatpush.msra.mxu0 0.0
    %2020 = vmatpush.msra.mxu0 0.0
    %2021 = vmatpush.msra.mxu0 0.0
    %2022 = vmatpush.msra.mxu0 0.0
    %2023 = vmatpush.msra.mxu0 0.0
    %2024 = vmatpush.msra.mxu0 0.0
    %2025 = vmatpush.msra.mxu0 0.0
    %2026 = vmatpush.msra.mxu0 0.0
    %2027 = vmatpush.msra.mxu0 0.0
    %2028 = vmatpush.msra.mxu0 0.0
    %2029 = vmatpush.msra.mxu0 0.0
    %2030 = vmatpush.msra.mxu0 0.0
    %2031 = vmatpush.msra.mxu0 %v1124
    %2032 = vmatpush.msra.mxu0 %v1121
    %2033 = vmatmul.f32.gmra.mxu0 %v1970
    %v2034 = vpop.f32.mrf.mxu0
    %v2035 = vadd.f32 0.0, %v2034
    %2036 = vmatmul.f32.gmra.mxu0 %v1973
    %v2037 = vpop.f32.mrf.mxu0
    %v2038 = vadd.f32 0.0, %v2037
    %2039 = vmatmul.f32.gmra.mxu0 %v1976
    %v2040 = vpop.f32.mrf.mxu0
    %v2041 = vadd.f32 0.0, %v2040
    %2042 = vmatmul.f32.gmra.mxu0 %v1979
    %v2043 = vpop.f32.mrf.mxu0
    %v2044 = vadd.f32 0.0, %v2043
    %2045 = vmatmul.f32.gmra.mxu0 %v1982
    %v2046 = vpop.f32.mrf.mxu0
    %v2047 = vadd.f32 0.0, %v2046
    %2048 = vmatmul.f32.gmra.mxu0 %v1985
    %v2049 = vpop.f32.mrf.mxu0
    %v2050 = vadd.f32 0.0, %v2049
    %2051 = vmatmul.f32.gmra.mxu0 %v1988
    %v2052 = vpop.f32.mrf.mxu0
    %v2053 = vadd.f32 0.0, %v2052
    %2054 = vmatmul.f32.gmra.mxu0 %v1991
    %v2055 = vpop.f32.mrf.mxu0
    %v2056 = vadd.f32 0.0, %v2055
    %2057 = vmatmul.f32.gmra.mxu0 %v1994
    %v2058 = vpop.f32.mrf.mxu0
    %v2059 = vadd.f32 0.0, %v2058
    %2060 = vmatmul.f32.gmra.mxu0 %v1997
    %v2061 = vpop.f32.mrf.mxu0
    %v2062 = vadd.f32 0.0, %v2061
    %2063 = vmatmul.f32.gmra.mxu0 %v2000
    %v2064 = vpop.f32.mrf.mxu0
    %v2065 = vadd.f32 0.0, %v2064
    %2066 = vmatmul.f32.gmra.mxu0 %v2003
    %v2067 = vpop.f32.mrf.mxu0
    %v2068 = vadd.f32 0.0, %v2067
    %2069 = vmatmul.f32.gmra.mxu0 %v2006
    %v2070 = vpop.f32.mrf.mxu0
    %v2071 = vadd.f32 0.0, %v2070
    %2072 = vmatmul.f32.gmra.mxu0 %v2009
    %v2073 = vpop.f32.mrf.mxu0
    %v2074 = vadd.f32 0.0, %v2073
    %2075 = vmatmul.f32.gmra.mxu0 %v2012
    %v2076 = vpop.f32.mrf.mxu0
    %v2077 = vadd.f32 0.0, %v2076
    %2078 = vmatmul.f32.gmra.mxu0 %v2015
    %v2079 = vpop.f32.mrf.mxu0
    %v2080 = vadd.f32 0.0, %v2079
    %2081 = vdwg.mxu0
    %v2082 = vld [vmem:[%s49] sm:$0xff]
    %v2083 = vld [vmem:[%s49 + $0x8] sm:$0xff]
    %v2084 = vld [vmem:[%s49 + $0x10] sm:$0xff]
    %v2085 = vld [vmem:[%s49 + $0x18] sm:$0xff]
    %v2086 = vld [vmem:[%s49 + $0x20] sm:$0xff]
    %v2087 = vld [vmem:[%s49 + $0x28] sm:$0xff]
    %v2088 = vld [vmem:[%s49 + $0x30] sm:$0xff]
    %v2089 = vld [vmem:[%s49 + $0x38] sm:$0xff]
    %v2090 = vld [vmem:[%s49 + $0x40] sm:$0xff]
    %v2091 = vld [vmem:[%s49 + $0x48] sm:$0xff]
    %v2092 = vld [vmem:[%s49 + $0x50] sm:$0xff]
    %v2093 = vld [vmem:[%s49 + $0x58] sm:$0xff]
    %v2094 = vld [vmem:[%s49 + $0x60] sm:$0xff]
    %v2095 = vld [vmem:[%s49 + $0x68] sm:$0xff]
    %v2096 = vld [vmem:[%s49 + $0x70] sm:$0xff]
    %v2097 = vld [vmem:[%s49 + $0x78] sm:$0xff]
    %v2098 = vmul.f32 %v2035, %v2082
    %v2099 = vmul.f32 %v2038, %v2083
    %v2100 = vmul.f32 %v2041, %v2084
    %v2101 = vmul.f32 %v2044, %v2085
    %v2102 = vmul.f32 %v2047, %v2086
    %v2103 = vmul.f32 %v2050, %v2087
    %v2104 = vmul.f32 %v2053, %v2088
    %v2105 = vmul.f32 %v2056, %v2089
    %v2106 = vmul.f32 %v2059, %v2090
    %v2107 = vmul.f32 %v2062, %v2091
    %v2108 = vmul.f32 %v2065, %v2092
    %v2109 = vmul.f32 %v2068, %v2093
    %v2110 = vmul.f32 %v2071, %v2094
    %v2111 = vmul.f32 %v2074, %v2095
    %v2112 = vmul.f32 %v2077, %v2096
    %v2113 = vmul.f32 %v2080, %v2097
    %v2115 = vsel %vm332, %v2098, 0
    %v2118 = vsel %vm332, %v2099, 0
    %v2121 = vsel %vm332, %v2100, 0
    %v2124 = vsel %vm332, %v2101, 0
    %v2127 = vsel %vm332, %v2102, 0
    %v2130 = vsel %vm332, %v2103, 0
    %v2133 = vsel %vm332, %v2104, 0
    %v2136 = vsel %vm332, %v2105, 0
    %v2139 = vsel %vm332, %v2106, 0
    %v2142 = vsel %vm332, %v2107, 0
    %v2145 = vsel %vm332, %v2108, 0
    %v2148 = vsel %vm332, %v2109, 0
    %v2151 = vsel %vm332, %v2110, 0
    %v2154 = vsel %vm332, %v2111, 0
    %v2157 = vsel %vm332, %v2112, 0
    %v2160 = vsel %vm332, %v2113, 0
    %2162 = vmatpush.msra.mxu0 0.0
    %2163 = vmatpush.msra.mxu0 0.0
    %2164 = vmatpush.msra.mxu0 0.0
    %2165 = vmatpush.msra.mxu0 0.0
    %2166 = vmatpush.msra.mxu0 0.0
    %2167 = vmatpush.msra.mxu0 0.0
    %2168 = vmatpush.msra.mxu0 0.0
    %2169 = vmatpush.msra.mxu0 0.0
    %2170 = vmatpush.msra.mxu0 1.0
    %2171 = vmatpush.msra.mxu0 1.0
    %2172 = vmatpush.msra.mxu0 1.0
    %2173 = vmatpush.msra.mxu0 1.0
    %2174 = vmatpush.msra.mxu0 1.0
    %2175 = vmatpush.msra.mxu0 1.0
    %2176 = vmatpush.msra.mxu0 1.0
    %2177 = vmatpush.msra.mxu0 1.0
    %2178 = vmatmul.f32.gmra.mxu0 %v2115
    %v2179 = vpop.f32.mrf.mxu0
    %v2180 = vadd.f32 0.0, %v2179
    %2181 = vmatmul.f32.gmra.mxu0 %v2118
    %v2182 = vpop.f32.mrf.mxu0
    %v2183 = vadd.f32 0.0, %v2182
    %2184 = vmatmul.f32.gmra.mxu0 %v2121
    %v2185 = vpop.f32.mrf.mxu0
    %v2186 = vadd.f32 0.0, %v2185
    %2187 = vmatmul.f32.gmra.mxu0 %v2124
    %v2188 = vpop.f32.mrf.mxu0
    %v2189 = vadd.f32 0.0, %v2188
    %2190 = vmatmul.f32.gmra.mxu0 %v2127
    %v2191 = vpop.f32.mrf.mxu0
    %v2192 = vadd.f32 0.0, %v2191
    %2193 = vmatmul.f32.gmra.mxu0 %v2130
    %v2194 = vpop.f32.mrf.mxu0
    %v2195 = vadd.f32 0.0, %v2194
    %2196 = vmatmul.f32.gmra.mxu0 %v2133
    %v2197 = vpop.f32.mrf.mxu0
    %v2198 = vadd.f32 0.0, %v2197
    %2199 = vmatmul.f32.gmra.mxu0 %v2136
    %v2200 = vpop.f32.mrf.mxu0
    %v2201 = vadd.f32 0.0, %v2200
    %2202 = vmatmul.f32.gmra.mxu0 %v2139
    %v2203 = vpop.f32.mrf.mxu0
    %v2204 = vadd.f32 0.0, %v2203
    %2205 = vmatmul.f32.gmra.mxu0 %v2142
    %v2206 = vpop.f32.mrf.mxu0
    %v2207 = vadd.f32 0.0, %v2206
    %2208 = vmatmul.f32.gmra.mxu0 %v2145
    %v2209 = vpop.f32.mrf.mxu0
    %v2210 = vadd.f32 0.0, %v2209
    %2211 = vmatmul.f32.gmra.mxu0 %v2148
    %v2212 = vpop.f32.mrf.mxu0
    %v2213 = vadd.f32 0.0, %v2212
    %2214 = vmatmul.f32.gmra.mxu0 %v2151
    %v2215 = vpop.f32.mrf.mxu0
    %v2216 = vadd.f32 0.0, %v2215
    %2217 = vmatmul.f32.gmra.mxu0 %v2154
    %v2218 = vpop.f32.mrf.mxu0
    %v2219 = vadd.f32 0.0, %v2218
    %2220 = vmatmul.f32.gmra.mxu0 %v2157
    %v2221 = vpop.f32.mrf.mxu0
    %v2222 = vadd.f32 0.0, %v2221
    %2223 = vmatmul.f32.gmra.mxu0 %v2160
    %v2224 = vpop.f32.mrf.mxu0
    %v2225 = vadd.f32 0.0, %v2224
    %2226 = vdwg.mxu0
    %v2227 = vmul.f32 %v2180, 1.442695
    %v2228 = vpow.pop %v2227
    %v2229 = vmul.f32 %v2183, 1.442695
    %v2230 = vpow.pop %v2229
    %v2231 = vmul.f32 %v2186, 1.442695
    %v2232 = vpow.pop %v2231
    %v2233 = vmul.f32 %v2189, 1.442695
    %v2234 = vpow.pop %v2233
    %v2235 = vmul.f32 %v2192, 1.442695
    %v2236 = vpow.pop %v2235
    %v2237 = vmul.f32 %v2195, 1.442695
    %v2238 = vpow.pop %v2237
    %v2239 = vmul.f32 %v2198, 1.442695
    %v2240 = vpow.pop %v2239
    %v2241 = vmul.f32 %v2201, 1.442695
    %v2242 = vpow.pop %v2241
    %v2243 = vmul.f32 %v2204, 1.442695
    %v2244 = vpow.pop %v2243
    %v2245 = vmul.f32 %v2207, 1.442695
    %v2246 = vpow.pop %v2245
    %v2247 = vmul.f32 %v2210, 1.442695
    %v2248 = vpow.pop %v2247
    %v2249 = vmul.f32 %v2213, 1.442695
    %v2250 = vpow.pop %v2249
    %v2251 = vmul.f32 %v2216, 1.442695
    %v2252 = vpow.pop %v2251
    %v2253 = vmul.f32 %v2219, 1.442695
    %v2254 = vpow.pop %v2253
    %v2255 = vmul.f32 %v2222, 1.442695
    %v2256 = vpow.pop %v2255
    %v2257 = vmul.f32 %v2225, 1.442695
    %v2258 = vpow.pop %v2257
    %v2259 = vmul.f32 %v2228, %v1223
    %v2260 = vmul.f32 %v2230, %v1224
    %v2261 = vmul.f32 %v2232, %v1225
    %v2262 = vmul.f32 %v2234, %v1226
    %v2263 = vmul.f32 %v2236, %v1227
    %v2264 = vmul.f32 %v2238, %v1228
    %v2265 = vmul.f32 %v2240, %v1229
    %v2266 = vmul.f32 %v2242, %v1230
    %v2267 = vmul.f32 %v2244, %v1433
    %v2268 = vmul.f32 %v2246, %v1434
    %v2269 = vmul.f32 %v2248, %v1435
    %v2270 = vmul.f32 %v2250, %v1436
    %v2271 = vmul.f32 %v2252, %v1437
    %v2272 = vmul.f32 %v2254, %v1438
    %v2273 = vmul.f32 %v2256, %v1439
    %v2274 = vmul.f32 %v2258, %v1440
    %v2275 = vadd.f32 %v2259, %v1352
    %v2276 = vadd.f32 %v2260, %v1353
    %v2277 = vadd.f32 %v2261, %v1354
    %v2278 = vadd.f32 %v2262, %v1355
    %v2279 = vadd.f32 %v2263, %v1356
    %v2280 = vadd.f32 %v2264, %v1357
    %v2281 = vadd.f32 %v2265, %v1358
    %v2282 = vadd.f32 %v2266, %v1359
    %v2283 = vadd.f32 %v2267, %v1561
    %v2284 = vadd.f32 %v2268, %v1562
    %v2285 = vadd.f32 %v2269, %v1563
    %v2286 = vadd.f32 %v2270, %v1564
    %v2287 = vadd.f32 %v2271, %v1565
    %v2288 = vadd.f32 %v2272, %v1566
    %v2289 = vadd.f32 %v2273, %v1567
    %v2290 = vadd.f32 %v2274, %v1568
    %v2291 = vld [vmem:[%s51] sm:$0xff]
    %v2292 = vld [vmem:[%s51 + $0x8] sm:$0xff]
    %v2293 = vld [vmem:[%s51 + $0x10] sm:$0xff]
    %v2294 = vld [vmem:[%s51 + $0x18] sm:$0xff]
    %v2295 = vld [vmem:[%s51 + $0x20] sm:$0xff]
    %v2296 = vld [vmem:[%s51 + $0x28] sm:$0xff]
    %v2297 = vld [vmem:[%s51 + $0x30] sm:$0xff]
    %v2298 = vld [vmem:[%s51 + $0x38] sm:$0xff]
    %v2300 = vsel %vm332, %v2275, 0
    %v2303 = vsel %vm332, %v2276, 0
    %v2306 = vsel %vm332, %v2277, 0
    %v2309 = vsel %vm332, %v2278, 0
    %v2312 = vsel %vm332, %v2279, 0
    %v2315 = vsel %vm332, %v2280, 0
    %v2318 = vsel %vm332, %v2281, 0
    %v2321 = vsel %vm332, %v2282, 0
    %v2324 = vsel %vm332, %v2283, 0
    %v2327 = vsel %vm332, %v2284, 0
    %v2330 = vsel %vm332, %v2285, 0
    %v2333 = vsel %vm332, %v2286, 0
    %v2336 = vsel %vm332, %v2287, 0
    %v2339 = vsel %vm332, %v2288, 0
    %v2342 = vsel %vm332, %v2289, 0
    %v2345 = vsel %vm332, %v2290, 0
    %2347 = vmatpush.msra.mxu0 0.0
    %2348 = vmatpush.msra.mxu0 0.0
    %2349 = vmatpush.msra.mxu0 0.0
    %2350 = vmatpush.msra.mxu0 0.0
    %2351 = vmatpush.msra.mxu0 0.0
    %2352 = vmatpush.msra.mxu0 0.0
    %2353 = vmatpush.msra.mxu0 0.0
    %2354 = vmatpush.msra.mxu0 0.0
    %2355 = vmatpush.msra.mxu0 %v2298
    %2356 = vmatpush.msra.mxu0 %v2297
    %2357 = vmatpush.msra.mxu0 %v2296
    %2358 = vmatpush.msra.mxu0 %v2295
    %2359 = vmatpush.msra.mxu0 %v2294
    %2360 = vmatpush.msra.mxu0 %v2293
    %2361 = vmatpush.msra.mxu0 %v2292
    %2362 = vmatpush.msra.mxu0 %v2291
    %2363 = vmatmul.f32.gmra.mxu0 %v2300
    %v2364 = vpop.f32.mrf.mxu0
    %v2365 = vadd.f32 0.0, %v2364
    %2366 = vmatmul.f32.gmra.mxu0 %v2303
    %v2367 = vpop.f32.mrf.mxu0
    %v2368 = vadd.f32 0.0, %v2367
    %2369 = vmatmul.f32.gmra.mxu0 %v2306
    %v2370 = vpop.f32.mrf.mxu0
    %v2371 = vadd.f32 0.0, %v2370
    %2372 = vmatmul.f32.gmra.mxu0 %v2309
    %v2373 = vpop.f32.mrf.mxu0
    %v2374 = vadd.f32 0.0, %v2373
    %2375 = vmatmul.f32.gmra.mxu0 %v2312
    %v2376 = vpop.f32.mrf.mxu0
    %v2377 = vadd.f32 0.0, %v2376
    %2378 = vmatmul.f32.gmra.mxu0 %v2315
    %v2379 = vpop.f32.mrf.mxu0
    %v2380 = vadd.f32 0.0, %v2379
    %2381 = vmatmul.f32.gmra.mxu0 %v2318
    %v2382 = vpop.f32.mrf.mxu0
    %v2383 = vadd.f32 0.0, %v2382
    %2384 = vmatmul.f32.gmra.mxu0 %v2321
    %v2385 = vpop.f32.mrf.mxu0
    %v2386 = vadd.f32 0.0, %v2385
    %2387 = vmatmul.f32.gmra.mxu0 %v2324
    %v2388 = vpop.f32.mrf.mxu0
    %v2389 = vadd.f32 0.0, %v2388
    %2390 = vmatmul.f32.gmra.mxu0 %v2327
    %v2391 = vpop.f32.mrf.mxu0
    %v2392 = vadd.f32 0.0, %v2391
    %2393 = vmatmul.f32.gmra.mxu0 %v2330
    %v2394 = vpop.f32.mrf.mxu0
    %v2395 = vadd.f32 0.0, %v2394
    %2396 = vmatmul.f32.gmra.mxu0 %v2333
    %v2397 = vpop.f32.mrf.mxu0
    %v2398 = vadd.f32 0.0, %v2397
    %2399 = vmatmul.f32.gmra.mxu0 %v2336
    %v2400 = vpop.f32.mrf.mxu0
    %v2401 = vadd.f32 0.0, %v2400
    %2402 = vmatmul.f32.gmra.mxu0 %v2339
    %v2403 = vpop.f32.mrf.mxu0
    %v2404 = vadd.f32 0.0, %v2403
    %2405 = vmatmul.f32.gmra.mxu0 %v2342
    %v2406 = vpop.f32.mrf.mxu0
    %v2407 = vadd.f32 0.0, %v2406
    %2408 = vmatmul.f32.gmra.mxu0 %v2345
    %v2409 = vpop.f32.mrf.mxu0
    %v2410 = vadd.f32 0.0, %v2409
    %2411 = vdwg.mxu0
    %2412 = vst.msk [vmem:[#allocation23] sm:$0xff] %vm1063, %v2365
    %2413 = vst.msk [vmem:[#allocation23 + $0x8] sm:$0xff] %vm1063, %v2368
    %2414 = vst.msk [vmem:[#allocation23 + $0x10] sm:$0xff] %vm1063, %v2371
    %2415 = vst.msk [vmem:[#allocation23 + $0x18] sm:$0xff] %vm1063, %v2374
    %2416 = vst.msk [vmem:[#allocation23 + $0x20] sm:$0xff] %vm1063, %v2377
    %2417 = vst.msk [vmem:[#allocation23 + $0x28] sm:$0xff] %vm1063, %v2380
    %2418 = vst.msk [vmem:[#allocation23 + $0x30] sm:$0xff] %vm1063, %v2383
    %2419 = vst.msk [vmem:[#allocation23 + $0x38] sm:$0xff] %vm1063, %v2386
    %2420 = vst.msk [vmem:[#allocation23 + $0x40] sm:$0xff] %vm1063, %v2389
    %2421 = vst.msk [vmem:[#allocation23 + $0x48] sm:$0xff] %vm1063, %v2392
    %2422 = vst.msk [vmem:[#allocation23 + $0x50] sm:$0xff] %vm1063, %v2395
    %2423 = vst.msk [vmem:[#allocation23 + $0x58] sm:$0xff] %vm1063, %v2398
    %2424 = vst.msk [vmem:[#allocation23 + $0x60] sm:$0xff] %vm1063, %v2401
    %2425 = vst.msk [vmem:[#allocation23 + $0x68] sm:$0xff] %vm1063, %v2404
    %2426 = vst.msk [vmem:[#allocation23 + $0x70] sm:$0xff] %vm1063, %v2407
    %2427 = vst.msk [vmem:[#allocation23 + $0x78] sm:$0xff] %vm1063, %v2410
    %v2428 = vld [vmem:[%s57] sm:$0xff]
    %v2429 = vld [vmem:[%s57 + $0x8] sm:$0xff]
    %v2430 = vld [vmem:[%s57 + $0x10] sm:$0xff]
    %v2431 = vld [vmem:[%s57 + $0x18] sm:$0xff]
    %v2432 = vld [vmem:[%s57 + $0x20] sm:$0xff]
    %v2433 = vld [vmem:[%s57 + $0x28] sm:$0xff]
    %v2434 = vld [vmem:[%s57 + $0x30] sm:$0xff]
    %v2435 = vld [vmem:[%s57 + $0x38] sm:$0xff]
    %v2436 = vld [vmem:[%s59] sm:$0xf]
    %v2438 = vsel %vm332, %v1951, 0
    %v2441 = vsel %vm332, %v1952, 0
    %2443 = vmatpush.msra.mxu0 0.0
    %2444 = vmatpush.msra.mxu0 0.0
    %2445 = vmatpush.msra.mxu0 0.0
    %2446 = vmatpush.msra.mxu0 0.0
    %2447 = vmatpush.msra.mxu0 0.0
    %2448 = vmatpush.msra.mxu0 0.0
    %2449 = vmatpush.msra.mxu0 0.0
    %2450 = vmatpush.msra.mxu0 0.0
    %2451 = vmatpush.msra.mxu0 %v2435
    %2452 = vmatpush.msra.mxu0 %v2434
    %2453 = vmatpush.msra.mxu0 %v2433
    %2454 = vmatpush.msra.mxu0 %v2432
    %2455 = vmatpush.msra.mxu0 %v2431
    %2456 = vmatpush.msra.mxu0 %v2430
    %2457 = vmatpush.msra.mxu0 %v2429
    %2458 = vmatpush.msra.mxu0 %v2428
    %2459 = vmatmul.f32.gmra.mxu0 %v2438
    %v2460 = vpop.f32.mrf.mxu0
    %v2461 = vadd.f32 0.0, %v2460
    %2462 = vmatmul.f32.gmra.mxu0 %v2441
    %v2463 = vpop.f32.mrf.mxu0
    %v2464 = vadd.f32 0.0, %v2463
    %2465 = vdwg.mxu0
    %vm2466 = vcmask 31744
    %v2468 = vsel %vm2466, %v2461, 0
    %v2471 = vsel %vm2466, %v2464, 0
    %vm2473 = vcmask 1043456
    %v2475 = vsel %vm2473, %v2436, 0
    %2477 = vmatpush.msra.mxu0 0.0
    %2478 = vmatpush.msra.mxu0 0.0
    %2479 = vmatpush.msra.mxu0 0.0
    %2480 = vmatpush.msra.mxu0 0.0
    %2481 = vmatpush.msra.mxu0 0.0
    %2482 = vmatpush.msra.mxu0 0.0
    %2483 = vmatpush.msra.mxu0 0.0
    %2484 = vmatpush.msra.mxu0 0.0
    %2485 = vmatpush.msra.mxu0 0.0
    %2486 = vmatpush.msra.mxu0 0.0
    %2487 = vmatpush.msra.mxu0 0.0
    %2488 = vmatpush.msra.mxu0 0.0
    %2489 = vmatpush.msra.mxu0 0.0
    %2490 = vmatpush.msra.mxu0 0.0
    %2491 = vmatpush.msra.mxu0 0.0
    %2492 = vmatpush.msra.mxu0 %v2475
    %2493 = vmatmul.f32.gmra.mxu0 %v2468
    %v2494 = vpop.f32.mrf.mxu0
    %v2495 = vadd.f32 0.0, %v2494
    %2496 = vmatmul.f32.gmra.mxu0 %v2471
    %v2497 = vpop.f32.mrf.mxu0
    %v2498 = vadd.f32 0.0, %v2497
    %2499 = vdwg.mxu0
    %v2500 = vsub.f32 %v1951, %v2495
    %v2501 = vsub.f32 %v1952, %v2498
    %v2502 = vmul.f32 %v2500, %v2500
    %v2503 = vmul.f32 %v2501, %v2501
    %v2505 = vsel %vm332, %v2502, 0
    %v2508 = vsel %vm332, %v2503, 0
    %2510 = vmatpush.msra.mxu0 0.0
    %2511 = vmatpush.msra.mxu0 0.0
    %2512 = vmatpush.msra.mxu0 0.0
    %2513 = vmatpush.msra.mxu0 0.0
    %2514 = vmatpush.msra.mxu0 0.0
    %2515 = vmatpush.msra.mxu0 0.0
    %2516 = vmatpush.msra.mxu0 0.0
    %2517 = vmatpush.msra.mxu0 0.0
    %2518 = vmatpush.msra.mxu0 %v2435
    %2519 = vmatpush.msra.mxu0 %v2434
    %2520 = vmatpush.msra.mxu0 %v2433
    %2521 = vmatpush.msra.mxu0 %v2432
    %2522 = vmatpush.msra.mxu0 %v2431
    %2523 = vmatpush.msra.mxu0 %v2430
    %2524 = vmatpush.msra.mxu0 %v2429
    %2525 = vmatpush.msra.mxu0 %v2428
    %2526 = vmatmul.f32.gmra.mxu0 %v2505
    %v2527 = vpop.f32.mrf.mxu0
    %v2528 = vadd.f32 0.0, %v2527
    %2529 = vmatmul.f32.gmra.mxu0 %v2508
    %v2530 = vpop.f32.mrf.mxu0
    %v2531 = vadd.f32 0.0, %v2530
    %2532 = vdwg.mxu0
    %v2534 = vsel %vm2466, %v2528, 0
    %v2537 = vsel %vm2466, %v2531, 0
    %2539 = vmatpush.msra.mxu0 0.0
    %2540 = vmatpush.msra.mxu0 0.0
    %2541 = vmatpush.msra.mxu0 0.0
    %2542 = vmatpush.msra.mxu0 0.0
    %2543 = vmatpush.msra.mxu0 0.0
    %2544 = vmatpush.msra.mxu0 0.0
    %2545 = vmatpush.msra.mxu0 0.0
    %2546 = vmatpush.msra.mxu0 0.0
    %2547 = vmatpush.msra.mxu0 0.0
    %2548 = vmatpush.msra.mxu0 0.0
    %2549 = vmatpush.msra.mxu0 0.0
    %2550 = vmatpush.msra.mxu0 0.0
    %2551 = vmatpush.msra.mxu0 0.0
    %2552 = vmatpush.msra.mxu0 0.0
    %2553 = vmatpush.msra.mxu0 0.0
    %2554 = vmatpush.msra.mxu0 %v2475
    %2555 = vmatmul.f32.gmra.mxu0 %v2534
    %v2556 = vpop.f32.mrf.mxu0
    %v2557 = vadd.f32 0.00064, %v2556
    %2558 = vmatmul.f32.gmra.mxu0 %v2537
    %v2559 = vpop.f32.mrf.mxu0
    %v2560 = vadd.f32 0.00064, %v2559
    %2561 = vdwg.mxu0
    %v2562 = vrsqrt.pop %v2557
    %v2563 = vmul.f32 %v2562, %v2557
    %v2564 = vmul.f32 %v2563, %v2562
    %v2565 = vmul.f32 0.5, %v2564
    %v2566 = vsub.f32 1.5, %v2565
    %v2567 = vmul.f32 %v2562, %v2566
    %vm2568 = vweird.f32 %v2557
    %vm2569 = vweird.f32 %v2562
    %vm2570 = vmor %vm2568, %vm2569
    %v2571 = vsel %vm2570, %v2562, %v2567
    %v2572 = vrsqrt.pop %v2560
    %v2573 = vmul.f32 %v2572, %v2560
    %v2574 = vmul.f32 %v2573, %v2572
    %v2575 = vmul.f32 0.5, %v2574
    %v2576 = vsub.f32 1.5, %v2575
    %v2577 = vmul.f32 %v2572, %v2576
    %vm2578 = vweird.f32 %v2560
    %vm2579 = vweird.f32 %v2572
    %vm2580 = vmor %vm2578, %vm2579
    %v2581 = vsel %vm2580, %v2572, %v2577
    %v2582 = vmul.f32 %v2500, %v2571
    %v2583 = vmul.f32 %v2501, %v2581
    %v2584 = vld [vmem:[%s53] sm:$0x1]
    %v2586 = vperm.slane %v2584, 0
    %v2588 = vmul.f32 %v2582, %v2586
    %v2589 = vmul.f32 %v2583, %v2586
    %v2590 = vld [vmem:[%s55] sm:$0x1]
    %v2592 = vperm.slane %v2590, 0
    %v2594 = vadd.f32 %v2588, %v2592
    %v2595 = vadd.f32 %v2589, %v2592
    %2598 = vrot.lane.b32.xlu0 %v926, 64
    %v2599 = vpop.permute.xlu0 %2598
    %2600 = vrot.lane.b32.xlu0 %v927, 64
    %v2601 = vpop.permute.xlu0 %2600
    %v2604 = vmul.f32 %v2594, %v2599
    %v2605 = vmul.f32 %v2595, %v2601
    %v2606 = vld [vmem:[#allocation14] sm:$0xff]
    %v2607 = vld [vmem:[#allocation14 + $0x8] sm:$0xff]
    %v2608 = vld [vmem:[#allocation14 + $0x10] sm:$0xff]
    %v2609 = vld [vmem:[#allocation14 + $0x18] sm:$0xff]
    %v2610 = vld [vmem:[#allocation14 + $0x20] sm:$0xff]
    %v2611 = vld [vmem:[#allocation14 + $0x28] sm:$0xff]
    %v2612 = vld [vmem:[#allocation14 + $0x30] sm:$0xff]
    %v2613 = vld [vmem:[#allocation14 + $0x38] sm:$0xff]
    %v2615 = vsel %vm332, %v2604, 0
    %v2618 = vsel %vm332, %v2605, 0
    %2620 = vmatpush.msra.mxu0 0.0
    %2621 = vmatpush.msra.mxu0 0.0
    %2622 = vmatpush.msra.mxu0 0.0
    %2623 = vmatpush.msra.mxu0 0.0
    %2624 = vmatpush.msra.mxu0 0.0
    %2625 = vmatpush.msra.mxu0 0.0
    %2626 = vmatpush.msra.mxu0 0.0
    %2627 = vmatpush.msra.mxu0 0.0
    %2628 = vmatpush.msra.mxu0 %v2613
    %2629 = vmatpush.msra.mxu0 %v2612
    %2630 = vmatpush.msra.mxu0 %v2611
    %2631 = vmatpush.msra.mxu0 %v2610
    %2632 = vmatpush.msra.mxu0 %v2609
    %2633 = vmatpush.msra.mxu0 %v2608
    %2634 = vmatpush.msra.mxu0 %v2607
    %2635 = vmatpush.msra.mxu0 %v2606
    %2636 = vmatmul.f32.gmra.mxu0 %v2615
    %v2637 = vpop.f32.mrf.mxu0
    %v2638 = vadd.f32 0.0, %v2637
    %2639 = vmatmul.f32.gmra.mxu0 %v2618
    %v2640 = vpop.f32.mrf.mxu0
    %v2641 = vadd.f32 0.0, %v2640
    %2642 = vdwg.mxu0
    %v2643 = vadd.f32 %v320, %v2638
    %v2644 = vadd.f32 %v321, %v2641
    %v2645 = vld [vmem:[%s63] sm:$0x1]
    %v2646 = vld [vmem:[%s65] sm:$0x1]
    %v2647 = vsel %vm332, %v2643, 0.0
    %2648 = vadd.xlane.f32.xlu0 %v2647
    %v2649 = vpop.xlane.xlu0 %2648
    %v2650 = vsel %vm332, %v2644, 0.0
    %2651 = vadd.xlane.f32.xlu0 %v2650
    %v2652 = vpop.xlane.xlu0 %2651
    %v2653 = vmul.f32 %v2649, %v345
    %v2654 = vmul.f32 %v2652, %v345
    %v2655 = vsub.f32 %v2643, %v2653
    %v2656 = vsub.f32 %v2644, %v2654
    %v2657 = vmul.f32 %v2655, %v2655
    %v2658 = vmul.f32 %v2656, %v2656
    %v2659 = vsel %vm332, %v2657, 0.0
    %2660 = vadd.xlane.f32.xlu0 %v2659
    %v2661 = vpop.xlane.xlu0 %2660
    %v2662 = vsel %vm332, %v2658, 0.0
    %2663 = vadd.xlane.f32.xlu0 %v2662
    %v2664 = vpop.xlane.xlu0 %2663
    %v2665 = vmul.f32 %v2661, %v345
    %v2666 = vmul.f32 %v2664, %v345
    %v2667 = vadd.f32 %v2665, 1e-05
    %v2668 = vadd.f32 %v2666, 1e-05
    %v2669 = vrsqrt.pop %v2667
    %v2670 = vmul.f32 %v2669, %v2667
    %v2671 = vmul.f32 %v2670, %v2669
    %v2672 = vmul.f32 0.5, %v2671
    %v2673 = vsub.f32 1.5, %v2672
    %v2674 = vmul.f32 %v2669, %v2673
    %vm2675 = vweird.f32 %v2667
    %vm2676 = vweird.f32 %v2669
    %vm2677 = vmor %vm2675, %vm2676
    %v2678 = vsel %vm2677, %v2669, %v2674
    %v2679 = vrsqrt.pop %v2668
    %v2680 = vmul.f32 %v2679, %v2668
    %v2681 = vmul.f32 %v2680, %v2679
    %v2682 = vmul.f32 0.5, %v2681
    %v2683 = vsub.f32 1.5, %v2682
    %v2684 = vmul.f32 %v2679, %v2683
    %vm2685 = vweird.f32 %v2668
    %vm2686 = vweird.f32 %v2679
    %vm2687 = vmor %vm2685, %vm2686
    %v2688 = vsel %vm2687, %v2679, %v2684
    %v2689 = vmul.f32 %v2655, %v2678
    %v2690 = vmul.f32 %v2656, %v2688
    %v2692 = vperm.slane %v2645, 0
    %v2694 = vmul.f32 %v2689, %v2692
    %v2695 = vmul.f32 %v2690, %v2692
    %v2697 = vperm.slane %v2646, 0
    %v2699 = vadd.f32 %v2694, %v2697
    %v2700 = vadd.f32 %v2695, %v2697
    %v2701 = vld [vmem:[%s5] sm:$0x3]
    %v2703 = vrot.slane %v2699, 7
    %v2705 = vsel %vm398, %v2701, %v2703
    %v2707 = vrot.slane %v2701, 1
    %v2710 = vrot.slane %v2700, 7
    %v2712 = vsel %vm398, %v2707, %v2710
    %v2713 = vsub.f32 %v2705, %v2699
    %v2714 = vsub.f32 %v2712, %v2700
    %v2715 = vld [vmem:[%s67] sm:$0x3]
    %v2716 = vperm.slane %v2715, 0
    %v2717 = vmul.f32 %v2713, %v2716
    %v2718 = vmul.f32 %v2714, %v2716
    %v2719 = vadd.f32 %v2699, %v2717
    %v2720 = vadd.f32 %v2700, %v2718
    %v2721 = vperm.slane %v2715, 1
    %v2722 = vmul.f32 %v2713, %v2721
    %v2723 = vmul.f32 %v2714, %v2721
    %v2724 = vadd.f32 %v2699, %v2722
    %v2725 = vadd.f32 %v2700, %v2723
    %v2726 = vld [vmem:[#allocation16] sm:$0xff]
    %v2727 = vld [vmem:[#allocation16 + $0x8] sm:$0xff]
    %v2728 = vld [vmem:[#allocation16 + $0x10] sm:$0xff]
    %v2729 = vld [vmem:[#allocation16 + $0x18] sm:$0xff]
    %v2730 = vld [vmem:[#allocation16 + $0x20] sm:$0xff]
    %v2731 = vld [vmem:[#allocation16 + $0x28] sm:$0xff]
    %v2732 = vld [vmem:[#allocation16 + $0x30] sm:$0xff]
    %v2733 = vld [vmem:[#allocation16 + $0x38] sm:$0xff]
    %v2734 = vld [vmem:[#allocation16 + $0x40] sm:$0xff]
    %v2735 = vld [vmem:[#allocation16 + $0x48] sm:$0xff]
    %v2736 = vld [vmem:[#allocation16 + $0x50] sm:$0xff]
    %v2737 = vld [vmem:[#allocation16 + $0x58] sm:$0xff]
    %v2738 = vld [vmem:[#allocation16 + $0x60] sm:$0xff]
    %v2739 = vld [vmem:[#allocation16 + $0x68] sm:$0xff]
    %v2740 = vld [vmem:[#allocation16 + $0x70] sm:$0xff]
    %v2741 = vld [vmem:[#allocation16 + $0x78] sm:$0xff]
    %v2743 = vsel %vm332, %v2719, 0
    %v2746 = vsel %vm332, %v2720, 0
    %2748 = vmatpush.msra.mxu0 0.0
    %2749 = vmatpush.msra.mxu0 0.0
    %2750 = vmatpush.msra.mxu0 0.0
    %2751 = vmatpush.msra.mxu0 0.0
    %2752 = vmatpush.msra.mxu0 0.0
    %2753 = vmatpush.msra.mxu0 0.0
    %2754 = vmatpush.msra.mxu0 0.0
    %2755 = vmatpush.msra.mxu0 0.0
    %2756 = vmatpush.msra.mxu0 %v2740
    %2757 = vmatpush.msra.mxu0 %v2738
    %2758 = vmatpush.msra.mxu0 %v2736
    %2759 = vmatpush.msra.mxu0 %v2734
    %2760 = vmatpush.msra.mxu0 %v2732
    %2761 = vmatpush.msra.mxu0 %v2730
    %2762 = vmatpush.msra.mxu0 %v2728
    %2763 = vmatpush.msra.mxu0 %v2726
    %2764 = vmatmul.f32.gmra.mxu0 %v2743
    %v2765 = vpop.f32.mrf.mxu0
    %v2766 = vadd.f32 0.0, %v2765
    %2767 = vmatmul.f32.gmra.mxu0 %v2746
    %v2768 = vpop.f32.mrf.mxu0
    %v2769 = vadd.f32 0.0, %v2768
    %2770 = vdwg.mxu0
    %2771 = vmatpush.msra.mxu0 0.0
    %2772 = vmatpush.msra.mxu0 0.0
    %2773 = vmatpush.msra.mxu0 0.0
    %2774 = vmatpush.msra.mxu0 0.0
    %2775 = vmatpush.msra.mxu0 0.0
    %2776 = vmatpush.msra.mxu0 0.0
    %2777 = vmatpush.msra.mxu0 0.0
    %2778 = vmatpush.msra.mxu0 0.0
    %2779 = vmatpush.msra.mxu0 %v2741
    %2780 = vmatpush.msra.mxu0 %v2739
    %2781 = vmatpush.msra.mxu0 %v2737
    %2782 = vmatpush.msra.mxu0 %v2735
    %2783 = vmatpush.msra.mxu0 %v2733
    %2784 = vmatpush.msra.mxu0 %v2731
    %2785 = vmatpush.msra.mxu0 %v2729
    %2786 = vmatpush.msra.mxu0 %v2727
    %2787 = vmatmul.f32.gmra.mxu0 %v2743
    %v2788 = vpop.f32.mrf.mxu0
    %v2789 = vadd.f32 0.0, %v2788
    %2790 = vmatmul.f32.gmra.mxu0 %v2746
    %v2791 = vpop.f32.mrf.mxu0
    %v2792 = vadd.f32 0.0, %v2791
    %2793 = vdwg.mxu0
    %v2794 = vmax.f32 %v2766, 0.0
    %v2795 = vmax.f32 %v2789, 0.0
    %v2796 = vmax.f32 %v2769, 0.0
    %v2797 = vmax.f32 %v2792, 0.0
    %v2798 = vmul.f32 %v2794, %v2794
    %v2799 = vmul.f32 %v2795, %v2795
    %v2800 = vmul.f32 %v2796, %v2796
    %v2801 = vmul.f32 %v2797, %v2797
    %v2802 = vld [vmem:[%s71] sm:$0xff]
    %v2803 = vld [vmem:[%s71 + $0x8] sm:$0xff]
    %v2804 = vld [vmem:[%s71 + $0x10] sm:$0xff]
    %v2805 = vld [vmem:[%s71 + $0x18] sm:$0xff]
    %v2806 = vld [vmem:[%s71 + $0x20] sm:$0xff]
    %v2807 = vld [vmem:[%s71 + $0x28] sm:$0xff]
    %v2808 = vld [vmem:[%s71 + $0x30] sm:$0xff]
    %v2809 = vld [vmem:[%s71 + $0x38] sm:$0xff]
    %v2810 = vld [vmem:[%s71 + $0x40] sm:$0xff]
    %v2811 = vld [vmem:[%s71 + $0x48] sm:$0xff]
    %v2812 = vld [vmem:[%s71 + $0x50] sm:$0xff]
    %v2813 = vld [vmem:[%s71 + $0x58] sm:$0xff]
    %v2814 = vld [vmem:[%s71 + $0x60] sm:$0xff]
    %v2815 = vld [vmem:[%s71 + $0x68] sm:$0xff]
    %v2816 = vld [vmem:[%s71 + $0x70] sm:$0xff]
    %v2817 = vld [vmem:[%s71 + $0x78] sm:$0xff]
    %v2818 = vld [vmem:[%s71 + $0x80] sm:$0xff]
    %v2819 = vld [vmem:[%s71 + $0x88] sm:$0xff]
    %v2820 = vld [vmem:[%s71 + $0x90] sm:$0xff]
    %v2821 = vld [vmem:[%s71 + $0x98] sm:$0xff]
    %v2822 = vld [vmem:[%s71 + $0xa0] sm:$0xff]
    %v2823 = vld [vmem:[%s71 + $0xa8] sm:$0xff]
    %v2824 = vld [vmem:[%s71 + $0xb0] sm:$0xff]
    %v2825 = vld [vmem:[%s71 + $0xb8] sm:$0xff]
    %v2826 = vld [vmem:[%s71 + $0xc0] sm:$0xff]
    %v2827 = vld [vmem:[%s71 + $0xc8] sm:$0xff]
    %v2828 = vld [vmem:[%s71 + $0xd0] sm:$0xff]
    %v2829 = vld [vmem:[%s71 + $0xd8] sm:$0xff]
    %vm2830 = vcmask 785408
    %v2832 = vsel %vm2830, %v2799, 0
    %v2835 = vsel %vm2830, %v2801, 0
    %2837 = vmatpush.msra.mxu0 %v2817
    %2838 = vmatpush.msra.mxu0 %v2816
    %2839 = vmatpush.msra.mxu0 %v2815
    %2840 = vmatpush.msra.mxu0 %v2814
    %2841 = vmatpush.msra.mxu0 %v2813
    %2842 = vmatpush.msra.mxu0 %v2812
    %2843 = vmatpush.msra.mxu0 %v2811
    %2844 = vmatpush.msra.mxu0 %v2810
    %2845 = vmatpush.msra.mxu0 %v2809
    %2846 = vmatpush.msra.mxu0 %v2808
    %2847 = vmatpush.msra.mxu0 %v2807
    %2848 = vmatpush.msra.mxu0 %v2806
    %2849 = vmatpush.msra.mxu0 %v2805
    %2850 = vmatpush.msra.mxu0 %v2804
    %2851 = vmatpush.msra.mxu0 %v2803
    %2852 = vmatpush.msra.mxu0 %v2802
    %2853 = vmatmul.f32.gmra.mxu0 %v2798
    %v2854 = vpop.f32.mrf.mxu0
    %v2855 = vadd.f32 0.0, %v2854
    %2856 = vmatmul.f32.gmra.mxu0 %v2800
    %v2857 = vpop.f32.mrf.mxu0
    %v2858 = vadd.f32 0.0, %v2857
    %2859 = vdwg.mxu0
    %2860 = vmatpush.msra.mxu0 0.0
    %2861 = vmatpush.msra.mxu0 0.0
    %2862 = vmatpush.msra.mxu0 0.0
    %2863 = vmatpush.msra.mxu0 0.0
    %2864 = vmatpush.msra.mxu0 %v2829
    %2865 = vmatpush.msra.mxu0 %v2828
    %2866 = vmatpush.msra.mxu0 %v2827
    %2867 = vmatpush.msra.mxu0 %v2826
    %2868 = vmatpush.msra.mxu0 %v2825
    %2869 = vmatpush.msra.mxu0 %v2824
    %2870 = vmatpush.msra.mxu0 %v2823
    %2871 = vmatpush.msra.mxu0 %v2822
    %2872 = vmatpush.msra.mxu0 %v2821
    %2873 = vmatpush.msra.mxu0 %v2820
    %2874 = vmatpush.msra.mxu0 %v2819
    %2875 = vmatpush.msra.mxu0 %v2818
    %2876 = vmatmul.f32.gmra.mxu0 %v2832
    %v2877 = vpop.f32.mrf.mxu0
    %v2878 = vadd.f32 %v2855, %v2877
    %2879 = vmatmul.f32.gmra.mxu0 %v2835
    %v2880 = vpop.f32.mrf.mxu0
    %v2881 = vadd.f32 %v2858, %v2880
    %2882 = vdwg.mxu0
    %v2883 = vld [vmem:[#allocation17] sm:$0xff]
    %v2884 = vld [vmem:[#allocation17 + $0x8] sm:$0xff]
    %v2885 = vld [vmem:[#allocation17 + $0x10] sm:$0xff]
    %v2886 = vld [vmem:[#allocation17 + $0x18] sm:$0xff]
    %v2887 = vld [vmem:[#allocation17 + $0x20] sm:$0xff]
    %v2888 = vld [vmem:[#allocation17 + $0x28] sm:$0xff]
    %v2889 = vld [vmem:[#allocation17 + $0x30] sm:$0xff]
    %v2890 = vld [vmem:[#allocation17 + $0x38] sm:$0xff]
    %v2892 = vsel %vm332, %v2724, 0
    %v2895 = vsel %vm332, %v2725, 0
    %2897 = vmatpush.msra.mxu0 0.0
    %2898 = vmatpush.msra.mxu0 0.0
    %2899 = vmatpush.msra.mxu0 0.0
    %2900 = vmatpush.msra.mxu0 0.0
    %2901 = vmatpush.msra.mxu0 0.0
    %2902 = vmatpush.msra.mxu0 0.0
    %2903 = vmatpush.msra.mxu0 0.0
    %2904 = vmatpush.msra.mxu0 0.0
    %2905 = vmatpush.msra.mxu0 %v2890
    %2906 = vmatpush.msra.mxu0 %v2889
    %2907 = vmatpush.msra.mxu0 %v2888
    %2908 = vmatpush.msra.mxu0 %v2887
    %2909 = vmatpush.msra.mxu0 %v2886
    %2910 = vmatpush.msra.mxu0 %v2885
    %2911 = vmatpush.msra.mxu0 %v2884
    %2912 = vmatpush.msra.mxu0 %v2883
    %2913 = vmatmul.f32.gmra.mxu0 %v2892
    %v2914 = vpop.f32.mrf.mxu0
    %v2915 = vadd.f32 0.0, %v2914
    %2916 = vmatmul.f32.gmra.mxu0 %v2895
    %v2917 = vpop.f32.mrf.mxu0
    %v2918 = vadd.f32 0.0, %v2917
    %2919 = vdwg.mxu0
    %v2920 = vxor.u32 %v2915, 2147483648
    %v2921 = vxor.u32 %v2918, 2147483648
    %v2922 = vmul.f32 %v2920, 1.442695
    %v2923 = vpow.pop %v2922
    %v2924 = vmul.f32 %v2921, 1.442695
    %v2925 = vpow.pop %v2924
    %v2926 = vadd.f32 %v2923, 1.0
    %v2927 = vadd.f32 %v2925, 1.0
    %v2928 = vrcp.pop %v2926
    %v2929 = vmul.f32 %v2926, %v2928
    %v2930 = vsub.f32 1.0, %v2929
    %v2931 = vmul.f32 %v2928, %v2930
    %v2932 = vadd.f32 %v2928, %v2931
    %vm2933 = vweird.f32 %v2926
    %vm2934 = vweird.f32 %v2928
    %vm2935 = vmor %vm2933, %vm2934
    %v2936 = vsel %vm2935, %v2928, %v2932
    %v2937 = vand.u32 2147483647, %v2926
    %vm2938 = vcmp.eq.f32.partialorder %v2937, 8.507059e+37
    %v2939 = vand.u32 %v2926, 2147483648
    %v2940 = vor.u32 1.1754944e-38, %v2939
    %v2941 = vsel %vm2938, %v2940, %v2936
    %v2942 = vmul.f32 1.0, %v2941
    %v2943 = vrcp.pop %v2927
    %v2944 = vmul.f32 %v2927, %v2943
    %v2945 = vsub.f32 1.0, %v2944
    %v2946 = vmul.f32 %v2943, %v2945
    %v2947 = vadd.f32 %v2943, %v2946
    %vm2948 = vweird.f32 %v2927
    %vm2949 = vweird.f32 %v2943
    %vm2950 = vmor %vm2948, %vm2949
    %v2951 = vsel %vm2950, %v2943, %v2947
    %v2952 = vand.u32 2147483647, %v2927
    %vm2953 = vcmp.eq.f32.partialorder %v2952, 8.507059e+37
    %v2954 = vand.u32 %v2927, 2147483648
    %v2955 = vor.u32 1.1754944e-38, %v2954
    %v2956 = vsel %vm2953, %v2955, %v2951
    %v2957 = vmul.f32 1.0, %v2956
    %v2958 = vmul.f32 %v2942, %v2878
    %v2959 = vmul.f32 %v2957, %v2881
    %v2960 = vadd.f32 %v2643, %v2958
    %v2961 = vadd.f32 %v2644, %v2959
    %2962 = vst.msk [vmem:[#allocation19] sm:$0xff] %vm332, %v2960
    %2963 = vst.msk [vmem:[#allocation19 + $0x8] sm:$0xff] %vm332, %v2961
    %v2964 = vrot.slane %v393, 6
    %v2966 = vsel %vm398, %v396, %v2964
    %vm2967 = vcmask 517120
    %2968 = vst.msk [vmem:[#allocation20] sm:$0x3] %vm2967, %v2966
    %v2969 = vrot.slane %v2700, 6
    %v2971 = vsel %vm398, %v2703, %v2969
    %2972 = vst.msk [vmem:[#allocation22] sm:$0x3] %vm2967, %v2971
    // Predicated region
    $region190: #{rwkv6_block.1} parent=1 // pred_check
      _
    $region191: #{rwkv6_block.1} parent=1 // pred_check_branch
      %2974 = sbr.rel (0) target = $region193
    $region192: #{rwkv6_block.1} parent=1 // pred_region
      %2976 = vsyncadd [#allocation4], 0
      %s2977 = sshll.u32 [#allocation19], 4
      %s2978 = int_to_ptr.vmem [resolvable:$true] %s2977
      %s2979 = sshll.u32 %s75, 4
      %s2980 = int_to_ptr.hbm [resolvable:$true] %s2979
      %2985 = dma.vmem_to_hbm [thread:$0]  %s2978, 256, %s2980, [#allocation4], 128, 128, 8
    $region193: #{rwkv6_block.1} parent=1 // pred_fallthru
      _
    // Predicated region
    $region194: #{rwkv6_block.1} parent=1 // pred_check
      _
    $region195: #{rwkv6_block.1} parent=1 // pred_check_branch
      %2987 = sbr.rel (0) target = $region197
    $region196: #{rwkv6_block.1} parent=1 // pred_region
      %2989 = vsyncadd [#allocation21], 0
      %s2991 = sshll.u32 [#allocation20], 4
      %s2992 = int_to_ptr.vmem [resolvable:$true] %s2991
      %s2993 = sshll.u32 %s77, 4
      %s2994 = int_to_ptr.hbm [resolvable:$true] %s2993
      %2996 = dma.vmem_to_hbm [thread:$0]  %s2992, 32, %s2994, [#allocation21]
    $region197: #{rwkv6_block.1} parent=1 // pred_fallthru
      _
    // Predicated region
    $region198: #{rwkv6_block.1} parent=1 // pred_check
      _
    $region199: #{rwkv6_block.1} parent=1 // pred_check_branch
      %2998 = sbr.rel (0) target = $region201
    $region200: #{rwkv6_block.1} parent=1 // pred_region
      %3000 = vsyncadd [#allocation21], 0
      %s3002 = sshll.u32 [#allocation22], 4
      %s3003 = int_to_ptr.vmem [resolvable:$true] %s3002
      %s3004 = sshll.u32 %s79, 4
      %s3005 = int_to_ptr.hbm [resolvable:$true] %s3004
      %3007 = dma.vmem_to_hbm [thread:$0]  %s3003, 32, %s3005, [#allocation21]
    $region201: #{rwkv6_block.1} parent=1 // pred_fallthru
      _
    // Predicated region
    $region202: #{rwkv6_block.1} parent=1 // pred_check
      _
    $region203: #{rwkv6_block.1} parent=1 // pred_check_branch
      %3009 = sbr.rel (0) target = $region205
    $region204: #{rwkv6_block.1} parent=1 // pred_region
      %3011 = vsyncadd [#allocation24], 0
      %s3012 = sshll.u32 [#allocation23], 4
      %s3013 = int_to_ptr.vmem [resolvable:$true] %s3012
      %s3014 = sshll.u32 %s81, 4
      %s3015 = int_to_ptr.hbm [resolvable:$true] %s3014
      %3020 = dma.vmem_to_hbm [thread:$0]  %s3013, 2048, %s3015, [#allocation24], 128, 128, 8
    $region205: #{rwkv6_block.1} parent=1 // pred_fallthru
      _
    // Predicated region
    $region206: #{rwkv6_block.1} parent=1 // pred_check
      _
    $region207: #{rwkv6_block.1} parent=1 // pred_check_branch
      %3022 = sbr.rel (0) target = $region209
    $region208: #{rwkv6_block.1} parent=1 // pred_region
      %3024 = dma.done [#allocation4], 256
    $region209: #{rwkv6_block.1} parent=1 // pred_fallthru
      _
    // Predicated region
    $region210: #{rwkv6_block.1} parent=1 // pred_check
      _
    $region211: #{rwkv6_block.1} parent=1 // pred_check_branch
      %3026 = sbr.rel (0) target = $region213
    $region212: #{rwkv6_block.1} parent=1 // pred_region
      %3028 = dma.done [#allocation21], 32
    $region213: #{rwkv6_block.1} parent=1 // pred_fallthru
      _
    // Predicated region
    $region214: #{rwkv6_block.1} parent=1 // pred_check
      _
    $region215: #{rwkv6_block.1} parent=1 // pred_check_branch
      %3030 = sbr.rel (0) target = $region217
    $region216: #{rwkv6_block.1} parent=1 // pred_region
      %3032 = dma.done [#allocation21], 32
    $region217: #{rwkv6_block.1} parent=1 // pred_fallthru
      _
    // Predicated region
    $region218: #{rwkv6_block.1} parent=1 // pred_check
      _
    $region219: #{rwkv6_block.1} parent=1 // pred_check_branch
      %3034 = sbr.rel (0) target = $region221
    $region220: #{rwkv6_block.1} parent=1 // pred_region
      %3036 = dma.done [#allocation24], 2048
    $region221: #{rwkv6_block.1} parent=1 // pred_fallthru
      _
    %3037 = vsyncpa [#allocation3], 1
    %3038 = vsyncpa [#allocation6], 1
    %3039 = vsyncpa [#allocation9], 1
    %3040 = vsyncpa [#allocation12], 1
    %3041 = vsyncpa [#allocation15], 1
    %3042 = vsyncpa [#allocation18], 1
    %3043 = vsyncpa [#allocation4], 1
    %3044 = vsyncpa [#allocation21], 1
    %3045 = vsyncpa [#allocation24], 1

</llo_original>
